<compile_context>
chip_gen: v5e
topology: v5e:2x2
jax: 0.10.0
libtpu: 0.0.40
codegen_flags: <defaults>
</compile_context>

<pallas_src>
import functools

import jax
import jax.numpy as jnp
from jax.experimental import pallas as pl
from jax.experimental.pallas import tpu as pltpu


def _round_up(x, m):
    return ((x + m - 1) // m) * m


# ----------------------------------------------------------------------------
# Kernel 1: K / V input projections (done ONCE per kv tile, bf16 MXU path)
# ----------------------------------------------------------------------------

def _project_kv_kernel(k_ref, v_ref, wk_ref, wv_ref, kp_ref, vp_ref):
    kp_ref[0] = jnp.dot(
        k_ref[0].astype(jnp.bfloat16), wk_ref[...],
        preferred_element_type=jnp.float32).astype(kp_ref.dtype)
    vp_ref[0] = jnp.dot(
        v_ref[0].astype(jnp.bfloat16), wv_ref[...],
        preferred_element_type=jnp.float32).astype(vp_ref.dtype)


def _project_kv(k, v, wk_b, wv_b, blk):
    B, Lp, d_model = k.shape
    d_k, d_v = wk_b.shape[1], wv_b.shape[1]
    return pl.pallas_call(
        _project_kv_kernel,
        out_shape=(jax.ShapeDtypeStruct((B, Lp, d_k), jnp.bfloat16),
                   jax.ShapeDtypeStruct((B, Lp, d_v), jnp.bfloat16)),
        grid_spec=pltpu.PrefetchScalarGridSpec(
            num_scalar_prefetch=0,
            grid=(B, Lp // blk),
            in_specs=[
                pl.BlockSpec((1, blk, d_model), lambda b, i: (b, i, 0)),
                pl.BlockSpec((1, blk, d_model), lambda b, i: (b, i, 0)),
                pl.BlockSpec((d_model, d_k), lambda b, i: (0, 0)),
                pl.BlockSpec((d_model, d_v), lambda b, i: (0, 0)),
            ],
            out_specs=[
                pl.BlockSpec((1, blk, d_k), lambda b, i: (b, i, 0)),
                pl.BlockSpec((1, blk, d_v), lambda b, i: (b, i, 0)),
            ],
        ),
        compiler_params=pltpu.CompilerParams(
            dimension_semantics=("parallel", "parallel")),
    )(k, v, wk_b, wv_b)


# ----------------------------------------------------------------------------
# Kernel 2: fused Q-projection + causal flash attention
# ----------------------------------------------------------------------------

def _flash_attn_kernel(q_ref, wq_ref, kp_ref, vp_ref,
                       o_ref,
                       qp_sc, m_sc, l_sc, acc_sc,
                       *, scale, block_q, block_k):
    qi = pl.program_id(1)
    ki = pl.program_id(2)
    nk = pl.num_programs(2)

    @pl.when(ki == 0)
    def _init():
        # Project Q once per (batch, q-tile); scale folded in; bf16 cache.
        qp = jnp.dot(q_ref[0].astype(jnp.bfloat16), wq_ref[...],
                     preferred_element_type=jnp.float32) * scale
        qp_sc[...] = qp.astype(qp_sc.dtype)
        m_sc[...] = jnp.full_like(m_sc, -jnp.inf)
        l_sc[...] = jnp.zeros_like(l_sc)
        acc_sc[...] = jnp.zeros_like(acc_sc)

    def _attend(apply_mask):
        k_p = kp_ref[0]                                   # (block_k, d) bf16
        v_p = vp_ref[0]                                   # (block_k, d) bf16
        # scores tile: (block_q, block_k), contraction over the feature dim
        s = jax.lax.dot_general(
            qp_sc[...], k_p,
            dimension_numbers=(((1,), (1,)), ((), ())),
            preferred_element_type=jnp.float32,
        )
        if apply_mask:
            row = qi * block_q + jax.lax.broadcasted_iota(
                jnp.int32, (block_q, block_k), 0)
            col = ki * block_k + jax.lax.broadcasted_iota(
                jnp.int32, (block_q, block_k), 1)
            s = jnp.where(col > row, -jnp.inf, s)

        # online softmax update (stats in f32)
        m_prev = m_sc[...]
        m_new = jnp.maximum(m_prev, jnp.max(s, axis=-1, keepdims=True))
        alpha = jnp.exp(m_prev - m_new)
        p = jnp.exp(s - m_new)
        l_sc[...] = alpha * l_sc[...] + jnp.sum(p, axis=-1, keepdims=True)
        acc_sc[...] = alpha * acc_sc[...] + jnp.dot(
            p.astype(jnp.bfloat16), v_p, preferred_element_type=jnp.float32)
        m_sc[...] = m_new

    # With block_q == block_k: ki > qi tiles are fully masked (skipped),
    # ki < qi tiles are fully below the diagonal (no mask work needed),
    # ki == qi tiles intersect the diagonal (and hold any padded columns).
    @pl.when(ki < qi)
    def _interior():
        _attend(apply_mask=False)

    @pl.when(ki == qi)
    def _diagonal():
        _attend(apply_mask=True)

    @pl.when(ki == nk - 1)
    def _finalize():
        inv_l = pl.reciprocal(l_sc[...], approx=True)
        o_ref[0] = (acc_sc[...] * inv_l).astype(o_ref.dtype)


def attention_module_forward(q, k, v, wq, wk, wv, *, block=256):
    """Forward pass of AttentionModule_old.

    q, k, v : (B, L, d_model)
    wq, wk, wv : (d_model, d_out)   (== torch nn.Linear weight transposed)
    returns : (B, L, d_v)
    """
    B, L, d_model = q.shape
    assert k.shape == (B, L, d_model) and v.shape == (B, L, d_model)
    d_q, d_k, d_v = wq.shape[1], wk.shape[1], wv.shape[1]
    assert d_q == d_k, "Q/K projection dims must match for the score matmul"

    # Tile size: use `block` but never exceed the (128-rounded) sequence.
    blk = min(block, _round_up(L, 128))
    Lp = _round_up(L, blk)
    if Lp != L:
        # Padded key columns land only in the last (diagonal) kv tile where
        # the causal mask removes them; padded query rows are sliced off.
        pad = ((0, 0), (0, Lp - L), (0, 0))
        q = jnp.pad(q, pad)
        k = jnp.pad(k, pad)
        v = jnp.pad(v, pad)

    # bf16 weights: halves weight DMA and hits the native MXU path.
    wq_b = wq.astype(jnp.bfloat16)
    wk_b = wk.astype(jnp.bfloat16)
    wv_b = wv.astype(jnp.bfloat16)

    # K/V projections computed once per kv tile (hoisted out of the kv loop).
    kp, vp = _project_kv(k, v, wk_b, wv_b, blk)

    scale = 1.0 / (d_q ** 0.5)   # torch: d_k = Q.size(-1) -> sqrt(d_q)
    nt = Lp // blk
    grid = (B, nt, nt)

    # Clamped index_maps: causally-skipped kv tiles repeat the previous block
    # index so Pallas elides their DMAs entirely.
    kv_map = lambda b, qi, ki: (b, jnp.minimum(ki, qi), 0)

    out = pl.pallas_call(
        functools.partial(_flash_attn_kernel,
                          scale=scale, block_q=blk, block_k=blk),
        out_shape=jax.ShapeDtypeStruct((B, Lp, d_v), q.dtype),
        grid_spec=pltpu.PrefetchScalarGridSpec(
            num_scalar_prefetch=0,
            grid=grid,
            in_specs=[
                pl.BlockSpec((1, blk, d_model), lambda b, qi, ki: (b, qi, 0)),
                pl.BlockSpec((d_model, d_q), lambda b, qi, ki: (0, 0)),
                pl.BlockSpec((1, blk, d_k), kv_map),
                pl.BlockSpec((1, blk, d_v), kv_map),
            ],
            out_specs=pl.BlockSpec((1, blk, d_v), lambda b, qi, ki: (b, qi, 0)),
            scratch_shapes=[
                pltpu.VMEM((blk, d_q), jnp.bfloat16),   # cached scaled Q proj
                pltpu.VMEM((blk, 1), jnp.float32),      # running max m
                pltpu.VMEM((blk, 1), jnp.float32),      # running sum l
                pltpu.VMEM((blk, d_v), jnp.float32),    # output accumulator
            ],
        ),
        compiler_params=pltpu.CompilerParams(
            dimension_semantics=("parallel", "parallel", "arbitrary")),
    )(q, wq_b, kp, vp)

    return out if Lp == L else out[:, :L, :]


# ----------------------------------------------------------------------------
# Pure-JAX reference (mirrors the torch module)
# ----------------------------------------------------------------------------

def reference_forward(q, k, v, wq, wk, wv):
    Q = q @ wq
    K = k @ wk
    V = v @ wv
    d_q = Q.shape[-1]
    s = jnp.einsum("bqd,bkd->bqk", Q, K) / (d_q ** 0.5)
    Lq, Lk = s.shape[-2], s.shape[-1]
    mask = jnp.triu(jnp.ones((Lq, Lk), bool), k=1)
    s = jnp.where(mask[None], -jnp.inf, s)
    attn = jax.nn.softmax(s, axis=-1)
    return attn @ V


# ----------------------------------------------------------------------------
# Main
# ----------------------------------------------------------------------------

if __name__ == "__main__":
    B, L, d_model = 2, 512, 128
    d_q = d_k = d_v = 128          # lane-dense (multiple-of-128) feature dims

    key = jax.random.PRNGKey(0)
    kq, kk, kv, kwq, kwk, kwv = jax.random.split(key, 6)
    q = jax.random.normal(kq, (B, L, d_model), jnp.float32)
    k = jax.random.normal(kk, (B, L, d_model), jnp.float32)
    v = jax.random.normal(kv, (B, L, d_model), jnp.float32)
    wq = jax.random.normal(kwq, (d_model, d_q), jnp.float32) * 0.02
    wk = jax.random.normal(kwk, (d_model, d_k), jnp.float32) * 0.02
    wv = jax.random.normal(kwv, (d_model, d_v), jnp.float32) * 0.02

    fwd = jax.jit(attention_module_forward)
    out = fwd(q, k, v, wq, wk, wv)
    jax.block_until_ready(out)

    assert out.shape == (B, L, d_v), out.shape
    assert bool(jnp.all(jnp.isfinite(out)))

    ref = reference_forward(q, k, v, wq, wk, wv)
    max_err = float(jnp.max(jnp.abs(out - ref)))
    assert bool(jnp.allclose(out, ref, rtol=2e-2, atol=2e-2)), max_err

    print("KERNEL_OK")
</pallas_src>

<mosaic_0001>
module attributes {stable_mosaic.version = 11 : i64} {
  func.func @_project_kv_kernel(%arg0: i32, %arg1: i32, %arg2: memref<1x256x128xf32, #tpu.memory_space<vmem>>, %arg3: memref<1x256x128xf32, #tpu.memory_space<vmem>>, %arg4: memref<128x128xbf16, #tpu.memory_space<vmem>>, %arg5: memref<128x128xbf16, #tpu.memory_space<vmem>>, %arg6: memref<1x256x128xbf16, #tpu.memory_space<vmem>>, %arg7: memref<1x256x128xbf16, #tpu.memory_space<vmem>>) attributes {dimension_semantics = [#tpu.dimension_semantics<parallel>, #tpu.dimension_semantics<parallel>], iteration_bounds = array<i64: 2, 2>, scalar_prefetch = 0 : i64, scratch_operands = 0 : i64, tpu.core_type = #tpu.core_type<tc>, window_params = [{transform_indices = @transform_0, window_bounds = array<i64: 1, 256, 128>}, {transform_indices = @transform_1, window_bounds = array<i64: 1, 256, 128>}, {pipeline_mode = #tpu.pipeline_mode<synchronous>, transform_indices = @transform_2, window_bounds = array<i64: 128, 128>}, {pipeline_mode = #tpu.pipeline_mode<synchronous>, transform_indices = @transform_3, window_bounds = array<i64: 128, 128>}, {transform_indices = @transform_4, window_bounds = array<i64: 1, 256, 128>}, {transform_indices = @transform_5, window_bounds = array<i64: 1, 256, 128>}]} {
    %c0 = arith.constant 0 : index
    %c0_0 = arith.constant 0 : index
    %c0_1 = arith.constant 0 : index
    %0 = vector.load %arg2[%c0, %c0_0, %c0_1] : memref<1x256x128xf32, #tpu.memory_space<vmem>>, vector<1x256x128xf32>
    %1 = vector.shape_cast %0 : vector<1x256x128xf32> to vector<256x128xf32>
    %2 = arith.truncf %1 : vector<256x128xf32> to vector<256x128xbf16>
    %c0_2 = arith.constant 0 : index
    %c0_3 = arith.constant 0 : index
    %3 = vector.load %arg4[%c0_2, %c0_3] : memref<128x128xbf16, #tpu.memory_space<vmem>>, vector<128x128xbf16>
    %cst = arith.constant dense<0.000000e+00> : vector<256x128xf32>
    %4 = tpu.matmul %2, %3, %cst {dimension_numbers = #tpu.dot_dimension_numbers<[1], [0], [0], [1], [0, 0, 1, 1], [], []>} : vector<256x128xbf16>, vector<128x128xbf16>, vector<256x128xf32> -> vector<256x128xf32>
    %5 = arith.truncf %4 : vector<256x128xf32> to vector<256x128xbf16>
    %c0_4 = arith.constant 0 : index
    %c0_5 = arith.constant 0 : index
    %c0_6 = arith.constant 0 : index
    %6 = vector.load %arg6[%c0_4, %c0_5, %c0_6] : memref<1x256x128xbf16, #tpu.memory_space<vmem>>, vector<1x256x128xbf16>
    %7 = vector.shape_cast %6 : vector<1x256x128xbf16> to vector<256x128xbf16>
    %8 = vector.shape_cast %5 : vector<256x128xbf16> to vector<1x256x128xbf16>
    tpu.vector_store %arg6[%c0_4, %c0_5, %c0_6], %8 {strides = array<i32>} : memref<1x256x128xbf16, #tpu.memory_space<vmem>>, vector<1x256x128xbf16>,
    %c0_7 = arith.constant 0 : index
    %c0_8 = arith.constant 0 : index
    %c0_9 = arith.constant 0 : index
    %9 = vector.load %arg3[%c0_7, %c0_8, %c0_9] : memref<1x256x128xf32, #tpu.memory_space<vmem>>, vector<1x256x128xf32>
    %10 = vector.shape_cast %9 : vector<1x256x128xf32> to vector<256x128xf32>
    %11 = arith.truncf %10 : vector<256x128xf32> to vector<256x128xbf16>
    %c0_10 = arith.constant 0 : index
    %c0_11 = arith.constant 0 : index
    %12 = vector.load %arg5[%c0_10, %c0_11] : memref<128x128xbf16, #tpu.memory_space<vmem>>, vector<128x128xbf16>
    %cst_12 = arith.constant dense<0.000000e+00> : vector<256x128xf32>
    %13 = tpu.matmul %11, %12, %cst_12 {dimension_numbers = #tpu.dot_dimension_numbers<[1], [0], [0], [1], [0, 0, 1, 1], [], []>} : vector<256x128xbf16>, vector<128x128xbf16>, vector<256x128xf32> -> vector<256x128xf32>
    %14 = arith.truncf %13 : vector<256x128xf32> to vector<256x128xbf16>
    %c0_13 = arith.constant 0 : index
    %c0_14 = arith.constant 0 : index
    %c0_15 = arith.constant 0 : index
    %15 = vector.load %arg7[%c0_13, %c0_14, %c0_15] : memref<1x256x128xbf16, #tpu.memory_space<vmem>>, vector<1x256x128xbf16>
    %16 = vector.shape_cast %15 : vector<1x256x128xbf16> to vector<256x128xbf16>
    %17 = vector.shape_cast %14 : vector<256x128xbf16> to vector<1x256x128xbf16>
    tpu.vector_store %arg7[%c0_13, %c0_14, %c0_15], %17 {strides = array<i32>} : memref<1x256x128xbf16, #tpu.memory_space<vmem>>, vector<1x256x128xbf16>,
    return
  }
  func.func @transform_0(%arg0: i32, %arg1: i32) -> (i32, i32, i32) {
    %c0_i32 = arith.constant 0 : i32
    %c0_i32_0 = arith.constant 0 : i32
    return %arg0, %arg1, %c0_i32 : i32, i32, i32
  }
  func.func @transform_1(%arg0: i32, %arg1: i32) -> (i32, i32, i32) {
    %c0_i32 = arith.constant 0 : i32
    %c0_i32_0 = arith.constant 0 : i32
    return %arg0, %arg1, %c0_i32 : i32, i32, i32
  }
  func.func @transform_2(%arg0: i32, %arg1: i32) -> (i32, i32) {
    %c0_i32 = arith.constant 0 : i32
    %c0_i32_0 = arith.constant 0 : i32
    %c0_i32_1 = arith.constant 0 : i32
    return %c0_i32, %c0_i32_0 : i32, i32
  }
  func.func @transform_3(%arg0: i32, %arg1: i32) -> (i32, i32) {
    %c0_i32 = arith.constant 0 : i32
    %c0_i32_0 = arith.constant 0 : i32
    %c0_i32_1 = arith.constant 0 : i32
    return %c0_i32, %c0_i32_0 : i32, i32
  }
  func.func @transform_4(%arg0: i32, %arg1: i32) -> (i32, i32, i32) {
    %c0_i32 = arith.constant 0 : i32
    %c0_i32_0 = arith.constant 0 : i32
    return %arg0, %arg1, %c0_i32 : i32, i32, i32
  }
  func.func @transform_5(%arg0: i32, %arg1: i32) -> (i32, i32, i32) {
    %c0_i32 = arith.constant 0 : i32
    %c0_i32_0 = arith.constant 0 : i32
    return %arg0, %arg1, %c0_i32 : i32, i32, i32
  }
}

module attributes {stable_mosaic.version = 11 : i64} {
  func.func @_flash_attn_kernel(%arg0: i32, %arg1: i32, %arg2: i32, %arg3: memref<1x256x128xf32, #tpu.memory_space<vmem>>, %arg4: memref<128x128xbf16, #tpu.memory_space<vmem>>, %arg5: memref<1x256x128xbf16, #tpu.memory_space<vmem>>, %arg6: memref<1x256x128xbf16, #tpu.memory_space<vmem>>, %arg7: memref<1x256x128xf32, #tpu.memory_space<vmem>>, %arg8: memref<256x128xbf16, #tpu.memory_space<vmem>>, %arg9: memref<256x1xf32, #tpu.memory_space<vmem>>, %arg10: memref<256x1xf32, #tpu.memory_space<vmem>>, %arg11: memref<256x128xf32, #tpu.memory_space<vmem>>) attributes {dimension_semantics = [#tpu.dimension_semantics<parallel>, #tpu.dimension_semantics<parallel>, #tpu.dimension_semantics<arbitrary>], iteration_bounds = array<i64: 2, 2, 2>, scalar_prefetch = 0 : i64, scratch_operands = 4 : i64, tpu.core_type = #tpu.core_type<tc>, window_params = [{transform_indices = @transform_0, window_bounds = array<i64: 1, 256, 128>}, {pipeline_mode = #tpu.pipeline_mode<synchronous>, transform_indices = @transform_1, window_bounds = array<i64: 128, 128>}, {transform_indices = @transform_2, window_bounds = array<i64: 1, 256, 128>}, {transform_indices = @transform_3, window_bounds = array<i64: 1, 256, 128>}, {transform_indices = @transform_4, window_bounds = array<i64: 1, 256, 128>}]} {
    %c0_i32 = arith.constant 0 : i32
    %0 = arith.cmpi eq, %arg2, %c0_i32 : i32
    %1 = arith.extui %0 : i1 to i32
    %c0_i32_0 = arith.constant 0 : i32
    %2 = arith.cmpi ne, %1, %c0_i32_0 : i32
    scf.if %2 {
      %c0 = arith.constant 0 : index
      %c0_4 = arith.constant 0 : index
      %c0_5 = arith.constant 0 : index
      %12 = vector.load %arg3[%c0, %c0_4, %c0_5] : memref<1x256x128xf32, #tpu.memory_space<vmem>>, vector<1x256x128xf32>
      %13 = vector.shape_cast %12 : vector<1x256x128xf32> to vector<256x128xf32>
      %14 = arith.truncf %13 : vector<256x128xf32> to vector<256x128xbf16>
      %c0_6 = arith.constant 0 : index
      %c0_7 = arith.constant 0 : index
      %15 = vector.load %arg4[%c0_6, %c0_7] : memref<128x128xbf16, #tpu.memory_space<vmem>>, vector<128x128xbf16>
      %cst = arith.constant dense<0.000000e+00> : vector<256x128xf32>
      %16 = tpu.matmul %14, %15, %cst {dimension_numbers = #tpu.dot_dimension_numbers<[1], [0], [0], [1], [0, 0, 1, 1], [], []>} : vector<256x128xbf16>, vector<128x128xbf16>, vector<256x128xf32> -> vector<256x128xf32>
      %cst_8 = arith.constant 0.0883883461 : f32
      %17 = vector.broadcast %cst_8 : f32 to vector<256x128xf32>
      %18 = arith.mulf %16, %17 : vector<256x128xf32>
      %19 = arith.truncf %18 : vector<256x128xf32> to vector<256x128xbf16>
      %c0_9 = arith.constant 0 : index
      %c0_10 = arith.constant 0 : index
      %20 = vector.load %arg8[%c0_9, %c0_10] : memref<256x128xbf16, #tpu.memory_space<vmem>>, vector<256x128xbf16>
      tpu.vector_store %arg8[%c0_9, %c0_10], %19 {strides = array<i32>} : memref<256x128xbf16, #tpu.memory_space<vmem>>, vector<256x128xbf16>,
      %cst_11 = arith.constant 0xFF800000 : f32
      %21 = vector.broadcast %cst_11 : f32 to vector<256x1xf32>
      %c0_12 = arith.constant 0 : index
      %c0_13 = arith.constant 0 : index
      %22 = vector.load %arg9[%c0_12, %c0_13] : memref<256x1xf32, #tpu.memory_space<vmem>>, vector<256x1xf32>
      tpu.vector_store %arg9[%c0_12, %c0_13], %21 {strides = array<i32>} : memref<256x1xf32, #tpu.memory_space<vmem>>, vector<256x1xf32>,
      %cst_14 = arith.constant 0.000000e+00 : f32
      %23 = vector.broadcast %cst_14 : f32 to vector<256x1xf32>
      %c0_15 = arith.constant 0 : index
      %c0_16 = arith.constant 0 : index
      %24 = vector.load %arg10[%c0_15, %c0_16] : memref<256x1xf32, #tpu.memory_space<vmem>>, vector<256x1xf32>
      tpu.vector_store %arg10[%c0_15, %c0_16], %23 {strides = array<i32>} : memref<256x1xf32, #tpu.memory_space<vmem>>, vector<256x1xf32>,
      %cst_17 = arith.constant 0.000000e+00 : f32
      %25 = vector.broadcast %cst_17 : f32 to vector<256x128xf32>
      %c0_18 = arith.constant 0 : index
      %c0_19 = arith.constant 0 : index
      %26 = vector.load %arg11[%c0_18, %c0_19] : memref<256x128xf32, #tpu.memory_space<vmem>>, vector<256x128xf32>
      tpu.vector_store %arg11[%c0_18, %c0_19], %25 {strides = array<i32>} : memref<256x128xf32, #tpu.memory_space<vmem>>, vector<256x128xf32>,
    } else {
    }
    %3 = arith.cmpi slt, %arg2, %arg1 : i32
    %4 = arith.extui %3 : i1 to i32
    %c0_i32_1 = arith.constant 0 : i32
    %5 = arith.cmpi ne, %4, %c0_i32_1 : i32
    scf.if %5 {
      %c0 = arith.constant 0 : index
      %c0_4 = arith.constant 0 : index
      %c0_5 = arith.constant 0 : index
      %12 = vector.load %arg5[%c0, %c0_4, %c0_5] : memref<1x256x128xbf16, #tpu.memory_space<vmem>>, vector<1x256x128xbf16>
      %13 = vector.shape_cast %12 : vector<1x256x128xbf16> to vector<256x128xbf16>
      %c0_6 = arith.constant 0 : index
      %c0_7 = arith.constant 0 : index
      %c0_8 = arith.constant 0 : index
      %14 = vector.load %arg6[%c0_6, %c0_7, %c0_8] : memref<1x256x128xbf16, #tpu.memory_space<vmem>>, vector<1x256x128xbf16>
      %15 = vector.shape_cast %14 : vector<1x256x128xbf16> to vector<256x128xbf16>
      %c0_9 = arith.constant 0 : index
      %c0_10 = arith.constant 0 : index
      %16 = vector.load %arg8[%c0_9, %c0_10] : memref<256x128xbf16, #tpu.memory_space<vmem>>, vector<256x128xbf16>
      %cst = arith.constant dense<0.000000e+00> : vector<256x256xf32>
      %17 = tpu.matmul %16, %13, %cst {dimension_numbers = #tpu.dot_dimension_numbers<[1], [1], [0], [0], [0, 0, 1, 0], [], []>} : vector<256x128xbf16>, vector<256x128xbf16>, vector<256x256xf32> -> vector<256x256xf32>
      %c0_11 = arith.constant 0 : index
      %c0_12 = arith.constant 0 : index
      %18 = vector.load %arg9[%c0_11, %c0_12] : memref<256x1xf32, #tpu.memory_space<vmem>>, vector<256x1xf32>
      %cst_13 = arith.constant dense<0xFF800000> : vector<256xf32>
      %19 = vector.multi_reduction <maximumf>, %17, %cst_13 [1] : vector<256x256xf32> to vector<256xf32>
      %20 = vector.shape_cast %19 : vector<256xf32> to vector<256x1xf32>
      %21 = arith.maximumf %18, %20 : vector<256x1xf32>
      %22 = arith.subf %18, %21 : vector<256x1xf32>
      %23 = math.exp %22 : vector<256x1xf32>
      %24 = vector.broadcast %21 : vector<256x1xf32> to vector<256x256xf32>
      %25 = arith.subf %17, %24 : vector<256x256xf32>
      %26 = math.exp %25 : vector<256x256xf32>
      %c0_14 = arith.constant 0 : index
      %c0_15 = arith.constant 0 : index
      %27 = vector.load %arg10[%c0_14, %c0_15] : memref<256x1xf32, #tpu.memory_space<vmem>>, vector<256x1xf32>
      %28 = arith.mulf %23, %27 : vector<256x1xf32>
      %cst_16 = arith.constant dense<0.000000e+00> : vector<256xf32>
      %29 = vector.multi_reduction <add>, %26, %cst_16 [1] : vector<256x256xf32> to vector<256xf32>
      %30 = vector.shape_cast %29 : vector<256xf32> to vector<256x1xf32>
      %31 = arith.addf %28, %30 : vector<256x1xf32>
      %c0_17 = arith.constant 0 : index
      %c0_18 = arith.constant 0 : index
      %32 = vector.load %arg10[%c0_17, %c0_18] : memref<256x1xf32, #tpu.memory_space<vmem>>, vector<256x1xf32>
      tpu.vector_store %arg10[%c0_17, %c0_18], %31 {strides = array<i32>} : memref<256x1xf32, #tpu.memory_space<vmem>>, vector<256x1xf32>,
      %c0_19 = arith.constant 0 : index
      %c0_20 = arith.constant 0 : index
      %33 = vector.load %arg11[%c0_19, %c0_20] : memref<256x128xf32, #tpu.memory_space<vmem>>, vector<256x128xf32>
      %34 = vector.broadcast %23 : vector<256x1xf32> to vector<256x128xf32>
      %35 = arith.mulf %34, %33 : vector<256x128xf32>
      %36 = arith.truncf %26 : vector<256x256xf32> to vector<256x256xbf16>
      %cst_21 = arith.constant dense<0.000000e+00> : vector<256x128xf32>
      %37 = tpu.matmul %36, %15, %cst_21 {dimension_numbers = #tpu.dot_dimension_numbers<[1], [0], [0], [1], [0, 0, 1, 1], [], []>} : vector<256x256xbf16>, vector<256x128xbf16>, vector<256x128xf32> -> vector<256x128xf32>
      %38 = arith.addf %35, %37 : vector<256x128xf32>
      %c0_22 = arith.constant 0 : index
      %c0_23 = arith.constant 0 : index
      %39 = vector.load %arg11[%c0_22, %c0_23] : memref<256x128xf32, #tpu.memory_space<vmem>>, vector<256x128xf32>
      tpu.vector_store %arg11[%c0_22, %c0_23], %38 {strides = array<i32>} : memref<256x128xf32, #tpu.memory_space<vmem>>, vector<256x128xf32>,
      %c0_24 = arith.constant 0 : index
      %c0_25 = arith.constant 0 : index
      %40 = vector.load %arg9[%c0_24, %c0_25] : memref<256x1xf32, #tpu.memory_space<vmem>>, vector<256x1xf32>
      tpu.vector_store %arg9[%c0_24, %c0_25], %21 {strides = array<i32>} : memref<256x1xf32, #tpu.memory_space<vmem>>, vector<256x1xf32>,
    } else {
    }
    %6 = arith.cmpi eq, %arg2, %arg1 : i32
    %7 = arith.extui %6 : i1 to i32
    %c0_i32_2 = arith.constant 0 : i32
    %8 = arith.cmpi ne, %7, %c0_i32_2 : i32
    scf.if %8 {
      %c0 = arith.constant 0 : index
      %c0_4 = arith.constant 0 : index
      %c0_5 = arith.constant 0 : index
      %12 = vector.load %arg5[%c0, %c0_4, %c0_5] : memref<1x256x128xbf16, #tpu.memory_space<vmem>>, vector<1x256x128xbf16>
      %13 = vector.shape_cast %12 : vector<1x256x128xbf16> to vector<256x128xbf16>
      %c0_6 = arith.constant 0 : index
      %c0_7 = arith.constant 0 : index
      %c0_8 = arith.constant 0 : index
      %14 = vector.load %arg6[%c0_6, %c0_7, %c0_8] : memref<1x256x128xbf16, #tpu.memory_space<vmem>>, vector<1x256x128xbf16>
      %15 = vector.shape_cast %14 : vector<1x256x128xbf16> to vector<256x128xbf16>
      %c0_9 = arith.constant 0 : index
      %c0_10 = arith.constant 0 : index
      %16 = vector.load %arg8[%c0_9, %c0_10] : memref<256x128xbf16, #tpu.memory_space<vmem>>, vector<256x128xbf16>
      %cst = arith.constant dense<0.000000e+00> : vector<256x256xf32>
      %17 = tpu.matmul %16, %13, %cst {dimension_numbers = #tpu.dot_dimension_numbers<[1], [1], [0], [0], [0, 0, 1, 0], [], []>} : vector<256x128xbf16>, vector<256x128xbf16>, vector<256x256xf32> -> vector<256x256xf32>
      %c256_i32 = arith.constant 256 : i32
      %18 = arith.muli %arg1, %c256_i32 : i32
      %19 = tpu.iota {dimensions = array<i32: 0>} : vector<256x256xi32>
      %20 = vector.broadcast %18 : i32 to vector<256x256xi32>
      %21 = arith.addi %20, %19 : vector<256x256xi32>
      %c256_i32_11 = arith.constant 256 : i32
      %22 = arith.muli %arg2, %c256_i32_11 : i32
      %23 = tpu.iota {dimensions = array<i32: 1>} : vector<256x256xi32>
      %24 = vector.broadcast %22 : i32 to vector<256x256xi32>
      %25 = arith.addi %24, %23 : vector<256x256xi32>
      %26 = arith.cmpi sgt, %25, %21 : vector<256x256xi32>
      %cst_12 = arith.constant 0xFF800000 : f32
      %27 = vector.broadcast %cst_12 : f32 to vector<256x256xf32>
      %28 = arith.select %26, %27, %17 : vector<256x256xi1>, vector<256x256xf32>
      %c0_13 = arith.constant 0 : index
      %c0_14 = arith.constant 0 : index
      %29 = vector.load %arg9[%c0_13, %c0_14] : memref<256x1xf32, #tpu.memory_space<vmem>>, vector<256x1xf32>
      %cst_15 = arith.constant dense<0xFF800000> : vector<256xf32>
      %30 = vector.multi_reduction <maximumf>, %28, %cst_15 [1] : vector<256x256xf32> to vector<256xf32>
      %31 = vector.shape_cast %30 : vector<256xf32> to vector<256x1xf32>
      %32 = arith.maximumf %29, %31 : vector<256x1xf32>
      %33 = arith.subf %29, %32 : vector<256x1xf32>
      %34 = math.exp %33 : vector<256x1xf32>
      %35 = vector.broadcast %32 : vector<256x1xf32> to vector<256x256xf32>
      %36 = arith.subf %28, %35 : vector<256x256xf32>
      %37 = math.exp %36 : vector<256x256xf32>
      %c0_16 = arith.constant 0 : index
      %c0_17 = arith.constant 0 : index
      %38 = vector.load %arg10[%c0_16, %c0_17] : memref<256x1xf32, #tpu.memory_space<vmem>>, vector<256x1xf32>
      %39 = arith.mulf %34, %38 : vector<256x1xf32>
      %cst_18 = arith.constant dense<0.000000e+00> : vector<256xf32>
      %40 = vector.multi_reduction <add>, %37, %cst_18 [1] : vector<256x256xf32> to vector<256xf32>
      %41 = vector.shape_cast %40 : vector<256xf32> to vector<256x1xf32>
      %42 = arith.addf %39, %41 : vector<256x1xf32>
      %c0_19 = arith.constant 0 : index
      %c0_20 = arith.constant 0 : index
      %43 = vector.load %arg10[%c0_19, %c0_20] : memref<256x1xf32, #tpu.memory_space<vmem>>, vector<256x1xf32>
      tpu.vector_store %arg10[%c0_19, %c0_20], %42 {strides = array<i32>} : memref<256x1xf32, #tpu.memory_space<vmem>>, vector<256x1xf32>,
      %c0_21 = arith.constant 0 : index
      %c0_22 = arith.constant 0 : index
      %44 = vector.load %arg11[%c0_21, %c0_22] : memref<256x128xf32, #tpu.memory_space<vmem>>, vector<256x128xf32>
      %45 = vector.broadcast %34 : vector<256x1xf32> to vector<256x128xf32>
      %46 = arith.mulf %45, %44 : vector<256x128xf32>
      %47 = arith.truncf %37 : vector<256x256xf32> to vector<256x256xbf16>
      %cst_23 = arith.constant dense<0.000000e+00> : vector<256x128xf32>
      %48 = tpu.matmul %47, %15, %cst_23 {dimension_numbers = #tpu.dot_dimension_numbers<[1], [0], [0], [1], [0, 0, 1, 1], [], []>} : vector<256x256xbf16>, vector<256x128xbf16>, vector<256x128xf32> -> vector<256x128xf32>
      %49 = arith.addf %46, %48 : vector<256x128xf32>
      %c0_24 = arith.constant 0 : index
      %c0_25 = arith.constant 0 : index
      %50 = vector.load %arg11[%c0_24, %c0_25] : memref<256x128xf32, #tpu.memory_space<vmem>>, vector<256x128xf32>
      tpu.vector_store %arg11[%c0_24, %c0_25], %49 {strides = array<i32>} : memref<256x128xf32, #tpu.memory_space<vmem>>, vector<256x128xf32>,
      %c0_26 = arith.constant 0 : index
      %c0_27 = arith.constant 0 : index
      %51 = vector.load %arg9[%c0_26, %c0_27] : memref<256x1xf32, #tpu.memory_space<vmem>>, vector<256x1xf32>
      tpu.vector_store %arg9[%c0_26, %c0_27], %32 {strides = array<i32>} : memref<256x1xf32, #tpu.memory_space<vmem>>, vector<256x1xf32>,
    } else {
    }
    %c1_i32 = arith.constant 1 : i32
    %9 = arith.cmpi eq, %arg2, %c1_i32 : i32
    %10 = arith.extui %9 : i1 to i32
    %c0_i32_3 = arith.constant 0 : i32
    %11 = arith.cmpi ne, %10, %c0_i32_3 : i32
    scf.if %11 {
      %c0 = arith.constant 0 : index
      %c0_4 = arith.constant 0 : index
      %12 = vector.load %arg10[%c0, %c0_4] : memref<256x1xf32, #tpu.memory_space<vmem>>, vector<256x1xf32>
      %13 = tpu.reciprocal %12 {approx = true} : vector<256x1xf32> -> vector<256x1xf32>
      %c0_5 = arith.constant 0 : index
      %c0_6 = arith.constant 0 : index
      %14 = vector.load %arg11[%c0_5, %c0_6] : memref<256x128xf32, #tpu.memory_space<vmem>>, vector<256x128xf32>
      %15 = vector.broadcast %13 : vector<256x1xf32> to vector<256x128xf32>
      %16 = arith.mulf %14, %15 : vector<256x128xf32>
      %c0_7 = arith.constant 0 : index
      %c0_8 = arith.constant 0 : index
      %c0_9 = arith.constant 0 : index
      %17 = vector.load %arg7[%c0_7, %c0_8, %c0_9] : memref<1x256x128xf32, #tpu.memory_space<vmem>>, vector<1x256x128xf32>
      %18 = vector.shape_cast %17 : vector<1x256x128xf32> to vector<256x128xf32>
      %19 = vector.shape_cast %16 : vector<256x128xf32> to vector<1x256x128xf32>
      tpu.vector_store %arg7[%c0_7, %c0_8, %c0_9], %19 {strides = array<i32>} : memref<1x256x128xf32, #tpu.memory_space<vmem>>, vector<1x256x128xf32>,
    } else {
    }
    return
  }
  func.func @transform_0(%arg0: i32, %arg1: i32, %arg2: i32) -> (i32, i32, i32) {
    %c0_i32 = arith.constant 0 : i32
    %c0_i32_0 = arith.constant 0 : i32
    return %arg0, %arg1, %c0_i32 : i32, i32, i32
  }
  func.func @transform_1(%arg0: i32, %arg1: i32, %arg2: i32) -> (i32, i32) {
    %c0_i32 = arith.constant 0 : i32
    %c0_i32_0 = arith.constant 0 : i32
    %c0_i32_1 = arith.constant 0 : i32
    return %c0_i32, %c0_i32_0 : i32, i32
  }
  func.func @transform_2(%arg0: i32, %arg1: i32, %arg2: i32) -> (i32, i32, i32) {
    %0 = arith.minsi %arg2, %arg1 : i32
    %c0_i32 = arith.constant 0 : i32
    %c0_i32_0 = arith.constant 0 : i32
    return %arg0, %0, %c0_i32 : i32, i32, i32
  }
  func.func @transform_3(%arg0: i32, %arg1: i32, %arg2: i32) -> (i32, i32, i32) {
    %0 = arith.minsi %arg2, %arg1 : i32
    %c0_i32 = arith.constant 0 : i32
    %c0_i32_0 = arith.constant 0 : i32
    return %arg0, %0, %c0_i32 : i32, i32, i32
  }
  func.func @transform_4(%arg0: i32, %arg1: i32, %arg2: i32) -> (i32, i32, i32) {
    %c0_i32 = arith.constant 0 : i32
    %c0_i32_0 = arith.constant 0 : i32
    return %arg0, %arg1, %c0_i32 : i32, i32, i32
  }
}

</mosaic_0001>

<llo_original>
// kernel: attention_module_forward.2
$region0: #{attention_module_forward.2}
  #allocation0 [shape = 'u32[]', space=smem, size = 0x4, offset = 0x4, fixed_abs, tag = 'smem constant byte address 0x4 - core index']
  #allocation1 [shape = 'u32[72,128]{1,0:T(1,128)}', space=vmem, size = 0x9000, scoped, tag = 'internal scratch']
  %s0 = inlined_call_operand.hbm [shape: f32[2,512,128], index: 0, kind: input, shape index: {}]
  %s1 = inlined_call_operand.hbm [shape: f32[2,512,128], index: 1, kind: input, shape index: {}]
  %s2 = inlined_call_operand.vmem [shape: bf16[128,128], index: 2, kind: input, shape index: {}]
  %s3 = inlined_call_operand.vmem [shape: bf16[128,128], index: 3, kind: input, shape index: {}]
  %s4 = inlined_call_operand.vmem [shape: bf16[2,512,128], index: 4, kind: output, shape index: {0}]
  %s5 = inlined_call_operand.vmem [shape: bf16[2,512,128], index: 5, kind: output, shape index: {1}]
  %6 = xla_tuple %s4, %s5
  %s7 = sld [smem:[#allocation0]]
  $region65: #{attention_module_forward.2} parent=0
    _
  %s9 = ssub.s32 1, %s7
  %s10 = scalar_select 0, %s9, %s7
  $region1: #{attention_module_forward.2} parent=0
    #allocation2 [shape = 'u8[262144]{0}', space=vmem, size = 0x40000, scoped, tag = 'input window, operand 0']
    #allocation3 [shape = 's32[2]{0}', space=sflag, size = 0x8, scoped, tag = 'scoped memory for attention_module_forward.2']
    #allocation4 [shape = 'u8[262144]{0}', space=vmem, size = 0x40000, scoped, tag = 'input window, operand 1']
    #allocation5 [shape = 's32[2]{0}', space=sflag, size = 0x8, scoped, tag = 'scoped memory for attention_module_forward.2']
    %11 = vsyncpa [#allocation3], 0
    %s12 = scalar_lea.sflag [#allocation3], 1
    %13 = vsyncpa %s12, 0
    %14 = vsyncpa [#allocation5], 0
    %s15 = scalar_lea.sflag [#allocation5], 1
    %16 = vsyncpa %s15, 0
    loop: start=0, step=1, limit=6
    $region2: #{attention_module_forward.2} parent=1 // loop_pre_header
      _
    $region3: #{attention_module_forward.2} parent=1 // loop_header
      %s18 = sphi 0, %s22
      %p19 = scmp.ge.s32.totalorder %s18, 6
      %s25 = sphi 0, %s37
      %s26 = sphi 0, %s33
      %s27 = sphi 0, %s25
      %s28 = sphi 0, %s26
      %s29 = sphi 0, %s27
      %s30 = sphi 0, %s28
      %s42 = sphi 0, %s44
      %s45 = sphi 0, %s42
      %s46 = sphi 0, %s45
      %s62 = sphi 0, %s46
      %s70 = sphi 0, %s72
      %s73 = sphi 0, %s70
      %s74 = sphi 0, %s73
      %s90 = sphi 0, %s74
      %s94 = sphi 0, %s94
      %s96 = sphi 0, %s94
      %s97 = sphi 0, %s96
      %s111 = sphi 0, %s97
      %s115 = sphi 0, %s115
      %s117 = sphi 0, %s115
      %s118 = sphi 0, %s117
      %s132 = sphi 0, %s118
      %s140 = sphi 0, %s142
      %s143 = sphi 0, %s140
      %s144 = sphi 0, %s143
      %s160 = sphi 0, %s144
      %s168 = sphi 0, %s170
      %s171 = sphi 0, %s168
      %s172 = sphi 0, %s171
      %s188 = sphi 0, %s172
    $region4: #{attention_module_forward.2} parent=1 // loop_header_branch
      %21 = sbr.rel (%p19) target = $region8
    $region5: #{attention_module_forward.2} parent=1 // loop_body
      %s23 = ssub.s32 %s18, 1
      %s24 = ssub.s32 %s18, 2
      %s31 = sadd.s32 1, %s26
      %p32 = scmp.ge.s32.totalorder %s31, 2
      %s33 = scalar_select %p32, 0, %s31
      %s34 = sadd.s32 1, %s25
      %s35 = scalar_select %p32, %s34, %s25
      %p36 = scmp.ge.s32.totalorder %s35, 2
      %s37 = scalar_select %p36, 0, %s35
      %s38 = ssub.s32 %s25, %s37
      %s39 = ssub.s32 %s26, %s33
      %s40 = sor.u32 %s38, %s39
      %p41 = scmp.eq.s32.totalorder %s40, 0
      %s43 = sadd.s32 %s42, 1
      %s44 = scalar_select %p41, %s42, %s43
      %p47 = pneg %p41
      %p48 = scmp.eq.s32.totalorder %s18, 3
      %p49 = por %p47, %p48
      %p50 = scmp.ne.s32.totalorder %s42, %s45
      %p51 = scmp.eq.s32.totalorder %s18, 0
      %p52 = por %p50, %p51
      %p53 = scmp.ne.s32.totalorder %s42, %s45
      %p54 = scmp.eq.s32.totalorder %s23, 3
      %p55 = por %p53, %p54
      %p56 = scmp.ne.s32.totalorder %s45, %s46
      %p57 = scmp.eq.s32.totalorder %s23, 0
      %p58 = por %p56, %p57
      %p59 = scmp.ne.s32.totalorder %s45, %s46
      %p60 = scmp.eq.s32.totalorder %s24, 3
      %p61 = por %p59, %p60
      %p63 = scmp.ne.s32.totalorder %s46, %s62
      %p64 = scmp.eq.s32.totalorder %s24, 0
      %p65 = por %p63, %p64
      %s66 = ssub.s32 %s25, %s37
      %s67 = ssub.s32 %s26, %s33
      %s68 = sor.u32 %s66, %s67
      %p69 = scmp.eq.s32.totalorder %s68, 0
      %s71 = sadd.s32 %s70, 1
      %s72 = scalar_select %p69, %s70, %s71
      %p75 = pneg %p69
      %p76 = scmp.eq.s32.totalorder %s18, 3
      %p77 = por %p75, %p76
      %p78 = scmp.ne.s32.totalorder %s70, %s73
      %p79 = scmp.eq.s32.totalorder %s18, 0
      %p80 = por %p78, %p79
      %p81 = scmp.ne.s32.totalorder %s70, %s73
      %p82 = scmp.eq.s32.totalorder %s23, 3
      %p83 = por %p81, %p82
      %p84 = scmp.ne.s32.totalorder %s73, %s74
      %p85 = scmp.eq.s32.totalorder %s23, 0
      %p86 = por %p84, %p85
      %p87 = scmp.ne.s32.totalorder %s73, %s74
      %p88 = scmp.eq.s32.totalorder %s24, 3
      %p89 = por %p87, %p88
      %p91 = scmp.ne.s32.totalorder %s74, %s90
      %p92 = scmp.eq.s32.totalorder %s24, 0
      %p93 = por %p91, %p92
      %s95 = sadd.s32 %s94, 1
      %p98 = scmp.eq.s32.totalorder %s18, 3
      %p99 = scmp.ne.s32.totalorder %s94, %s96
      %p100 = scmp.eq.s32.totalorder %s18, 0
      %p101 = por %p99, %p100
      %p102 = scmp.ne.s32.totalorder %s94, %s96
      %p103 = scmp.eq.s32.totalorder %s23, 3
      %p104 = por %p102, %p103
      %p105 = scmp.ne.s32.totalorder %s96, %s97
      %p106 = scmp.eq.s32.totalorder %s23, 0
      %p107 = por %p105, %p106
      %p108 = scmp.ne.s32.totalorder %s96, %s97
      %p109 = scmp.eq.s32.totalorder %s24, 3
      %p110 = por %p108, %p109
      %p112 = scmp.ne.s32.totalorder %s97, %s111
      %p113 = scmp.eq.s32.totalorder %s24, 0
      %p114 = por %p112, %p113
      %s116 = sadd.s32 %s115, 1
      %p119 = scmp.eq.s32.totalorder %s18, 3
      %p120 = scmp.ne.s32.totalorder %s115, %s117
      %p121 = scmp.eq.s32.totalorder %s18, 0
      %p122 = por %p120, %p121
      %p123 = scmp.ne.s32.totalorder %s115, %s117
      %p124 = scmp.eq.s32.totalorder %s23, 3
      %p125 = por %p123, %p124
      %p126 = scmp.ne.s32.totalorder %s117, %s118
      %p127 = scmp.eq.s32.totalorder %s23, 0
      %p128 = por %p126, %p127
      %p129 = scmp.ne.s32.totalorder %s117, %s118
      %p130 = scmp.eq.s32.totalorder %s24, 3
      %p131 = por %p129, %p130
      %p133 = scmp.ne.s32.totalorder %s118, %s132
      %p134 = scmp.eq.s32.totalorder %s24, 0
      %p135 = por %p133, %p134
      %s136 = ssub.s32 %s25, %s37
      %s137 = ssub.s32 %s26, %s33
      %s138 = sor.u32 %s136, %s137
      %p139 = scmp.eq.s32.totalorder %s138, 0
      %s141 = sadd.s32 %s140, 1
      %s142 = scalar_select %p139, %s140, %s141
      %p145 = pneg %p139
      %p146 = scmp.eq.s32.totalorder %s18, 3
      %p147 = por %p145, %p146
      %p148 = scmp.ne.s32.totalorder %s140, %s143
      %p149 = scmp.eq.s32.totalorder %s18, 0
      %p150 = por %p148, %p149
      %p151 = scmp.ne.s32.totalorder %s140, %s143
      %p152 = scmp.eq.s32.totalorder %s23, 3
      %p153 = por %p151, %p152
      %p154 = scmp.ne.s32.totalorder %s143, %s144
      %p155 = scmp.eq.s32.totalorder %s23, 0
      %p156 = por %p154, %p155
      %p157 = scmp.ne.s32.totalorder %s143, %s144
      %p158 = scmp.eq.s32.totalorder %s24, 3
      %p159 = por %p157, %p158
      %p161 = scmp.ne.s32.totalorder %s144, %s160
      %p162 = scmp.eq.s32.totalorder %s24, 0
      %p163 = por %p161, %p162
      %s164 = ssub.s32 %s25, %s37
      %s165 = ssub.s32 %s26, %s33
      %s166 = sor.u32 %s164, %s165
      %p167 = scmp.eq.s32.totalorder %s166, 0
      %s169 = sadd.s32 %s168, 1
      %s170 = scalar_select %p167, %s168, %s169
      %p173 = pneg %p167
      %p174 = scmp.eq.s32.totalorder %s18, 3
      %p175 = por %p173, %p174
      %p176 = scmp.ne.s32.totalorder %s168, %s171
      %p177 = scmp.eq.s32.totalorder %s18, 0
      %p178 = por %p176, %p177
      %p179 = scmp.ne.s32.totalorder %s168, %s171
      %p180 = scmp.eq.s32.totalorder %s23, 3
      %p181 = por %p179, %p180
      %p182 = scmp.ne.s32.totalorder %s171, %s172
      %p183 = scmp.eq.s32.totalorder %s23, 0
      %p184 = por %p182, %p183
      %p185 = scmp.ne.s32.totalorder %s171, %s172
      %p186 = scmp.eq.s32.totalorder %s24, 3
      %p187 = por %p185, %p186
      %p189 = scmp.ne.s32.totalorder %s172, %s188
      %p190 = scmp.eq.s32.totalorder %s24, 0
      %p191 = por %p189, %p190
      %p192 = scmp.le.s32.totalorder 1, %s18
      %p193 = scmp.lt.s32.totalorder %s18, 5
      %p194 = pnand %p192, %p193
      %p195 = pneg %p194
      // Predicated region
      $region9: #{attention_module_forward.2} parent=5 // pred_check
        _
      $region10: #{attention_module_forward.2} parent=5 // pred_check_branch
        %197 = sbr.rel (%p194) target = $region12
      $region11: #{attention_module_forward.2} parent=5 // pred_region
        %s198 = ssub.s32 %s18, 1
        // Predicated region
        $region13: #{attention_module_forward.2} parent=11 // pred_check
          %p199 = pneg %p107
        $region14: #{attention_module_forward.2} parent=11 // pred_check_branch
          %201 = sbr.rel (%p199) target = $region16
        $region15: #{attention_module_forward.2} parent=11 // pred_region
          _
        $region16: #{attention_module_forward.2} parent=11 // pred_fallthru
          _
        // Predicated region
        $region17: #{attention_module_forward.2} parent=11 // pred_check
          %p202 = pneg %p128
        $region18: #{attention_module_forward.2} parent=11 // pred_check_branch
          %204 = sbr.rel (%p202) target = $region20
        $region19: #{attention_module_forward.2} parent=11 // pred_region
          _
        $region20: #{attention_module_forward.2} parent=11 // pred_fallthru
          _
      $region12: #{attention_module_forward.2} parent=5 // pred_fallthru
        _
      %p205 = scmp.lt.s32.totalorder %s18, 4
      // Predicated region
      $region21: #{attention_module_forward.2} parent=5 // pred_check
        %p206 = pneg %p205
      $region22: #{attention_module_forward.2} parent=5 // pred_check_branch
        %208 = sbr.rel (%p206) target = $region24
      $region23: #{attention_module_forward.2} parent=5 // pred_region
        // Predicated region
        $region25: #{attention_module_forward.2} parent=23 // pred_check
          %p209 = pneg %p52
        $region26: #{attention_module_forward.2} parent=23 // pred_check_branch
          %211 = sbr.rel (%p209) target = $region28
        $region27: #{attention_module_forward.2} parent=23 // pred_region
          %s212 = sand.u32 %s42, 1
          %s213 = scalar_lea.sflag [#allocation3], %s212
          %s214 = sand.u32 %s42, 1
          %s215 = smul.addr %s214, 256
          %s216 = scalar_lea.vmem [#allocation2], %s215
          %s217 = smul.u32 32, %s26
          %219 = vsyncadd %s213, 0
          %s220 = smul.addr %s25, 64
          %s221 = sadd.s32 %s217, %s220
          %s222 = smul.addr %s221, 8
          %s223 = scalar_lea.hbm %s0, %s222
          %s224 = sshll.u32 %s223, 4
          %s225 = int_to_ptr.hbm [resolvable:$true] %s224
          %s226 = sshll.u32 %s216, 4
          %s227 = int_to_ptr.vmem [resolvable:$true] %s226
          %232 = dma.hbm_to_vmem [thread:$0]  %s225, 4096, %s227, %s213, 128, 128, 8
        $region28: #{attention_module_forward.2} parent=23 // pred_fallthru
          _
        // Predicated region
        $region29: #{attention_module_forward.2} parent=23 // pred_check
          %p233 = pneg %p80
        $region30: #{attention_module_forward.2} parent=23 // pred_check_branch
          %235 = sbr.rel (%p233) target = $region32
        $region31: #{attention_module_forward.2} parent=23 // pred_region
          %s236 = sand.u32 %s70, 1
          %s237 = scalar_lea.sflag [#allocation5], %s236
          %s238 = sand.u32 %s70, 1
          %s239 = smul.addr %s238, 256
          %s240 = scalar_lea.vmem [#allocation4], %s239
          %s241 = smul.u32 32, %s26
          %243 = vsyncadd %s237, 0
          %s244 = smul.addr %s25, 64
          %s245 = sadd.s32 %s241, %s244
          %s246 = smul.addr %s245, 8
          %s247 = scalar_lea.hbm %s1, %s246
          %s248 = sshll.u32 %s247, 4
          %s249 = int_to_ptr.hbm [resolvable:$true] %s248
          %s250 = sshll.u32 %s240, 4
          %s251 = int_to_ptr.vmem [resolvable:$true] %s250
          %256 = dma.hbm_to_vmem [thread:$0]  %s249, 4096, %s251, %s237, 128, 128, 8
        $region32: #{attention_module_forward.2} parent=23 // pred_fallthru
          _
      $region24: #{attention_module_forward.2} parent=5 // pred_fallthru
        _
      %p257 = scmp.le.s32.totalorder 1, %s18
      %p258 = scmp.lt.s32.totalorder %s18, 5
      %p259 = pnand %p257, %p258
      %p260 = pneg %p259
      // Predicated region
      $region33: #{attention_module_forward.2} parent=5 // pred_check
        _
      $region34: #{attention_module_forward.2} parent=5 // pred_check_branch
        %262 = sbr.rel (%p259) target = $region36
      $region35: #{attention_module_forward.2} parent=5 // pred_region
        %s263 = ssub.s32 %s18, 1
        %s264 = sand.u32 %s45, 1
        %s265 = scalar_lea.sflag [#allocation3], %s264
        %s266 = sand.u32 %s45, 1
        %s267 = smul.addr %s266, 256
        %s268 = scalar_lea.vmem [#allocation2], %s267
        // Predicated region
        $region37: #{attention_module_forward.2} parent=35 // pred_check
          %p269 = pneg %p58
        $region38: #{attention_module_forward.2} parent=35 // pred_check_branch
          %271 = sbr.rel (%p269) target = $region40
        $region39: #{attention_module_forward.2} parent=35 // pred_region
          %273 = dma.done %s265, 4096
        $region40: #{attention_module_forward.2} parent=35 // pred_fallthru
          _
        %s274 = sand.u32 %s73, 1
        %s275 = scalar_lea.sflag [#allocation5], %s274
        %s276 = sand.u32 %s73, 1
        %s277 = smul.addr %s276, 256
        %s278 = scalar_lea.vmem [#allocation4], %s277
        // Predicated region
        $region41: #{attention_module_forward.2} parent=35 // pred_check
          %p279 = pneg %p86
        $region42: #{attention_module_forward.2} parent=35 // pred_check_branch
          %281 = sbr.rel (%p279) target = $region44
        $region43: #{attention_module_forward.2} parent=35 // pred_region
          %283 = dma.done %s275, 4096
        $region44: #{attention_module_forward.2} parent=35 // pred_fallthru
          _
        %s284 = sand.u32 %s45, 1
        %s285 = scalar_lea.sflag [#allocation3], %s284
        %s286 = sand.u32 %s45, 1
        %s287 = smul.addr %s286, 256
        %s288 = scalar_lea.vmem [#allocation2], %s287
        %p289 = pneg %p58
        %p290 = pneg %p55
        %s291 = sand.u32 %s73, 1
        %s292 = scalar_lea.sflag [#allocation5], %s291
        %s293 = sand.u32 %s73, 1
        %s294 = smul.addr %s293, 256
        %s295 = scalar_lea.vmem [#allocation4], %s294
        %p296 = pneg %p86
        %p297 = pneg %p83
        %p298 = pneg %p107
        %p299 = pneg %p104
        %p300 = pneg %p128
        %p301 = pneg %p125
        %p302 = pneg %p156
        %p303 = pneg %p153
        %s304 = smul.u32 32, %s28
        %p305 = scmp.lt.s32.totalorder %s27, 1
        %s306 = scalar_select %p305, %s27, 1
        %p307 = scmp.lt.s32.totalorder %s304, 63
        %s308 = scalar_select %p307, %s304, 63
        %s309 = smul.addr %s306, 64
        %s310 = sadd.s32 %s308, %s309
        %s311 = smul.addr %s310, 4
        %s312 = scalar_lea.vmem %s4, %s311
        %p313 = pneg %p184
        %p314 = pneg %p181
        %s315 = smul.u32 32, %s28
        %p316 = scmp.lt.s32.totalorder %s27, 1
        %s317 = scalar_select %p316, %s27, 1
        %p318 = scmp.lt.s32.totalorder %s315, 63
        %s319 = scalar_select %p318, %s315, 63
        %s320 = smul.addr %s317, 64
        %s321 = sadd.s32 %s319, %s320
        %s322 = smul.addr %s321, 4
        %s323 = scalar_lea.vmem %s5, %s322
        %s324 = smul.u32 32, %s28
        %s325 = smul.u32 32, %s28
        %s326 = smul.u32 32, %s28
        %p327 = scmp.lt.s32.totalorder %s27, 1
        %s328 = scalar_select %p327, %s27, 1
        %p329 = scmp.lt.s32.totalorder %s326, 63
        %s330 = scalar_select %p329, %s326, 63
        %s331 = smul.addr %s328, 64
        %s332 = sadd.s32 %s330, %s331
        %s333 = smul.addr %s332, 4
        %s334 = scalar_lea.vmem %s4, %s333
        %s335 = smul.u32 32, %s28
        %s336 = smul.u32 32, %s28
        %p337 = scmp.lt.s32.totalorder %s27, 1
        %s338 = scalar_select %p337, %s27, 1
        %p339 = scmp.lt.s32.totalorder %s336, 63
        %s340 = scalar_select %p339, %s336, 63
        %s341 = smul.addr %s338, 64
        %s342 = sadd.s32 %s340, %s341
        %s343 = smul.addr %s342, 4
        %s344 = scalar_lea.vmem %s5, %s343
        %s345 = smul.u32 32, %s28
        %v346 = vld [vmem:[%s268] sm:$0xff]
        %v347 = vld [vmem:[%s268 + $0x8] sm:$0xff]
        %v348 = vld [vmem:[%s268 + $0x10] sm:$0xff]
        %v349 = vld [vmem:[%s268 + $0x18] sm:$0xff]
        %v350 = vld [vmem:[%s268 + $0x20] sm:$0xff]
        %v351 = vld [vmem:[%s268 + $0x28] sm:$0xff]
        %v352 = vld [vmem:[%s268 + $0x30] sm:$0xff]
        %v353 = vld [vmem:[%s268 + $0x38] sm:$0xff]
        %v354 = vld [vmem:[%s268 + $0x40] sm:$0xff]
        %v355 = vld [vmem:[%s268 + $0x48] sm:$0xff]
        %v356 = vld [vmem:[%s268 + $0x50] sm:$0xff]
        %v357 = vld [vmem:[%s268 + $0x58] sm:$0xff]
        %v358 = vld [vmem:[%s268 + $0x60] sm:$0xff]
        %v359 = vld [vmem:[%s268 + $0x68] sm:$0xff]
        %v360 = vld [vmem:[%s268 + $0x70] sm:$0xff]
        %v361 = vld [vmem:[%s268 + $0x78] sm:$0xff]
        %v362 = vld [vmem:[%s268 + $0x80] sm:$0xff]
        %v363 = vld [vmem:[%s268 + $0x88] sm:$0xff]
        %v364 = vld [vmem:[%s268 + $0x90] sm:$0xff]
        %v365 = vld [vmem:[%s268 + $0x98] sm:$0xff]
        %v366 = vld [vmem:[%s268 + $0xa0] sm:$0xff]
        %v367 = vld [vmem:[%s268 + $0xa8] sm:$0xff]
        %v368 = vld [vmem:[%s268 + $0xb0] sm:$0xff]
        %v369 = vld [vmem:[%s268 + $0xb8] sm:$0xff]
        %v370 = vld [vmem:[%s268 + $0xc0] sm:$0xff]
        %v371 = vld [vmem:[%s268 + $0xc8] sm:$0xff]
        %v372 = vld [vmem:[%s268 + $0xd0] sm:$0xff]
        %v373 = vld [vmem:[%s268 + $0xd8] sm:$0xff]
        %v374 = vld [vmem:[%s268 + $0xe0] sm:$0xff]
        %v375 = vld [vmem:[%s268 + $0xe8] sm:$0xff]
        %v376 = vld [vmem:[%s268 + $0xf0] sm:$0xff]
        %v377 = vld [vmem:[%s268 + $0xf8] sm:$0xff]
        %v378 = vpack.c.bf16 %v347, %v346
        %v379 = vpack.c.bf16 %v349, %v348
        %v380 = vpack.c.bf16 %v351, %v350
        %v381 = vpack.c.bf16 %v353, %v352
        %v382 = vpack.c.bf16 %v355, %v354
        %v383 = vpack.c.bf16 %v357, %v356
        %v384 = vpack.c.bf16 %v359, %v358
        %v385 = vpack.c.bf16 %v361, %v360
        %v386 = vpack.c.bf16 %v363, %v362
        %v387 = vpack.c.bf16 %v365, %v364
        %v388 = vpack.c.bf16 %v367, %v366
        %v389 = vpack.c.bf16 %v369, %v368
        %v390 = vpack.c.bf16 %v371, %v370
        %v391 = vpack.c.bf16 %v373, %v372
        %v392 = vpack.c.bf16 %v375, %v374
        %v393 = vpack.c.bf16 %v377, %v376
        %v394 = vld [vmem:[%s2] sm:$0xf]
        %v395 = vld [vmem:[%s2 + $0x4] sm:$0xf]
        %v396 = vld [vmem:[%s2 + $0x8] sm:$0xf]
        %v397 = vld [vmem:[%s2 + $0xc] sm:$0xf]
        %v398 = vld [vmem:[%s2 + $0x10] sm:$0xf]
        %v399 = vld [vmem:[%s2 + $0x14] sm:$0xf]
        %v400 = vld [vmem:[%s2 + $0x18] sm:$0xf]
        %v401 = vld [vmem:[%s2 + $0x1c] sm:$0xf]
        %v402 = vld [vmem:[%s2 + $0x20] sm:$0xf]
        %v403 = vld [vmem:[%s2 + $0x24] sm:$0xf]
        %v404 = vld [vmem:[%s2 + $0x28] sm:$0xf]
        %v405 = vld [vmem:[%s2 + $0x2c] sm:$0xf]
        %v406 = vld [vmem:[%s2 + $0x30] sm:$0xf]
        %v407 = vld [vmem:[%s2 + $0x34] sm:$0xf]
        %v408 = vld [vmem:[%s2 + $0x38] sm:$0xf]
        %v409 = vld [vmem:[%s2 + $0x3c] sm:$0xf]
        %v426 = vunpack.c.l.b16 %v394
        %v427 = vunpack.c.l.b16 %v395
        %v428 = vunpack.c.l.b16 %v396
        %v429 = vunpack.c.l.b16 %v397
        %v430 = vunpack.c.l.b16 %v398
        %v431 = vunpack.c.l.b16 %v399
        %v432 = vunpack.c.l.b16 %v400
        %v433 = vunpack.c.l.b16 %v401
        %v434 = vunpack.c.l.b16 %v402
        %v435 = vunpack.c.l.b16 %v403
        %v436 = vunpack.c.l.b16 %v404
        %v437 = vunpack.c.l.b16 %v405
        %v438 = vunpack.c.l.b16 %v406
        %v439 = vunpack.c.l.b16 %v407
        %v440 = vunpack.c.l.b16 %v408
        %v441 = vunpack.c.l.b16 %v409
        %v442 = vpack.c.b16 %v427, %v426
        %v443 = vpack.c.b16 %v429, %v428
        %v444 = vpack.c.b16 %v431, %v430
        %v445 = vpack.c.b16 %v433, %v432
        %v446 = vpack.c.b16 %v435, %v434
        %v447 = vpack.c.b16 %v437, %v436
        %v448 = vpack.c.b16 %v439, %v438
        %v449 = vpack.c.b16 %v441, %v440
        %458 = vmatpush.bf16.msra.mxu0 %v449
        %459 = vmatpush.bf16.msra.mxu0 %v448
        %460 = vmatpush.bf16.msra.mxu0 %v447
        %461 = vmatpush.bf16.msra.mxu0 %v446
        %462 = vmatpush.bf16.msra.mxu0 %v445
        %463 = vmatpush.bf16.msra.mxu0 %v444
        %464 = vmatpush.bf16.msra.mxu0 %v443
        %465 = vmatpush.bf16.msra.mxu0 %v442
        %466 = vmatmul.bf16.gmra.mxu0 %v378
        %v467 = vpop.f32.mrf.mxu0
        %v468 = vadd.f32 0.0, %v467
        %v469 = vpop.f32.mrf.mxu0
        %v470 = vadd.f32 0.0, %v469
        %471 = vmatmul.bf16.gmra.mxu0 %v379
        %v472 = vpop.f32.mrf.mxu0
        %v473 = vadd.f32 0.0, %v472
        %v474 = vpop.f32.mrf.mxu0
        %v475 = vadd.f32 0.0, %v474
        %476 = vmatmul.bf16.gmra.mxu0 %v380
        %v477 = vpop.f32.mrf.mxu0
        %v478 = vadd.f32 0.0, %v477
        %v479 = vpop.f32.mrf.mxu0
        %v480 = vadd.f32 0.0, %v479
        %481 = vmatmul.bf16.gmra.mxu0 %v381
        %v482 = vpop.f32.mrf.mxu0
        %v483 = vadd.f32 0.0, %v482
        %v484 = vpop.f32.mrf.mxu0
        %v485 = vadd.f32 0.0, %v484
        %486 = vmatmul.bf16.gmra.mxu0 %v382
        %v487 = vpop.f32.mrf.mxu0
        %v488 = vadd.f32 0.0, %v487
        %v489 = vpop.f32.mrf.mxu0
        %v490 = vadd.f32 0.0, %v489
        %491 = vmatmul.bf16.gmra.mxu0 %v383
        %v492 = vpop.f32.mrf.mxu0
        %v493 = vadd.f32 0.0, %v492
        %v494 = vpop.f32.mrf.mxu0
        %v495 = vadd.f32 0.0, %v494
        %496 = vmatmul.bf16.gmra.mxu0 %v384
        %v497 = vpop.f32.mrf.mxu0
        %v498 = vadd.f32 0.0, %v497
        %v499 = vpop.f32.mrf.mxu0
        %v500 = vadd.f32 0.0, %v499
        %501 = vmatmul.bf16.gmra.mxu0 %v385
        %v502 = vpop.f32.mrf.mxu0
        %v503 = vadd.f32 0.0, %v502
        %v504 = vpop.f32.mrf.mxu0
        %v505 = vadd.f32 0.0, %v504
        %506 = vmatmul.bf16.gmra.mxu0 %v386
        %v507 = vpop.f32.mrf.mxu0
        %v508 = vadd.f32 0.0, %v507
        %v509 = vpop.f32.mrf.mxu0
        %v510 = vadd.f32 0.0, %v509
        %511 = vmatmul.bf16.gmra.mxu0 %v387
        %v512 = vpop.f32.mrf.mxu0
        %v513 = vadd.f32 0.0, %v512
        %v514 = vpop.f32.mrf.mxu0
        %v515 = vadd.f32 0.0, %v514
        %516 = vmatmul.bf16.gmra.mxu0 %v388
        %v517 = vpop.f32.mrf.mxu0
        %v518 = vadd.f32 0.0, %v517
        %v519 = vpop.f32.mrf.mxu0
        %v520 = vadd.f32 0.0, %v519
        %521 = vmatmul.bf16.gmra.mxu0 %v389
        %v522 = vpop.f32.mrf.mxu0
        %v523 = vadd.f32 0.0, %v522
        %v524 = vpop.f32.mrf.mxu0
        %v525 = vadd.f32 0.0, %v524
        %526 = vmatmul.bf16.gmra.mxu0 %v390
        %v527 = vpop.f32.mrf.mxu0
        %v528 = vadd.f32 0.0, %v527
        %v529 = vpop.f32.mrf.mxu0
        %v530 = vadd.f32 0.0, %v529
        %531 = vmatmul.bf16.gmra.mxu0 %v391
        %v532 = vpop.f32.mrf.mxu0
        %v533 = vadd.f32 0.0, %v532
        %v534 = vpop.f32.mrf.mxu0
        %v535 = vadd.f32 0.0, %v534
        %536 = vmatmul.bf16.gmra.mxu0 %v392
        %v537 = vpop.f32.mrf.mxu0
        %v538 = vadd.f32 0.0, %v537
        %v539 = vpop.f32.mrf.mxu0
        %v540 = vadd.f32 0.0, %v539
        %541 = vmatmul.bf16.gmra.mxu0 %v393
        %v542 = vpop.f32.mrf.mxu0
        %v543 = vadd.f32 0.0, %v542
        %v544 = vpop.f32.mrf.mxu0
        %v545 = vadd.f32 0.0, %v544
        %546 = vdwg.mxu0
        %v547 = vpack.c.bf16 %v468, %v468
        %v548 = vpack.c.bf16 %v470, %v470
        %v549 = vpack.c.bf16 %v473, %v473
        %v550 = vpack.c.bf16 %v475, %v475
        %v551 = vpack.c.bf16 %v478, %v478
        %v552 = vpack.c.bf16 %v480, %v480
        %v553 = vpack.c.bf16 %v483, %v483
        %v554 = vpack.c.bf16 %v485, %v485
        %v555 = vpack.c.bf16 %v488, %v488
        %v556 = vpack.c.bf16 %v490, %v490
        %v557 = vpack.c.bf16 %v493, %v493
        %v558 = vpack.c.bf16 %v495, %v495
        %v559 = vpack.c.bf16 %v498, %v498
        %v560 = vpack.c.bf16 %v500, %v500
        %v561 = vpack.c.bf16 %v503, %v503
        %v562 = vpack.c.bf16 %v505, %v505
        %v563 = vpack.c.bf16 %v508, %v508
        %v564 = vpack.c.bf16 %v510, %v510
        %v565 = vpack.c.bf16 %v513, %v513
        %v566 = vpack.c.bf16 %v515, %v515
        %v567 = vpack.c.bf16 %v518, %v518
        %v568 = vpack.c.bf16 %v520, %v520
        %v569 = vpack.c.bf16 %v523, %v523
        %v570 = vpack.c.bf16 %v525, %v525
        %v571 = vpack.c.bf16 %v528, %v528
        %v572 = vpack.c.bf16 %v530, %v530
        %v573 = vpack.c.bf16 %v533, %v533
        %v574 = vpack.c.bf16 %v535, %v535
        %v575 = vpack.c.bf16 %v538, %v538
        %v576 = vpack.c.bf16 %v540, %v540
        %v577 = vpack.c.bf16 %v543, %v543
        %v578 = vpack.c.bf16 %v545, %v545
        %579 = vst [vmem:[%s334] sm:$0xf] %v547
        %580 = vst [vmem:[%s334 + $0x4] sm:$0xf] %v548
        %581 = vst [vmem:[%s334 + $0x8] sm:$0xf] %v549
        %582 = vst [vmem:[%s334 + $0xc] sm:$0xf] %v550
        %583 = vst [vmem:[%s334 + $0x10] sm:$0xf] %v551
        %584 = vst [vmem:[%s334 + $0x14] sm:$0xf] %v552
        %585 = vst [vmem:[%s334 + $0x18] sm:$0xf] %v553
        %586 = vst [vmem:[%s334 + $0x1c] sm:$0xf] %v554
        %587 = vst [vmem:[%s334 + $0x20] sm:$0xf] %v555
        %588 = vst [vmem:[%s334 + $0x24] sm:$0xf] %v556
        %589 = vst [vmem:[%s334 + $0x28] sm:$0xf] %v557
        %590 = vst [vmem:[%s334 + $0x2c] sm:$0xf] %v558
        %591 = vst [vmem:[%s334 + $0x30] sm:$0xf] %v559
        %592 = vst [vmem:[%s334 + $0x34] sm:$0xf] %v560
        %593 = vst [vmem:[%s334 + $0x38] sm:$0xf] %v561
        %594 = vst [vmem:[%s334 + $0x3c] sm:$0xf] %v562
        %595 = vst [vmem:[%s334 + $0x40] sm:$0xf] %v563
        %596 = vst [vmem:[%s334 + $0x44] sm:$0xf] %v564
        %597 = vst [vmem:[%s334 + $0x48] sm:$0xf] %v565
        %598 = vst [vmem:[%s334 + $0x4c] sm:$0xf] %v566
        %599 = vst [vmem:[%s334 + $0x50] sm:$0xf] %v567
        %600 = vst [vmem:[%s334 + $0x54] sm:$0xf] %v568
        %601 = vst [vmem:[%s334 + $0x58] sm:$0xf] %v569
        %602 = vst [vmem:[%s334 + $0x5c] sm:$0xf] %v570
        %603 = vst [vmem:[%s334 + $0x60] sm:$0xf] %v571
        %604 = vst [vmem:[%s334 + $0x64] sm:$0xf] %v572
        %605 = vst [vmem:[%s334 + $0x68] sm:$0xf] %v573
        %606 = vst [vmem:[%s334 + $0x6c] sm:$0xf] %v574
        %607 = vst [vmem:[%s334 + $0x70] sm:$0xf] %v575
        %608 = vst [vmem:[%s334 + $0x74] sm:$0xf] %v576
        %609 = vst [vmem:[%s334 + $0x78] sm:$0xf] %v577
        %610 = vst [vmem:[%s334 + $0x7c] sm:$0xf] %v578
        %v611 = vld [vmem:[%s278] sm:$0xff]
        %v612 = vld [vmem:[%s278 + $0x8] sm:$0xff]
        %v613 = vld [vmem:[%s278 + $0x10] sm:$0xff]
        %v614 = vld [vmem:[%s278 + $0x18] sm:$0xff]
        %v615 = vld [vmem:[%s278 + $0x20] sm:$0xff]
        %v616 = vld [vmem:[%s278 + $0x28] sm:$0xff]
        %v617 = vld [vmem:[%s278 + $0x30] sm:$0xff]
        %v618 = vld [vmem:[%s278 + $0x38] sm:$0xff]
        %v619 = vld [vmem:[%s278 + $0x40] sm:$0xff]
        %v620 = vld [vmem:[%s278 + $0x48] sm:$0xff]
        %v621 = vld [vmem:[%s278 + $0x50] sm:$0xff]
        %v622 = vld [vmem:[%s278 + $0x58] sm:$0xff]
        %v623 = vld [vmem:[%s278 + $0x60] sm:$0xff]
        %v624 = vld [vmem:[%s278 + $0x68] sm:$0xff]
        %v625 = vld [vmem:[%s278 + $0x70] sm:$0xff]
        %v626 = vld [vmem:[%s278 + $0x78] sm:$0xff]
        %v627 = vld [vmem:[%s278 + $0x80] sm:$0xff]
        %v628 = vld [vmem:[%s278 + $0x88] sm:$0xff]
        %v629 = vld [vmem:[%s278 + $0x90] sm:$0xff]
        %v630 = vld [vmem:[%s278 + $0x98] sm:$0xff]
        %v631 = vld [vmem:[%s278 + $0xa0] sm:$0xff]
        %v632 = vld [vmem:[%s278 + $0xa8] sm:$0xff]
        %v633 = vld [vmem:[%s278 + $0xb0] sm:$0xff]
        %v634 = vld [vmem:[%s278 + $0xb8] sm:$0xff]
        %v635 = vld [vmem:[%s278 + $0xc0] sm:$0xff]
        %v636 = vld [vmem:[%s278 + $0xc8] sm:$0xff]
        %v637 = vld [vmem:[%s278 + $0xd0] sm:$0xff]
        %v638 = vld [vmem:[%s278 + $0xd8] sm:$0xff]
        %v639 = vld [vmem:[%s278 + $0xe0] sm:$0xff]
        %v640 = vld [vmem:[%s278 + $0xe8] sm:$0xff]
        %v641 = vld [vmem:[%s278 + $0xf0] sm:$0xff]
        %v642 = vld [vmem:[%s278 + $0xf8] sm:$0xff]
        %v643 = vpack.c.bf16 %v612, %v611
        %v644 = vpack.c.bf16 %v614, %v613
        %v645 = vpack.c.bf16 %v616, %v615
        %v646 = vpack.c.bf16 %v618, %v617
        %v647 = vpack.c.bf16 %v620, %v619
        %v648 = vpack.c.bf16 %v622, %v621
        %v649 = vpack.c.bf16 %v624, %v623
        %v650 = vpack.c.bf16 %v626, %v625
        %v651 = vpack.c.bf16 %v628, %v627
        %v652 = vpack.c.bf16 %v630, %v629
        %v653 = vpack.c.bf16 %v632, %v631
        %v654 = vpack.c.bf16 %v634, %v633
        %v655 = vpack.c.bf16 %v636, %v635
        %v656 = vpack.c.bf16 %v638, %v637
        %v657 = vpack.c.bf16 %v640, %v639
        %v658 = vpack.c.bf16 %v642, %v641
        %v659 = vld [vmem:[%s3] sm:$0xf]
        %v660 = vld [vmem:[%s3 + $0x4] sm:$0xf]
        %v661 = vld [vmem:[%s3 + $0x8] sm:$0xf]
        %v662 = vld [vmem:[%s3 + $0xc] sm:$0xf]
        %v663 = vld [vmem:[%s3 + $0x10] sm:$0xf]
        %v664 = vld [vmem:[%s3 + $0x14] sm:$0xf]
        %v665 = vld [vmem:[%s3 + $0x18] sm:$0xf]
        %v666 = vld [vmem:[%s3 + $0x1c] sm:$0xf]
        %v667 = vld [vmem:[%s3 + $0x20] sm:$0xf]
        %v668 = vld [vmem:[%s3 + $0x24] sm:$0xf]
        %v669 = vld [vmem:[%s3 + $0x28] sm:$0xf]
        %v670 = vld [vmem:[%s3 + $0x2c] sm:$0xf]
        %v671 = vld [vmem:[%s3 + $0x30] sm:$0xf]
        %v672 = vld [vmem:[%s3 + $0x34] sm:$0xf]
        %v673 = vld [vmem:[%s3 + $0x38] sm:$0xf]
        %v674 = vld [vmem:[%s3 + $0x3c] sm:$0xf]
        %v691 = vunpack.c.l.b16 %v659
        %v692 = vunpack.c.l.b16 %v660
        %v693 = vunpack.c.l.b16 %v661
        %v694 = vunpack.c.l.b16 %v662
        %v695 = vunpack.c.l.b16 %v663
        %v696 = vunpack.c.l.b16 %v664
        %v697 = vunpack.c.l.b16 %v665
        %v698 = vunpack.c.l.b16 %v666
        %v699 = vunpack.c.l.b16 %v667
        %v700 = vunpack.c.l.b16 %v668
        %v701 = vunpack.c.l.b16 %v669
        %v702 = vunpack.c.l.b16 %v670
        %v703 = vunpack.c.l.b16 %v671
        %v704 = vunpack.c.l.b16 %v672
        %v705 = vunpack.c.l.b16 %v673
        %v706 = vunpack.c.l.b16 %v674
        %v707 = vpack.c.b16 %v692, %v691
        %v708 = vpack.c.b16 %v694, %v693
        %v709 = vpack.c.b16 %v696, %v695
        %v710 = vpack.c.b16 %v698, %v697
        %v711 = vpack.c.b16 %v700, %v699
        %v712 = vpack.c.b16 %v702, %v701
        %v713 = vpack.c.b16 %v704, %v703
        %v714 = vpack.c.b16 %v706, %v705
        %723 = vmatpush.bf16.msra.mxu0 %v714
        %724 = vmatpush.bf16.msra.mxu0 %v713
        %725 = vmatpush.bf16.msra.mxu0 %v712
        %726 = vmatpush.bf16.msra.mxu0 %v711
        %727 = vmatpush.bf16.msra.mxu0 %v710
        %728 = vmatpush.bf16.msra.mxu0 %v709
        %729 = vmatpush.bf16.msra.mxu0 %v708
        %730 = vmatpush.bf16.msra.mxu0 %v707
        %731 = vmatmul.bf16.gmra.mxu0 %v643
        %v732 = vpop.f32.mrf.mxu0
        %v733 = vadd.f32 0.0, %v732
        %v734 = vpop.f32.mrf.mxu0
        %v735 = vadd.f32 0.0, %v734
        %736 = vmatmul.bf16.gmra.mxu0 %v644
        %v737 = vpop.f32.mrf.mxu0
        %v738 = vadd.f32 0.0, %v737
        %v739 = vpop.f32.mrf.mxu0
        %v740 = vadd.f32 0.0, %v739
        %741 = vmatmul.bf16.gmra.mxu0 %v645
        %v742 = vpop.f32.mrf.mxu0
        %v743 = vadd.f32 0.0, %v742
        %v744 = vpop.f32.mrf.mxu0
        %v745 = vadd.f32 0.0, %v744
        %746 = vmatmul.bf16.gmra.mxu0 %v646
        %v747 = vpop.f32.mrf.mxu0
        %v748 = vadd.f32 0.0, %v747
        %v749 = vpop.f32.mrf.mxu0
        %v750 = vadd.f32 0.0, %v749
        %751 = vmatmul.bf16.gmra.mxu0 %v647
        %v752 = vpop.f32.mrf.mxu0
        %v753 = vadd.f32 0.0, %v752
        %v754 = vpop.f32.mrf.mxu0
        %v755 = vadd.f32 0.0, %v754
        %756 = vmatmul.bf16.gmra.mxu0 %v648
        %v757 = vpop.f32.mrf.mxu0
        %v758 = vadd.f32 0.0, %v757
        %v759 = vpop.f32.mrf.mxu0
        %v760 = vadd.f32 0.0, %v759
        %761 = vmatmul.bf16.gmra.mxu0 %v649
        %v762 = vpop.f32.mrf.mxu0
        %v763 = vadd.f32 0.0, %v762
        %v764 = vpop.f32.mrf.mxu0
        %v765 = vadd.f32 0.0, %v764
        %766 = vmatmul.bf16.gmra.mxu0 %v650
        %v767 = vpop.f32.mrf.mxu0
        %v768 = vadd.f32 0.0, %v767
        %v769 = vpop.f32.mrf.mxu0
        %v770 = vadd.f32 0.0, %v769
        %771 = vmatmul.bf16.gmra.mxu0 %v651
        %v772 = vpop.f32.mrf.mxu0
        %v773 = vadd.f32 0.0, %v772
        %v774 = vpop.f32.mrf.mxu0
        %v775 = vadd.f32 0.0, %v774
        %776 = vmatmul.bf16.gmra.mxu0 %v652
        %v777 = vpop.f32.mrf.mxu0
        %v778 = vadd.f32 0.0, %v777
        %v779 = vpop.f32.mrf.mxu0
        %v780 = vadd.f32 0.0, %v779
        %781 = vmatmul.bf16.gmra.mxu0 %v653
        %v782 = vpop.f32.mrf.mxu0
        %v783 = vadd.f32 0.0, %v782
        %v784 = vpop.f32.mrf.mxu0
        %v785 = vadd.f32 0.0, %v784
        %786 = vmatmul.bf16.gmra.mxu0 %v654
        %v787 = vpop.f32.mrf.mxu0
        %v788 = vadd.f32 0.0, %v787
        %v789 = vpop.f32.mrf.mxu0
        %v790 = vadd.f32 0.0, %v789
        %791 = vmatmul.bf16.gmra.mxu0 %v655
        %v792 = vpop.f32.mrf.mxu0
        %v793 = vadd.f32 0.0, %v792
        %v794 = vpop.f32.mrf.mxu0
        %v795 = vadd.f32 0.0, %v794
        %796 = vmatmul.bf16.gmra.mxu0 %v656
        %v797 = vpop.f32.mrf.mxu0
        %v798 = vadd.f32 0.0, %v797
        %v799 = vpop.f32.mrf.mxu0
        %v800 = vadd.f32 0.0, %v799
        %801 = vmatmul.bf16.gmra.mxu0 %v657
        %v802 = vpop.f32.mrf.mxu0
        %v803 = vadd.f32 0.0, %v802
        %v804 = vpop.f32.mrf.mxu0
        %v805 = vadd.f32 0.0, %v804
        %806 = vmatmul.bf16.gmra.mxu0 %v658
        %v807 = vpop.f32.mrf.mxu0
        %v808 = vadd.f32 0.0, %v807
        %v809 = vpop.f32.mrf.mxu0
        %v810 = vadd.f32 0.0, %v809
        %811 = vdwg.mxu0
        %v812 = vpack.c.bf16 %v733, %v733
        %v813 = vpack.c.bf16 %v735, %v735
        %v814 = vpack.c.bf16 %v738, %v738
        %v815 = vpack.c.bf16 %v740, %v740
        %v816 = vpack.c.bf16 %v743, %v743
        %v817 = vpack.c.bf16 %v745, %v745
        %v818 = vpack.c.bf16 %v748, %v748
        %v819 = vpack.c.bf16 %v750, %v750
        %v820 = vpack.c.bf16 %v753, %v753
        %v821 = vpack.c.bf16 %v755, %v755
        %v822 = vpack.c.bf16 %v758, %v758
        %v823 = vpack.c.bf16 %v760, %v760
        %v824 = vpack.c.bf16 %v763, %v763
        %v825 = vpack.c.bf16 %v765, %v765
        %v826 = vpack.c.bf16 %v768, %v768
        %v827 = vpack.c.bf16 %v770, %v770
        %v828 = vpack.c.bf16 %v773, %v773
        %v829 = vpack.c.bf16 %v775, %v775
        %v830 = vpack.c.bf16 %v778, %v778
        %v831 = vpack.c.bf16 %v780, %v780
        %v832 = vpack.c.bf16 %v783, %v783
        %v833 = vpack.c.bf16 %v785, %v785
        %v834 = vpack.c.bf16 %v788, %v788
        %v835 = vpack.c.bf16 %v790, %v790
        %v836 = vpack.c.bf16 %v793, %v793
        %v837 = vpack.c.bf16 %v795, %v795
        %v838 = vpack.c.bf16 %v798, %v798
        %v839 = vpack.c.bf16 %v800, %v800
        %v840 = vpack.c.bf16 %v803, %v803
        %v841 = vpack.c.bf16 %v805, %v805
        %v842 = vpack.c.bf16 %v808, %v808
        %v843 = vpack.c.bf16 %v810, %v810
        %844 = vst [vmem:[%s344] sm:$0xf] %v812
        %845 = vst [vmem:[%s344 + $0x4] sm:$0xf] %v813
        %846 = vst [vmem:[%s344 + $0x8] sm:$0xf] %v814
        %847 = vst [vmem:[%s344 + $0xc] sm:$0xf] %v815
        %848 = vst [vmem:[%s344 + $0x10] sm:$0xf] %v816
        %849 = vst [vmem:[%s344 + $0x14] sm:$0xf] %v817
        %850 = vst [vmem:[%s344 + $0x18] sm:$0xf] %v818
        %851 = vst [vmem:[%s344 + $0x1c] sm:$0xf] %v819
        %852 = vst [vmem:[%s344 + $0x20] sm:$0xf] %v820
        %853 = vst [vmem:[%s344 + $0x24] sm:$0xf] %v821
        %854 = vst [vmem:[%s344 + $0x28] sm:$0xf] %v822
        %855 = vst [vmem:[%s344 + $0x2c] sm:$0xf] %v823
        %856 = vst [vmem:[%s344 + $0x30] sm:$0xf] %v824
        %857 = vst [vmem:[%s344 + $0x34] sm:$0xf] %v825
        %858 = vst [vmem:[%s344 + $0x38] sm:$0xf] %v826
        %859 = vst [vmem:[%s344 + $0x3c] sm:$0xf] %v827
        %860 = vst [vmem:[%s344 + $0x40] sm:$0xf] %v828
        %861 = vst [vmem:[%s344 + $0x44] sm:$0xf] %v829
        %862 = vst [vmem:[%s344 + $0x48] sm:$0xf] %v830
        %863 = vst [vmem:[%s344 + $0x4c] sm:$0xf] %v831
        %864 = vst [vmem:[%s344 + $0x50] sm:$0xf] %v832
        %865 = vst [vmem:[%s344 + $0x54] sm:$0xf] %v833
        %866 = vst [vmem:[%s344 + $0x58] sm:$0xf] %v834
        %867 = vst [vmem:[%s344 + $0x5c] sm:$0xf] %v835
        %868 = vst [vmem:[%s344 + $0x60] sm:$0xf] %v836
        %869 = vst [vmem:[%s344 + $0x64] sm:$0xf] %v837
        %870 = vst [vmem:[%s344 + $0x68] sm:$0xf] %v838
        %871 = vst [vmem:[%s344 + $0x6c] sm:$0xf] %v839
        %872 = vst [vmem:[%s344 + $0x70] sm:$0xf] %v840
        %873 = vst [vmem:[%s344 + $0x74] sm:$0xf] %v841
        %874 = vst [vmem:[%s344 + $0x78] sm:$0xf] %v842
        %875 = vst [vmem:[%s344 + $0x7c] sm:$0xf] %v843
        %s876 = smul.u32 32, %s28
        %p877 = scmp.lt.s32.totalorder %s27, 1
        %s878 = scalar_select %p877, %s27, 1
        %p879 = scmp.lt.s32.totalorder %s876, 63
        %s880 = scalar_select %p879, %s876, 63
        %s881 = smul.addr %s878, 64
        %s882 = sadd.s32 %s880, %s881
        %s883 = smul.addr %s882, 4
        %s884 = scalar_lea.vmem %s4, %s883
        %s885 = smul.u32 32, %s28
        %p886 = scmp.lt.s32.totalorder %s27, 1
        %s887 = scalar_select %p886, %s27, 1
        %p888 = scmp.lt.s32.totalorder %s885, 63
        %s889 = scalar_select %p888, %s885, 63
        %s890 = smul.addr %s887, 64
        %s891 = sadd.s32 %s889, %s890
        %s892 = smul.addr %s891, 4
        %s893 = scalar_lea.vmem %s5, %s892
        // Predicated region
        $region45: #{attention_module_forward.2} parent=35 // pred_check
          %p894 = pneg %p153
        $region46: #{attention_module_forward.2} parent=35 // pred_check_branch
          %896 = sbr.rel (%p894) target = $region48
        $region47: #{attention_module_forward.2} parent=35 // pred_region
          %s897 = smul.u32 32, %s28
        $region48: #{attention_module_forward.2} parent=35 // pred_fallthru
          _
        // Predicated region
        $region49: #{attention_module_forward.2} parent=35 // pred_check
          %p898 = pneg %p181
        $region50: #{attention_module_forward.2} parent=35 // pred_check_branch
          %900 = sbr.rel (%p898) target = $region52
        $region51: #{attention_module_forward.2} parent=35 // pred_region
          %s901 = smul.u32 32, %s28
        $region52: #{attention_module_forward.2} parent=35 // pred_fallthru
          _
      $region36: #{attention_module_forward.2} parent=5 // pred_fallthru
        _
      %p902 = scmp.le.s32.totalorder 2, %s18
      // Predicated region
      $region53: #{attention_module_forward.2} parent=5 // pred_check
        %p903 = pneg %p902
      $region54: #{attention_module_forward.2} parent=5 // pred_check_branch
        %905 = sbr.rel (%p903) target = $region56
      $region55: #{attention_module_forward.2} parent=5 // pred_region
        %s906 = ssub.s32 %s18, 2
        // Predicated region
        $region57: #{attention_module_forward.2} parent=55 // pred_check
          %p907 = pneg %p159
        $region58: #{attention_module_forward.2} parent=55 // pred_check_branch
          %909 = sbr.rel (%p907) target = $region60
        $region59: #{attention_module_forward.2} parent=55 // pred_region
          %s910 = smul.u32 32, %s30
          %p911 = scmp.lt.s32.totalorder %s29, 1
          %s912 = scalar_select %p911, %s29, 1
          %p913 = scmp.lt.s32.totalorder %s910, 63
          %s914 = scalar_select %p913, %s910, 63
          %s915 = smul.addr %s912, 64
          %s916 = sadd.s32 %s914, %s915
          %s917 = smul.addr %s916, 4
          %s918 = scalar_lea.vmem %s4, %s917
        $region60: #{attention_module_forward.2} parent=55 // pred_fallthru
          _
        // Predicated region
        $region61: #{attention_module_forward.2} parent=55 // pred_check
          %p919 = pneg %p187
        $region62: #{attention_module_forward.2} parent=55 // pred_check_branch
          %921 = sbr.rel (%p919) target = $region64
        $region63: #{attention_module_forward.2} parent=55 // pred_region
          %s922 = smul.u32 32, %s30
          %p923 = scmp.lt.s32.totalorder %s29, 1
          %s924 = scalar_select %p923, %s29, 1
          %p925 = scmp.lt.s32.totalorder %s922, 63
          %s926 = scalar_select %p925, %s922, 63
          %s927 = smul.addr %s924, 64
          %s928 = sadd.s32 %s926, %s927
          %s929 = smul.addr %s928, 4
          %s930 = scalar_lea.vmem %s5, %s929
        $region64: #{attention_module_forward.2} parent=55 // pred_fallthru
          _
      $region56: #{attention_module_forward.2} parent=5 // pred_fallthru
        _
    $region6: #{attention_module_forward.2} parent=1 // loop_footer
      %s22 = sadd.s32 1, %s18
    $region7: #{attention_module_forward.2} parent=1 // loop_footer_branch
      %17 = sbr.rel target = $region3
    $region8: #{attention_module_forward.2} parent=1 // loop_exit
      _
    %931 = vsyncpa [#allocation3], 1
    %s932 = scalar_lea.sflag [#allocation3], 1
    %933 = vsyncpa %s932, 1
    %934 = vsyncpa [#allocation5], 1
    %s935 = scalar_lea.sflag [#allocation5], 1
    %936 = vsyncpa %s935, 1

// kernel: attention_module_forward.3
$region0: #{attention_module_forward.3}
  #allocation0 [shape = 'u32[]', space=smem, size = 0x4, offset = 0x4, fixed_abs, tag = 'smem constant byte address 0x4 - core index']
  #allocation1 [shape = 'u32[72,128]{1,0:T(1,128)}', space=vmem, size = 0x9000, scoped, tag = 'internal scratch']
  #allocation2 [shape = 'bf16[256,128]{1,0:T(8,128)(2,1)}', space=vmem, size = 0x10000, scoped, tag = 'scratch operand']
  #allocation3 [shape = 'f32[256,1]{1,0:T(8,128)}', space=vmem, size = 0x20000, scoped, tag = 'scratch operand']
  #allocation4 [shape = 'f32[256,1]{1,0:T(8,128)}', space=vmem, size = 0x20000, scoped, tag = 'scratch operand']
  #allocation5 [shape = 'f32[256,128]{1,0:T(8,128)}', space=vmem, size = 0x20000, scoped, tag = 'scratch operand']
  %s0 = inlined_call_operand.hbm [shape: f32[2,512,128], index: 0, kind: input, shape index: {}]
  %s1 = inlined_call_operand.vmem [shape: bf16[128,128], index: 1, kind: input, shape index: {}]
  %s2 = inlined_call_operand.vmem [shape: bf16[2,512,128], index: 2, kind: input, shape index: {}]
  %s3 = inlined_call_operand.vmem [shape: bf16[2,512,128], index: 3, kind: input, shape index: {}]
  %s4 = inlined_call_operand.hbm [shape: f32[2,512,128], index: 4, kind: output, shape index: {}]
  %s5 = sld [smem:[#allocation0]]
  $region69: #{attention_module_forward.3} parent=0
    _
  %s7 = ssub.s32 1, %s5
  %s8 = scalar_select 0, %s7, %s5
  $region1: #{attention_module_forward.3} parent=0
    #allocation6 [shape = 'u8[262144]{0}', space=vmem, size = 0x40000, scoped, tag = 'input window, operand 0']
    #allocation7 [shape = 's32[2]{0}', space=sflag, size = 0x8, scoped, tag = 'scoped memory for attention_module_forward.3']
    #allocation8 [shape = 's32[2]{0}', space=sflag, size = 0x8, scoped, tag = 'scoped memory for attention_module_forward.3']
    #allocation9 [shape = 'u8[262144]{0}', space=vmem, size = 0x40000, scoped, tag = 'output window, operand 0']
    %9 = vsyncpa [#allocation7], 0
    %s10 = scalar_lea.sflag [#allocation7], 1
    %11 = vsyncpa %s10, 0
    %12 = vsyncpa [#allocation8], 0
    %s13 = scalar_lea.sflag [#allocation8], 1
    %14 = vsyncpa %s13, 0
    loop: start=0, step=1, limit=10
    $region2: #{attention_module_forward.3} parent=1 // loop_pre_header
      _
    $region3: #{attention_module_forward.3} parent=1 // loop_header
      %s16 = sphi 0, %s20
      %p17 = scmp.ge.s32.totalorder %s16, 10
      %s23 = sphi 0, %s42
      %s24 = sphi 0, %s38
      %s25 = sphi 0, %s34
      %s26 = sphi 0, %s23
      %s27 = sphi 0, %s24
      %s28 = sphi 0, %s25
      %s29 = sphi 0, %s26
      %s30 = sphi 0, %s27
      %s31 = sphi 0, %s28
      %s47 = sphi 0, %s49
      %s50 = sphi 0, %s47
      %s51 = sphi 0, %s50
      %s67 = sphi 0, %s51
      %s71 = sphi 0, %s71
      %s73 = sphi 0, %s71
      %s74 = sphi 0, %s73
      %s88 = sphi 0, %s74
      %s100 = sphi 0, %s102
      %s103 = sphi 0, %s100
      %s104 = sphi 0, %s103
      %s120 = sphi 0, %s104
      %s132 = sphi 0, %s134
      %s135 = sphi 0, %s132
      %s136 = sphi 0, %s135
      %s152 = sphi 0, %s136
      %s160 = sphi 0, %s162
      %s163 = sphi 0, %s160
      %s164 = sphi 0, %s163
      %s180 = sphi 0, %s164
    $region4: #{attention_module_forward.3} parent=1 // loop_header_branch
      %19 = sbr.rel (%p17) target = $region8
    $region5: #{attention_module_forward.3} parent=1 // loop_body
      %s21 = ssub.s32 %s16, 1
      %s22 = ssub.s32 %s16, 2
      %s32 = sadd.s32 1, %s25
      %p33 = scmp.ge.s32.totalorder %s32, 2
      %s34 = scalar_select %p33, 0, %s32
      %s35 = sadd.s32 1, %s24
      %s36 = scalar_select %p33, %s35, %s24
      %p37 = scmp.ge.s32.totalorder %s36, 2
      %s38 = scalar_select %p37, 0, %s36
      %s39 = sadd.s32 1, %s23
      %s40 = scalar_select %p37, %s39, %s23
      %p41 = scmp.ge.s32.totalorder %s40, 2
      %s42 = scalar_select %p41, 0, %s40
      %s43 = ssub.s32 %s23, %s42
      %s44 = ssub.s32 %s24, %s38
      %s45 = sor.u32 %s43, %s44
      %p46 = scmp.eq.s32.totalorder %s45, 0
      %s48 = sadd.s32 %s47, 1
      %s49 = scalar_select %p46, %s47, %s48
      %p52 = pneg %p46
      %p53 = scmp.eq.s32.totalorder %s16, 7
      %p54 = por %p52, %p53
      %p55 = scmp.ne.s32.totalorder %s47, %s50
      %p56 = scmp.eq.s32.totalorder %s16, 0
      %p57 = por %p55, %p56
      %p58 = scmp.ne.s32.totalorder %s47, %s50
      %p59 = scmp.eq.s32.totalorder %s21, 7
      %p60 = por %p58, %p59
      %p61 = scmp.ne.s32.totalorder %s50, %s51
      %p62 = scmp.eq.s32.totalorder %s21, 0
      %p63 = por %p61, %p62
      %p64 = scmp.ne.s32.totalorder %s50, %s51
      %p65 = scmp.eq.s32.totalorder %s22, 7
      %p66 = por %p64, %p65
      %p68 = scmp.ne.s32.totalorder %s51, %s67
      %p69 = scmp.eq.s32.totalorder %s22, 0
      %p70 = por %p68, %p69
      %s72 = sadd.s32 %s71, 1
      %p75 = scmp.eq.s32.totalorder %s16, 7
      %p76 = scmp.ne.s32.totalorder %s71, %s73
      %p77 = scmp.eq.s32.totalorder %s16, 0
      %p78 = por %p76, %p77
      %p79 = scmp.ne.s32.totalorder %s71, %s73
      %p80 = scmp.eq.s32.totalorder %s21, 7
      %p81 = por %p79, %p80
      %p82 = scmp.ne.s32.totalorder %s73, %s74
      %p83 = scmp.eq.s32.totalorder %s21, 0
      %p84 = por %p82, %p83
      %p85 = scmp.ne.s32.totalorder %s73, %s74
      %p86 = scmp.eq.s32.totalorder %s22, 7
      %p87 = por %p85, %p86
      %p89 = scmp.ne.s32.totalorder %s74, %s88
      %p90 = scmp.eq.s32.totalorder %s22, 0
      %p91 = por %p89, %p90
      %p92 = scmp.lt.s32.totalorder %s25, %s24
      %s93 = scalar_select %p92, %s25, %s24
      %p94 = scmp.lt.s32.totalorder %s34, %s38
      %s95 = scalar_select %p94, %s34, %s38
      %s96 = ssub.s32 %s23, %s42
      %s97 = ssub.s32 %s93, %s95
      %s98 = sor.u32 %s96, %s97
      %p99 = scmp.eq.s32.totalorder %s98, 0
      %s101 = sadd.s32 %s100, 1
      %s102 = scalar_select %p99, %s100, %s101
      %p105 = pneg %p99
      %p106 = scmp.eq.s32.totalorder %s16, 7
      %p107 = por %p105, %p106
      %p108 = scmp.ne.s32.totalorder %s100, %s103
      %p109 = scmp.eq.s32.totalorder %s16, 0
      %p110 = por %p108, %p109
      %p111 = scmp.ne.s32.totalorder %s100, %s103
      %p112 = scmp.eq.s32.totalorder %s21, 7
      %p113 = por %p111, %p112
      %p114 = scmp.ne.s32.totalorder %s103, %s104
      %p115 = scmp.eq.s32.totalorder %s21, 0
      %p116 = por %p114, %p115
      %p117 = scmp.ne.s32.totalorder %s103, %s104
      %p118 = scmp.eq.s32.totalorder %s22, 7
      %p119 = por %p117, %p118
      %p121 = scmp.ne.s32.totalorder %s104, %s120
      %p122 = scmp.eq.s32.totalorder %s22, 0
      %p123 = por %p121, %p122
      %p124 = scmp.lt.s32.totalorder %s25, %s24
      %s125 = scalar_select %p124, %s25, %s24
      %p126 = scmp.lt.s32.totalorder %s34, %s38
      %s127 = scalar_select %p126, %s34, %s38
      %s128 = ssub.s32 %s23, %s42
      %s129 = ssub.s32 %s125, %s127
      %s130 = sor.u32 %s128, %s129
      %p131 = scmp.eq.s32.totalorder %s130, 0
      %s133 = sadd.s32 %s132, 1
      %s134 = scalar_select %p131, %s132, %s133
      %p137 = pneg %p131
      %p138 = scmp.eq.s32.totalorder %s16, 7
      %p139 = por %p137, %p138
      %p140 = scmp.ne.s32.totalorder %s132, %s135
      %p141 = scmp.eq.s32.totalorder %s16, 0
      %p142 = por %p140, %p141
      %p143 = scmp.ne.s32.totalorder %s132, %s135
      %p144 = scmp.eq.s32.totalorder %s21, 7
      %p145 = por %p143, %p144
      %p146 = scmp.ne.s32.totalorder %s135, %s136
      %p147 = scmp.eq.s32.totalorder %s21, 0
      %p148 = por %p146, %p147
      %p149 = scmp.ne.s32.totalorder %s135, %s136
      %p150 = scmp.eq.s32.totalorder %s22, 7
      %p151 = por %p149, %p150
      %p153 = scmp.ne.s32.totalorder %s136, %s152
      %p154 = scmp.eq.s32.totalorder %s22, 0
      %p155 = por %p153, %p154
      %s156 = ssub.s32 %s23, %s42
      %s157 = ssub.s32 %s24, %s38
      %s158 = sor.u32 %s156, %s157
      %p159 = scmp.eq.s32.totalorder %s158, 0
      %s161 = sadd.s32 %s160, 1
      %s162 = scalar_select %p159, %s160, %s161
      %p165 = pneg %p159
      %p166 = scmp.eq.s32.totalorder %s16, 7
      %p167 = por %p165, %p166
      %p168 = scmp.ne.s32.totalorder %s160, %s163
      %p169 = scmp.eq.s32.totalorder %s16, 0
      %p170 = por %p168, %p169
      %p171 = scmp.ne.s32.totalorder %s160, %s163
      %p172 = scmp.eq.s32.totalorder %s21, 7
      %p173 = por %p171, %p172
      %p174 = scmp.ne.s32.totalorder %s163, %s164
      %p175 = scmp.eq.s32.totalorder %s21, 0
      %p176 = por %p174, %p175
      %p177 = scmp.ne.s32.totalorder %s163, %s164
      %p178 = scmp.eq.s32.totalorder %s22, 7
      %p179 = por %p177, %p178
      %p181 = scmp.ne.s32.totalorder %s164, %s180
      %p182 = scmp.eq.s32.totalorder %s22, 0
      %p183 = por %p181, %p182
      %p184 = scmp.le.s32.totalorder 1, %s16
      %p185 = scmp.lt.s32.totalorder %s16, 9
      %p186 = pnand %p184, %p185
      %p187 = pneg %p186
      // Predicated region
      $region9: #{attention_module_forward.3} parent=5 // pred_check
        _
      $region10: #{attention_module_forward.3} parent=5 // pred_check_branch
        %189 = sbr.rel (%p186) target = $region12
      $region11: #{attention_module_forward.3} parent=5 // pred_region
        %s190 = ssub.s32 %s16, 1
        // Predicated region
        $region13: #{attention_module_forward.3} parent=11 // pred_check
          %p191 = pneg %p84
        $region14: #{attention_module_forward.3} parent=11 // pred_check_branch
          %193 = sbr.rel (%p191) target = $region16
        $region15: #{attention_module_forward.3} parent=11 // pred_region
          _
        $region16: #{attention_module_forward.3} parent=11 // pred_fallthru
          _
      $region12: #{attention_module_forward.3} parent=5 // pred_fallthru
        _
      %p194 = scmp.lt.s32.totalorder %s16, 8
      // Predicated region
      $region17: #{attention_module_forward.3} parent=5 // pred_check
        %p195 = pneg %p194
      $region18: #{attention_module_forward.3} parent=5 // pred_check_branch
        %197 = sbr.rel (%p195) target = $region20
      $region19: #{attention_module_forward.3} parent=5 // pred_region
        // Predicated region
        $region21: #{attention_module_forward.3} parent=19 // pred_check
          %p198 = pneg %p57
        $region22: #{attention_module_forward.3} parent=19 // pred_check_branch
          %200 = sbr.rel (%p198) target = $region24
        $region23: #{attention_module_forward.3} parent=19 // pred_region
          %s201 = sand.u32 %s47, 1
          %s202 = scalar_lea.sflag [#allocation7], %s201
          %s203 = sand.u32 %s47, 1
          %s204 = smul.addr %s203, 256
          %s205 = scalar_lea.vmem [#allocation6], %s204
          %s206 = smul.u32 32, %s24
          %208 = vsyncadd %s202, 0
          %s209 = smul.addr %s23, 64
          %s210 = sadd.s32 %s206, %s209
          %s211 = smul.addr %s210, 8
          %s212 = scalar_lea.hbm %s0, %s211
          %s213 = sshll.u32 %s212, 4
          %s214 = int_to_ptr.hbm [resolvable:$true] %s213
          %s215 = sshll.u32 %s205, 4
          %s216 = int_to_ptr.vmem [resolvable:$true] %s215
          %221 = dma.hbm_to_vmem [thread:$0]  %s214, 4096, %s216, %s202, 128, 128, 8
        $region24: #{attention_module_forward.3} parent=19 // pred_fallthru
          _
        // Predicated region
        $region25: #{attention_module_forward.3} parent=19 // pred_check
          %p222 = pneg %p110
        $region26: #{attention_module_forward.3} parent=19 // pred_check_branch
          %224 = sbr.rel (%p222) target = $region28
        $region27: #{attention_module_forward.3} parent=19 // pred_region
          %p225 = scmp.lt.s32.totalorder %s25, %s24
          %s226 = scalar_select %p225, %s25, %s24
          %s227 = smul.u32 32, %s226
          %p228 = scmp.lt.s32.totalorder %s23, 1
          %s229 = scalar_select %p228, %s23, 1
          %p230 = scmp.lt.s32.totalorder %s227, 63
          %s231 = scalar_select %p230, %s227, 63
          %s232 = smul.addr %s229, 64
          %s233 = sadd.s32 %s231, %s232
          %s234 = smul.addr %s233, 4
          %s235 = scalar_lea.vmem %s2, %s234
          %p236 = scmp.lt.s32.totalorder %s25, %s24
          %s237 = scalar_select %p236, %s25, %s24
          %s238 = smul.u32 32, %s237
        $region28: #{attention_module_forward.3} parent=19 // pred_fallthru
          _
        // Predicated region
        $region29: #{attention_module_forward.3} parent=19 // pred_check
          %p239 = pneg %p142
        $region30: #{attention_module_forward.3} parent=19 // pred_check_branch
          %241 = sbr.rel (%p239) target = $region32
        $region31: #{attention_module_forward.3} parent=19 // pred_region
          %p242 = scmp.lt.s32.totalorder %s25, %s24
          %s243 = scalar_select %p242, %s25, %s24
          %s244 = smul.u32 32, %s243
          %p245 = scmp.lt.s32.totalorder %s23, 1
          %s246 = scalar_select %p245, %s23, 1
          %p247 = scmp.lt.s32.totalorder %s244, 63
          %s248 = scalar_select %p247, %s244, 63
          %s249 = smul.addr %s246, 64
          %s250 = sadd.s32 %s248, %s249
          %s251 = smul.addr %s250, 4
          %s252 = scalar_lea.vmem %s3, %s251
          %p253 = scmp.lt.s32.totalorder %s25, %s24
          %s254 = scalar_select %p253, %s25, %s24
          %s255 = smul.u32 32, %s254
        $region32: #{attention_module_forward.3} parent=19 // pred_fallthru
          _
      $region20: #{attention_module_forward.3} parent=5 // pred_fallthru
        _
      %p256 = scmp.le.s32.totalorder 1, %s16
      %p257 = scmp.lt.s32.totalorder %s16, 9
      %p258 = pnand %p256, %p257
      %p259 = pneg %p258
      // Predicated region
      $region33: #{attention_module_forward.3} parent=5 // pred_check
        _
      $region34: #{attention_module_forward.3} parent=5 // pred_check_branch
        %261 = sbr.rel (%p258) target = $region36
      $region35: #{attention_module_forward.3} parent=5 // pred_region
        %s262 = ssub.s32 %s16, 1
        %s263 = sand.u32 %s50, 1
        %s264 = scalar_lea.sflag [#allocation7], %s263
        %s265 = sand.u32 %s50, 1
        %s266 = smul.addr %s265, 256
        %s267 = scalar_lea.vmem [#allocation6], %s266
        // Predicated region
        $region37: #{attention_module_forward.3} parent=35 // pred_check
          %p268 = pneg %p63
        $region38: #{attention_module_forward.3} parent=35 // pred_check_branch
          %270 = sbr.rel (%p268) target = $region40
        $region39: #{attention_module_forward.3} parent=35 // pred_region
          %272 = dma.done %s264, 4096
        $region40: #{attention_module_forward.3} parent=35 // pred_fallthru
          _
        %s273 = sand.u32 %s50, 1
        %s274 = scalar_lea.sflag [#allocation7], %s273
        %s275 = sand.u32 %s50, 1
        %s276 = smul.addr %s275, 256
        %s277 = scalar_lea.vmem [#allocation6], %s276
        %p278 = pneg %p63
        %p279 = pneg %p60
        %p280 = pneg %p84
        %p281 = pneg %p81
        %p282 = scmp.lt.s32.totalorder %s28, %s27
        %s283 = scalar_select %p282, %s28, %s27
        %s284 = smul.u32 32, %s283
        %p285 = scmp.lt.s32.totalorder %s26, 1
        %s286 = scalar_select %p285, %s26, 1
        %p287 = scmp.lt.s32.totalorder %s284, 63
        %s288 = scalar_select %p287, %s284, 63
        %s289 = smul.addr %s286, 64
        %s290 = sadd.s32 %s288, %s289
        %s291 = smul.addr %s290, 4
        %s292 = scalar_lea.vmem %s2, %s291
        %p293 = pneg %p116
        %p294 = pneg %p113
        %p295 = scmp.lt.s32.totalorder %s28, %s27
        %s296 = scalar_select %p295, %s28, %s27
        %s297 = smul.u32 32, %s296
        %p298 = scmp.lt.s32.totalorder %s26, 1
        %s299 = scalar_select %p298, %s26, 1
        %p300 = scmp.lt.s32.totalorder %s297, 63
        %s301 = scalar_select %p300, %s297, 63
        %s302 = smul.addr %s299, 64
        %s303 = sadd.s32 %s301, %s302
        %s304 = smul.addr %s303, 4
        %s305 = scalar_lea.vmem %s3, %s304
        %p306 = pneg %p148
        %p307 = pneg %p145
        %p308 = pneg %p176
        %p309 = pneg %p173
        %s310 = sand.u32 %s163, 1
        %s311 = scalar_lea.sflag [#allocation8], %s310
        %s312 = sand.u32 %s163, 1
        %s313 = smul.addr %s312, 256
        %s314 = scalar_lea.vmem [#allocation9], %s313
        %s315 = smul.u32 32, %s27
        %p316 = scmp.lt.s32.totalorder %s28, %s27
        %s317 = scalar_select %p316, %s28, %s27
        %s318 = smul.u32 32, %s317
        %p319 = scmp.lt.s32.totalorder %s26, 1
        %s320 = scalar_select %p319, %s26, 1
        %p321 = scmp.lt.s32.totalorder %s318, 63
        %s322 = scalar_select %p321, %s318, 63
        %s323 = smul.addr %s320, 64
        %s324 = sadd.s32 %s322, %s323
        %s325 = smul.addr %s324, 4
        %s326 = scalar_lea.vmem %s2, %s325
        %p327 = scmp.lt.s32.totalorder %s28, %s27
        %s328 = scalar_select %p327, %s28, %s27
        %s329 = smul.u32 32, %s328
        %p330 = scmp.lt.s32.totalorder %s28, %s27
        %s331 = scalar_select %p330, %s28, %s27
        %s332 = smul.u32 32, %s331
        %p333 = scmp.lt.s32.totalorder %s26, 1
        %s334 = scalar_select %p333, %s26, 1
        %p335 = scmp.lt.s32.totalorder %s332, 63
        %s336 = scalar_select %p335, %s332, 63
        %s337 = smul.addr %s334, 64
        %s338 = sadd.s32 %s336, %s337
        %s339 = smul.addr %s338, 4
        %s340 = scalar_lea.vmem %s3, %s339
        %p341 = scmp.lt.s32.totalorder %s28, %s27
        %s342 = scalar_select %p341, %s28, %s27
        %s343 = smul.u32 32, %s342
        %s344 = smul.u32 32, %s27
        %p345 = scmp.eq.s32.totalorder %s28, 0
        // Predicated region
        $region41: #{attention_module_forward.3} parent=35 // pred_check
          %p346 = pneg %p345
        $region42: #{attention_module_forward.3} parent=35 // pred_check_branch
          %348 = sbr.rel (%p346) target = $region44
        $region43: #{attention_module_forward.3} parent=35 // pred_region
          %v349 = vld [vmem:[%s267] sm:$0xff]
          %v350 = vld [vmem:[%s267 + $0x8] sm:$0xff]
          %v351 = vld [vmem:[%s267 + $0x10] sm:$0xff]
          %v352 = vld [vmem:[%s267 + $0x18] sm:$0xff]
          %v353 = vld [vmem:[%s267 + $0x20] sm:$0xff]
          %v354 = vld [vmem:[%s267 + $0x28] sm:$0xff]
          %v355 = vld [vmem:[%s267 + $0x30] sm:$0xff]
          %v356 = vld [vmem:[%s267 + $0x38] sm:$0xff]
          %v357 = vld [vmem:[%s267 + $0x40] sm:$0xff]
          %v358 = vld [vmem:[%s267 + $0x48] sm:$0xff]
          %v359 = vld [vmem:[%s267 + $0x50] sm:$0xff]
          %v360 = vld [vmem:[%s267 + $0x58] sm:$0xff]
          %v361 = vld [vmem:[%s267 + $0x60] sm:$0xff]
          %v362 = vld [vmem:[%s267 + $0x68] sm:$0xff]
          %v363 = vld [vmem:[%s267 + $0x70] sm:$0xff]
          %v364 = vld [vmem:[%s267 + $0x78] sm:$0xff]
          %v365 = vld [vmem:[%s267 + $0x80] sm:$0xff]
          %v366 = vld [vmem:[%s267 + $0x88] sm:$0xff]
          %v367 = vld [vmem:[%s267 + $0x90] sm:$0xff]
          %v368 = vld [vmem:[%s267 + $0x98] sm:$0xff]
          %v369 = vld [vmem:[%s267 + $0xa0] sm:$0xff]
          %v370 = vld [vmem:[%s267 + $0xa8] sm:$0xff]
          %v371 = vld [vmem:[%s267 + $0xb0] sm:$0xff]
          %v372 = vld [vmem:[%s267 + $0xb8] sm:$0xff]
          %v373 = vld [vmem:[%s267 + $0xc0] sm:$0xff]
          %v374 = vld [vmem:[%s267 + $0xc8] sm:$0xff]
          %v375 = vld [vmem:[%s267 + $0xd0] sm:$0xff]
          %v376 = vld [vmem:[%s267 + $0xd8] sm:$0xff]
          %v377 = vld [vmem:[%s267 + $0xe0] sm:$0xff]
          %v378 = vld [vmem:[%s267 + $0xe8] sm:$0xff]
          %v379 = vld [vmem:[%s267 + $0xf0] sm:$0xff]
          %v380 = vld [vmem:[%s267 + $0xf8] sm:$0xff]
          %v381 = vpack.c.bf16 %v350, %v349
          %v382 = vpack.c.bf16 %v352, %v351
          %v383 = vpack.c.bf16 %v354, %v353
          %v384 = vpack.c.bf16 %v356, %v355
          %v385 = vpack.c.bf16 %v358, %v357
          %v386 = vpack.c.bf16 %v360, %v359
          %v387 = vpack.c.bf16 %v362, %v361
          %v388 = vpack.c.bf16 %v364, %v363
          %v389 = vpack.c.bf16 %v366, %v365
          %v390 = vpack.c.bf16 %v368, %v367
          %v391 = vpack.c.bf16 %v370, %v369
          %v392 = vpack.c.bf16 %v372, %v371
          %v393 = vpack.c.bf16 %v374, %v373
          %v394 = vpack.c.bf16 %v376, %v375
          %v395 = vpack.c.bf16 %v378, %v377
          %v396 = vpack.c.bf16 %v380, %v379
          %v397 = vld [vmem:[%s1] sm:$0xf]
          %v398 = vld [vmem:[%s1 + $0x4] sm:$0xf]
          %v399 = vld [vmem:[%s1 + $0x8] sm:$0xf]
          %v400 = vld [vmem:[%s1 + $0xc] sm:$0xf]
          %v401 = vld [vmem:[%s1 + $0x10] sm:$0xf]
          %v402 = vld [vmem:[%s1 + $0x14] sm:$0xf]
          %v403 = vld [vmem:[%s1 + $0x18] sm:$0xf]
          %v404 = vld [vmem:[%s1 + $0x1c] sm:$0xf]
          %v405 = vld [vmem:[%s1 + $0x20] sm:$0xf]
          %v406 = vld [vmem:[%s1 + $0x24] sm:$0xf]
          %v407 = vld [vmem:[%s1 + $0x28] sm:$0xf]
          %v408 = vld [vmem:[%s1 + $0x2c] sm:$0xf]
          %v409 = vld [vmem:[%s1 + $0x30] sm:$0xf]
          %v410 = vld [vmem:[%s1 + $0x34] sm:$0xf]
          %v411 = vld [vmem:[%s1 + $0x38] sm:$0xf]
          %v412 = vld [vmem:[%s1 + $0x3c] sm:$0xf]
          %v429 = vunpack.c.l.b16 %v397
          %v430 = vunpack.c.l.b16 %v398
          %v431 = vunpack.c.l.b16 %v399
          %v432 = vunpack.c.l.b16 %v400
          %v433 = vunpack.c.l.b16 %v401
          %v434 = vunpack.c.l.b16 %v402
          %v435 = vunpack.c.l.b16 %v403
          %v436 = vunpack.c.l.b16 %v404
          %v437 = vunpack.c.l.b16 %v405
          %v438 = vunpack.c.l.b16 %v406
          %v439 = vunpack.c.l.b16 %v407
          %v440 = vunpack.c.l.b16 %v408
          %v441 = vunpack.c.l.b16 %v409
          %v442 = vunpack.c.l.b16 %v410
          %v443 = vunpack.c.l.b16 %v411
          %v444 = vunpack.c.l.b16 %v412
          %v445 = vpack.c.b16 %v430, %v429
          %v446 = vpack.c.b16 %v432, %v431
          %v447 = vpack.c.b16 %v434, %v433
          %v448 = vpack.c.b16 %v436, %v435
          %v449 = vpack.c.b16 %v438, %v437
          %v450 = vpack.c.b16 %v440, %v439
          %v451 = vpack.c.b16 %v442, %v441
          %v452 = vpack.c.b16 %v444, %v443
          %461 = vmatpush.bf16.msra.mxu0 %v452
          %462 = vmatpush.bf16.msra.mxu0 %v451
          %463 = vmatpush.bf16.msra.mxu0 %v450
          %464 = vmatpush.bf16.msra.mxu0 %v449
          %465 = vmatpush.bf16.msra.mxu0 %v448
          %466 = vmatpush.bf16.msra.mxu0 %v447
          %467 = vmatpush.bf16.msra.mxu0 %v446
          %468 = vmatpush.bf16.msra.mxu0 %v445
          %469 = vmatmul.bf16.gmra.mxu0 %v381
          %v470 = vpop.f32.mrf.mxu0
          %v471 = vadd.f32 0.0, %v470
          %v472 = vpop.f32.mrf.mxu0
          %v473 = vadd.f32 0.0, %v472
          %474 = vmatmul.bf16.gmra.mxu0 %v382
          %v475 = vpop.f32.mrf.mxu0
          %v476 = vadd.f32 0.0, %v475
          %v477 = vpop.f32.mrf.mxu0
          %v478 = vadd.f32 0.0, %v477
          %479 = vmatmul.bf16.gmra.mxu0 %v383
          %v480 = vpop.f32.mrf.mxu0
          %v481 = vadd.f32 0.0, %v480
          %v482 = vpop.f32.mrf.mxu0
          %v483 = vadd.f32 0.0, %v482
          %484 = vmatmul.bf16.gmra.mxu0 %v384
          %v485 = vpop.f32.mrf.mxu0
          %v486 = vadd.f32 0.0, %v485
          %v487 = vpop.f32.mrf.mxu0
          %v488 = vadd.f32 0.0, %v487
          %489 = vmatmul.bf16.gmra.mxu0 %v385
          %v490 = vpop.f32.mrf.mxu0
          %v491 = vadd.f32 0.0, %v490
          %v492 = vpop.f32.mrf.mxu0
          %v493 = vadd.f32 0.0, %v492
          %494 = vmatmul.bf16.gmra.mxu0 %v386
          %v495 = vpop.f32.mrf.mxu0
          %v496 = vadd.f32 0.0, %v495
          %v497 = vpop.f32.mrf.mxu0
          %v498 = vadd.f32 0.0, %v497
          %499 = vmatmul.bf16.gmra.mxu0 %v387
          %v500 = vpop.f32.mrf.mxu0
          %v501 = vadd.f32 0.0, %v500
          %v502 = vpop.f32.mrf.mxu0
          %v503 = vadd.f32 0.0, %v502
          %504 = vmatmul.bf16.gmra.mxu0 %v388
          %v505 = vpop.f32.mrf.mxu0
          %v506 = vadd.f32 0.0, %v505
          %v507 = vpop.f32.mrf.mxu0
          %v508 = vadd.f32 0.0, %v507
          %509 = vmatmul.bf16.gmra.mxu0 %v389
          %v510 = vpop.f32.mrf.mxu0
          %v511 = vadd.f32 0.0, %v510
          %v512 = vpop.f32.mrf.mxu0
          %v513 = vadd.f32 0.0, %v512
          %514 = vmatmul.bf16.gmra.mxu0 %v390
          %v515 = vpop.f32.mrf.mxu0
          %v516 = vadd.f32 0.0, %v515
          %v517 = vpop.f32.mrf.mxu0
          %v518 = vadd.f32 0.0, %v517
          %519 = vmatmul.bf16.gmra.mxu0 %v391
          %v520 = vpop.f32.mrf.mxu0
          %v521 = vadd.f32 0.0, %v520
          %v522 = vpop.f32.mrf.mxu0
          %v523 = vadd.f32 0.0, %v522
          %524 = vmatmul.bf16.gmra.mxu0 %v392
          %v525 = vpop.f32.mrf.mxu0
          %v526 = vadd.f32 0.0, %v525
          %v527 = vpop.f32.mrf.mxu0
          %v528 = vadd.f32 0.0, %v527
          %529 = vmatmul.bf16.gmra.mxu0 %v393
          %v530 = vpop.f32.mrf.mxu0
          %v531 = vadd.f32 0.0, %v530
          %v532 = vpop.f32.mrf.mxu0
          %v533 = vadd.f32 0.0, %v532
          %534 = vmatmul.bf16.gmra.mxu0 %v394
          %v535 = vpop.f32.mrf.mxu0
          %v536 = vadd.f32 0.0, %v535
          %v537 = vpop.f32.mrf.mxu0
          %v538 = vadd.f32 0.0, %v537
          %539 = vmatmul.bf16.gmra.mxu0 %v395
          %v540 = vpop.f32.mrf.mxu0
          %v541 = vadd.f32 0.0, %v540
          %v542 = vpop.f32.mrf.mxu0
          %v543 = vadd.f32 0.0, %v542
          %544 = vmatmul.bf16.gmra.mxu0 %v396
          %v545 = vpop.f32.mrf.mxu0
          %v546 = vadd.f32 0.0, %v545
          %v547 = vpop.f32.mrf.mxu0
          %v548 = vadd.f32 0.0, %v547
          %549 = vdwg.mxu0
          %v550 = vmul.f32 %v471, 0.088388346
          %v551 = vmul.f32 %v473, 0.088388346
          %v552 = vmul.f32 %v476, 0.088388346
          %v553 = vmul.f32 %v478, 0.088388346
          %v554 = vmul.f32 %v481, 0.088388346
          %v555 = vmul.f32 %v483, 0.088388346
          %v556 = vmul.f32 %v486, 0.088388346
          %v557 = vmul.f32 %v488, 0.088388346
          %v558 = vmul.f32 %v491, 0.088388346
          %v559 = vmul.f32 %v493, 0.088388346
          %v560 = vmul.f32 %v496, 0.088388346
          %v561 = vmul.f32 %v498, 0.088388346
          %v562 = vmul.f32 %v501, 0.088388346
          %v563 = vmul.f32 %v503, 0.088388346
          %v564 = vmul.f32 %v506, 0.088388346
          %v565 = vmul.f32 %v508, 0.088388346
          %v566 = vmul.f32 %v511, 0.088388346
          %v567 = vmul.f32 %v513, 0.088388346
          %v568 = vmul.f32 %v516, 0.088388346
          %v569 = vmul.f32 %v518, 0.088388346
          %v570 = vmul.f32 %v521, 0.088388346
          %v571 = vmul.f32 %v523, 0.088388346
          %v572 = vmul.f32 %v526, 0.088388346
          %v573 = vmul.f32 %v528, 0.088388346
          %v574 = vmul.f32 %v531, 0.088388346
          %v575 = vmul.f32 %v533, 0.088388346
          %v576 = vmul.f32 %v536, 0.088388346
          %v577 = vmul.f32 %v538, 0.088388346
          %v578 = vmul.f32 %v541, 0.088388346
          %v579 = vmul.f32 %v543, 0.088388346
          %v580 = vmul.f32 %v546, 0.088388346
          %v581 = vmul.f32 %v548, 0.088388346
          %v582 = vpack.c.bf16 %v550, %v550
          %v583 = vpack.c.bf16 %v551, %v551
          %v584 = vpack.c.bf16 %v552, %v552
          %v585 = vpack.c.bf16 %v553, %v553
          %v586 = vpack.c.bf16 %v554, %v554
          %v587 = vpack.c.bf16 %v555, %v555
          %v588 = vpack.c.bf16 %v556, %v556
          %v589 = vpack.c.bf16 %v557, %v557
          %v590 = vpack.c.bf16 %v558, %v558
          %v591 = vpack.c.bf16 %v559, %v559
          %v592 = vpack.c.bf16 %v560, %v560
          %v593 = vpack.c.bf16 %v561, %v561
          %v594 = vpack.c.bf16 %v562, %v562
          %v595 = vpack.c.bf16 %v563, %v563
          %v596 = vpack.c.bf16 %v564, %v564
          %v597 = vpack.c.bf16 %v565, %v565
          %v598 = vpack.c.bf16 %v566, %v566
          %v599 = vpack.c.bf16 %v567, %v567
          %v600 = vpack.c.bf16 %v568, %v568
          %v601 = vpack.c.bf16 %v569, %v569
          %v602 = vpack.c.bf16 %v570, %v570
          %v603 = vpack.c.bf16 %v571, %v571
          %v604 = vpack.c.bf16 %v572, %v572
          %v605 = vpack.c.bf16 %v573, %v573
          %v606 = vpack.c.bf16 %v574, %v574
          %v607 = vpack.c.bf16 %v575, %v575
          %v608 = vpack.c.bf16 %v576, %v576
          %v609 = vpack.c.bf16 %v577, %v577
          %v610 = vpack.c.bf16 %v578, %v578
          %v611 = vpack.c.bf16 %v579, %v579
          %v612 = vpack.c.bf16 %v580, %v580
          %v613 = vpack.c.bf16 %v581, %v581
          %614 = vst [vmem:[#allocation2] sm:$0xf] %v582
          %615 = vst [vmem:[#allocation2 + $0x4] sm:$0xf] %v583
          %616 = vst [vmem:[#allocation2 + $0x8] sm:$0xf] %v584
          %617 = vst [vmem:[#allocation2 + $0xc] sm:$0xf] %v585
          %618 = vst [vmem:[#allocation2 + $0x10] sm:$0xf] %v586
          %619 = vst [vmem:[#allocation2 + $0x14] sm:$0xf] %v587
          %620 = vst [vmem:[#allocation2 + $0x18] sm:$0xf] %v588
          %621 = vst [vmem:[#allocation2 + $0x1c] sm:$0xf] %v589
          %622 = vst [vmem:[#allocation2 + $0x20] sm:$0xf] %v590
          %623 = vst [vmem:[#allocation2 + $0x24] sm:$0xf] %v591
          %624 = vst [vmem:[#allocation2 + $0x28] sm:$0xf] %v592
          %625 = vst [vmem:[#allocation2 + $0x2c] sm:$0xf] %v593
          %626 = vst [vmem:[#allocation2 + $0x30] sm:$0xf] %v594
          %627 = vst [vmem:[#allocation2 + $0x34] sm:$0xf] %v595
          %628 = vst [vmem:[#allocation2 + $0x38] sm:$0xf] %v596
          %629 = vst [vmem:[#allocation2 + $0x3c] sm:$0xf] %v597
          %630 = vst [vmem:[#allocation2 + $0x40] sm:$0xf] %v598
          %631 = vst [vmem:[#allocation2 + $0x44] sm:$0xf] %v599
          %632 = vst [vmem:[#allocation2 + $0x48] sm:$0xf] %v600
          %633 = vst [vmem:[#allocation2 + $0x4c] sm:$0xf] %v601
          %634 = vst [vmem:[#allocation2 + $0x50] sm:$0xf] %v602
          %635 = vst [vmem:[#allocation2 + $0x54] sm:$0xf] %v603
          %636 = vst [vmem:[#allocation2 + $0x58] sm:$0xf] %v604
          %637 = vst [vmem:[#allocation2 + $0x5c] sm:$0xf] %v605
          %638 = vst [vmem:[#allocation2 + $0x60] sm:$0xf] %v606
          %639 = vst [vmem:[#allocation2 + $0x64] sm:$0xf] %v607
          %640 = vst [vmem:[#allocation2 + $0x68] sm:$0xf] %v608
          %641 = vst [vmem:[#allocation2 + $0x6c] sm:$0xf] %v609
          %642 = vst [vmem:[#allocation2 + $0x70] sm:$0xf] %v610
          %643 = vst [vmem:[#allocation2 + $0x74] sm:$0xf] %v611
          %644 = vst [vmem:[#allocation2 + $0x78] sm:$0xf] %v612
          %645 = vst [vmem:[#allocation2 + $0x7c] sm:$0xf] %v613
          %vm646 = vcmask 7168
          %647 = vst.msk [vmem:[#allocation3] sm:$0xff] %vm646, -inf
          %648 = vst.msk [vmem:[#allocation3 + $0x8] sm:$0xff] %vm646, -inf
          %649 = vst.msk [vmem:[#allocation3 + $0x10] sm:$0xff] %vm646, -inf
          %650 = vst.msk [vmem:[#allocation3 + $0x18] sm:$0xff] %vm646, -inf
          %651 = vst.msk [vmem:[#allocation3 + $0x20] sm:$0xff] %vm646, -inf
          %652 = vst.msk [vmem:[#allocation3 + $0x28] sm:$0xff] %vm646, -inf
          %653 = vst.msk [vmem:[#allocation3 + $0x30] sm:$0xff] %vm646, -inf
          %654 = vst.msk [vmem:[#allocation3 + $0x38] sm:$0xff] %vm646, -inf
          %655 = vst.msk [vmem:[#allocation3 + $0x40] sm:$0xff] %vm646, -inf
          %656 = vst.msk [vmem:[#allocation3 + $0x48] sm:$0xff] %vm646, -inf
          %657 = vst.msk [vmem:[#allocation3 + $0x50] sm:$0xff] %vm646, -inf
          %658 = vst.msk [vmem:[#allocation3 + $0x58] sm:$0xff] %vm646, -inf
          %659 = vst.msk [vmem:[#allocation3 + $0x60] sm:$0xff] %vm646, -inf
          %660 = vst.msk [vmem:[#allocation3 + $0x68] sm:$0xff] %vm646, -inf
          %661 = vst.msk [vmem:[#allocation3 + $0x70] sm:$0xff] %vm646, -inf
          %662 = vst.msk [vmem:[#allocation3 + $0x78] sm:$0xff] %vm646, -inf
          %663 = vst.msk [vmem:[#allocation3 + $0x80] sm:$0xff] %vm646, -inf
          %664 = vst.msk [vmem:[#allocation3 + $0x88] sm:$0xff] %vm646, -inf
          %665 = vst.msk [vmem:[#allocation3 + $0x90] sm:$0xff] %vm646, -inf
          %666 = vst.msk [vmem:[#allocation3 + $0x98] sm:$0xff] %vm646, -inf
          %667 = vst.msk [vmem:[#allocation3 + $0xa0] sm:$0xff] %vm646, -inf
          %668 = vst.msk [vmem:[#allocation3 + $0xa8] sm:$0xff] %vm646, -inf
          %669 = vst.msk [vmem:[#allocation3 + $0xb0] sm:$0xff] %vm646, -inf
          %670 = vst.msk [vmem:[#allocation3 + $0xb8] sm:$0xff] %vm646, -inf
          %671 = vst.msk [vmem:[#allocation3 + $0xc0] sm:$0xff] %vm646, -inf
          %672 = vst.msk [vmem:[#allocation3 + $0xc8] sm:$0xff] %vm646, -inf
          %673 = vst.msk [vmem:[#allocation3 + $0xd0] sm:$0xff] %vm646, -inf
          %674 = vst.msk [vmem:[#allocation3 + $0xd8] sm:$0xff] %vm646, -inf
          %675 = vst.msk [vmem:[#allocation3 + $0xe0] sm:$0xff] %vm646, -inf
          %676 = vst.msk [vmem:[#allocation3 + $0xe8] sm:$0xff] %vm646, -inf
          %677 = vst.msk [vmem:[#allocation3 + $0xf0] sm:$0xff] %vm646, -inf
          %678 = vst.msk [vmem:[#allocation3 + $0xf8] sm:$0xff] %vm646, -inf
          %679 = vst.msk [vmem:[#allocation4] sm:$0xff] %vm646, 0.0
          %680 = vst.msk [vmem:[#allocation4 + $0x8] sm:$0xff] %vm646, 0.0
          %681 = vst.msk [vmem:[#allocation4 + $0x10] sm:$0xff] %vm646, 0.0
          %682 = vst.msk [vmem:[#allocation4 + $0x18] sm:$0xff] %vm646, 0.0
          %683 = vst.msk [vmem:[#allocation4 + $0x20] sm:$0xff] %vm646, 0.0
          %684 = vst.msk [vmem:[#allocation4 + $0x28] sm:$0xff] %vm646, 0.0
          %685 = vst.msk [vmem:[#allocation4 + $0x30] sm:$0xff] %vm646, 0.0
          %686 = vst.msk [vmem:[#allocation4 + $0x38] sm:$0xff] %vm646, 0.0
          %687 = vst.msk [vmem:[#allocation4 + $0x40] sm:$0xff] %vm646, 0.0
          %688 = vst.msk [vmem:[#allocation4 + $0x48] sm:$0xff] %vm646, 0.0
          %689 = vst.msk [vmem:[#allocation4 + $0x50] sm:$0xff] %vm646, 0.0
          %690 = vst.msk [vmem:[#allocation4 + $0x58] sm:$0xff] %vm646, 0.0
          %691 = vst.msk [vmem:[#allocation4 + $0x60] sm:$0xff] %vm646, 0.0
          %692 = vst.msk [vmem:[#allocation4 + $0x68] sm:$0xff] %vm646, 0.0
          %693 = vst.msk [vmem:[#allocation4 + $0x70] sm:$0xff] %vm646, 0.0
          %694 = vst.msk [vmem:[#allocation4 + $0x78] sm:$0xff] %vm646, 0.0
          %695 = vst.msk [vmem:[#allocation4 + $0x80] sm:$0xff] %vm646, 0.0
          %696 = vst.msk [vmem:[#allocation4 + $0x88] sm:$0xff] %vm646, 0.0
          %697 = vst.msk [vmem:[#allocation4 + $0x90] sm:$0xff] %vm646, 0.0
          %698 = vst.msk [vmem:[#allocation4 + $0x98] sm:$0xff] %vm646, 0.0
          %699 = vst.msk [vmem:[#allocation4 + $0xa0] sm:$0xff] %vm646, 0.0
          %700 = vst.msk [vmem:[#allocation4 + $0xa8] sm:$0xff] %vm646, 0.0
          %701 = vst.msk [vmem:[#allocation4 + $0xb0] sm:$0xff] %vm646, 0.0
          %702 = vst.msk [vmem:[#allocation4 + $0xb8] sm:$0xff] %vm646, 0.0
          %703 = vst.msk [vmem:[#allocation4 + $0xc0] sm:$0xff] %vm646, 0.0
          %704 = vst.msk [vmem:[#allocation4 + $0xc8] sm:$0xff] %vm646, 0.0
          %705 = vst.msk [vmem:[#allocation4 + $0xd0] sm:$0xff] %vm646, 0.0
          %706 = vst.msk [vmem:[#allocation4 + $0xd8] sm:$0xff] %vm646, 0.0
          %707 = vst.msk [vmem:[#allocation4 + $0xe0] sm:$0xff] %vm646, 0.0
          %708 = vst.msk [vmem:[#allocation4 + $0xe8] sm:$0xff] %vm646, 0.0
          %709 = vst.msk [vmem:[#allocation4 + $0xf0] sm:$0xff] %vm646, 0.0
          %710 = vst.msk [vmem:[#allocation4 + $0xf8] sm:$0xff] %vm646, 0.0
          %711 = vst [vmem:[#allocation5] sm:$0xff] 0.0
          %712 = vst [vmem:[#allocation5 + $0x8] sm:$0xff] 0.0
          %713 = vst [vmem:[#allocation5 + $0x10] sm:$0xff] 0.0
          %714 = vst [vmem:[#allocation5 + $0x18] sm:$0xff] 0.0
          %715 = vst [vmem:[#allocation5 + $0x20] sm:$0xff] 0.0
          %716 = vst [vmem:[#allocation5 + $0x28] sm:$0xff] 0.0
          %717 = vst [vmem:[#allocation5 + $0x30] sm:$0xff] 0.0
          %718 = vst [vmem:[#allocation5 + $0x38] sm:$0xff] 0.0
          %719 = vst [vmem:[#allocation5 + $0x40] sm:$0xff] 0.0
          %720 = vst [vmem:[#allocation5 + $0x48] sm:$0xff] 0.0
          %721 = vst [vmem:[#allocation5 + $0x50] sm:$0xff] 0.0
          %722 = vst [vmem:[#allocation5 + $0x58] sm:$0xff] 0.0
          %723 = vst [vmem:[#allocation5 + $0x60] sm:$0xff] 0.0
          %724 = vst [vmem:[#allocation5 + $0x68] sm:$0xff] 0.0
          %725 = vst [vmem:[#allocation5 + $0x70] sm:$0xff] 0.0
          %726 = vst [vmem:[#allocation5 + $0x78] sm:$0xff] 0.0
          %727 = vst [vmem:[#allocation5 + $0x80] sm:$0xff] 0.0
          %728 = vst [vmem:[#allocation5 + $0x88] sm:$0xff] 0.0
          %729 = vst [vmem:[#allocation5 + $0x90] sm:$0xff] 0.0
          %730 = vst [vmem:[#allocation5 + $0x98] sm:$0xff] 0.0
          %731 = vst [vmem:[#allocation5 + $0xa0] sm:$0xff] 0.0
          %732 = vst [vmem:[#allocation5 + $0xa8] sm:$0xff] 0.0
          %733 = vst [vmem:[#allocation5 + $0xb0] sm:$0xff] 0.0
          %734 = vst [vmem:[#allocation5 + $0xb8] sm:$0xff] 0.0
          %735 = vst [vmem:[#allocation5 + $0xc0] sm:$0xff] 0.0
          %736 = vst [vmem:[#allocation5 + $0xc8] sm:$0xff] 0.0
          %737 = vst [vmem:[#allocation5 + $0xd0] sm:$0xff] 0.0
          %738 = vst [vmem:[#allocation5 + $0xd8] sm:$0xff] 0.0
          %739 = vst [vmem:[#allocation5 + $0xe0] sm:$0xff] 0.0
          %740 = vst [vmem:[#allocation5 + $0xe8] sm:$0xff] 0.0
          %741 = vst [vmem:[#allocation5 + $0xf0] sm:$0xff] 0.0
          %742 = vst [vmem:[#allocation5 + $0xf8] sm:$0xff] 0.0
        $region44: #{attention_module_forward.3} parent=35 // pred_fallthru
          _
        %p743 = scmp.lt.s32.totalorder %s28, %s27
        // Predicated region
        $region45: #{attention_module_forward.3} parent=35 // pred_check
          %p744 = pneg %p743
        $region46: #{attention_module_forward.3} parent=35 // pred_check_branch
          %746 = sbr.rel (%p744) target = $region48
        $region47: #{attention_module_forward.3} parent=35 // pred_region
          %v747 = vld [vmem:[%s326] sm:$0xf]
          %v748 = vld [vmem:[%s326 + $0x4] sm:$0xf]
          %v749 = vld [vmem:[%s326 + $0x8] sm:$0xf]
          %v750 = vld [vmem:[%s326 + $0xc] sm:$0xf]
          %v751 = vld [vmem:[%s326 + $0x10] sm:$0xf]
          %v752 = vld [vmem:[%s326 + $0x14] sm:$0xf]
          %v753 = vld [vmem:[%s326 + $0x18] sm:$0xf]
          %v754 = vld [vmem:[%s326 + $0x1c] sm:$0xf]
          %v755 = vld [vmem:[%s326 + $0x20] sm:$0xf]
          %v756 = vld [vmem:[%s326 + $0x24] sm:$0xf]
          %v757 = vld [vmem:[%s326 + $0x28] sm:$0xf]
          %v758 = vld [vmem:[%s326 + $0x2c] sm:$0xf]
          %v759 = vld [vmem:[%s326 + $0x30] sm:$0xf]
          %v760 = vld [vmem:[%s326 + $0x34] sm:$0xf]
          %v761 = vld [vmem:[%s326 + $0x38] sm:$0xf]
          %v762 = vld [vmem:[%s326 + $0x3c] sm:$0xf]
          %v763 = vld [vmem:[%s326 + $0x40] sm:$0xf]
          %v764 = vld [vmem:[%s326 + $0x44] sm:$0xf]
          %v765 = vld [vmem:[%s326 + $0x48] sm:$0xf]
          %v766 = vld [vmem:[%s326 + $0x4c] sm:$0xf]
          %v767 = vld [vmem:[%s326 + $0x50] sm:$0xf]
          %v768 = vld [vmem:[%s326 + $0x54] sm:$0xf]
          %v769 = vld [vmem:[%s326 + $0x58] sm:$0xf]
          %v770 = vld [vmem:[%s326 + $0x5c] sm:$0xf]
          %v771 = vld [vmem:[%s326 + $0x60] sm:$0xf]
          %v772 = vld [vmem:[%s326 + $0x64] sm:$0xf]
          %v773 = vld [vmem:[%s326 + $0x68] sm:$0xf]
          %v774 = vld [vmem:[%s326 + $0x6c] sm:$0xf]
          %v775 = vld [vmem:[%s326 + $0x70] sm:$0xf]
          %v776 = vld [vmem:[%s326 + $0x74] sm:$0xf]
          %v777 = vld [vmem:[%s326 + $0x78] sm:$0xf]
          %v778 = vld [vmem:[%s326 + $0x7c] sm:$0xf]
          %v779 = vld [vmem:[%s340] sm:$0xf]
          %v780 = vld [vmem:[%s340 + $0x4] sm:$0xf]
          %v781 = vld [vmem:[%s340 + $0x8] sm:$0xf]
          %v782 = vld [vmem:[%s340 + $0xc] sm:$0xf]
          %v783 = vld [vmem:[%s340 + $0x10] sm:$0xf]
          %v784 = vld [vmem:[%s340 + $0x14] sm:$0xf]
          %v785 = vld [vmem:[%s340 + $0x18] sm:$0xf]
          %v786 = vld [vmem:[%s340 + $0x1c] sm:$0xf]
          %v787 = vld [vmem:[%s340 + $0x20] sm:$0xf]
          %v788 = vld [vmem:[%s340 + $0x24] sm:$0xf]
          %v789 = vld [vmem:[%s340 + $0x28] sm:$0xf]
          %v790 = vld [vmem:[%s340 + $0x2c] sm:$0xf]
          %v791 = vld [vmem:[%s340 + $0x30] sm:$0xf]
          %v792 = vld [vmem:[%s340 + $0x34] sm:$0xf]
          %v793 = vld [vmem:[%s340 + $0x38] sm:$0xf]
          %v794 = vld [vmem:[%s340 + $0x3c] sm:$0xf]
          %v795 = vld [vmem:[%s340 + $0x40] sm:$0xf]
          %v796 = vld [vmem:[%s340 + $0x44] sm:$0xf]
          %v797 = vld [vmem:[%s340 + $0x48] sm:$0xf]
          %v798 = vld [vmem:[%s340 + $0x4c] sm:$0xf]
          %v799 = vld [vmem:[%s340 + $0x50] sm:$0xf]
          %v800 = vld [vmem:[%s340 + $0x54] sm:$0xf]
          %v801 = vld [vmem:[%s340 + $0x58] sm:$0xf]
          %v802 = vld [vmem:[%s340 + $0x5c] sm:$0xf]
          %v803 = vld [vmem:[%s340 + $0x60] sm:$0xf]
          %v804 = vld [vmem:[%s340 + $0x64] sm:$0xf]
          %v805 = vld [vmem:[%s340 + $0x68] sm:$0xf]
          %v806 = vld [vmem:[%s340 + $0x6c] sm:$0xf]
          %v807 = vld [vmem:[%s340 + $0x70] sm:$0xf]
          %v808 = vld [vmem:[%s340 + $0x74] sm:$0xf]
          %v809 = vld [vmem:[%s340 + $0x78] sm:$0xf]
          %v810 = vld [vmem:[%s340 + $0x7c] sm:$0xf]
          %v811 = vld [vmem:[#allocation2] sm:$0xf]
          %v812 = vld [vmem:[#allocation2 + $0x4] sm:$0xf]
          %v813 = vld [vmem:[#allocation2 + $0x8] sm:$0xf]
          %v814 = vld [vmem:[#allocation2 + $0xc] sm:$0xf]
          %v815 = vld [vmem:[#allocation2 + $0x10] sm:$0xf]
          %v816 = vld [vmem:[#allocation2 + $0x14] sm:$0xf]
          %v817 = vld [vmem:[#allocation2 + $0x18] sm:$0xf]
          %v818 = vld [vmem:[#allocation2 + $0x1c] sm:$0xf]
          %v819 = vld [vmem:[#allocation2 + $0x20] sm:$0xf]
          %v820 = vld [vmem:[#allocation2 + $0x24] sm:$0xf]
          %v821 = vld [vmem:[#allocation2 + $0x28] sm:$0xf]
          %v822 = vld [vmem:[#allocation2 + $0x2c] sm:$0xf]
          %v823 = vld [vmem:[#allocation2 + $0x30] sm:$0xf]
          %v824 = vld [vmem:[#allocation2 + $0x34] sm:$0xf]
          %v825 = vld [vmem:[#allocation2 + $0x38] sm:$0xf]
          %v826 = vld [vmem:[#allocation2 + $0x3c] sm:$0xf]
          %v827 = vld [vmem:[#allocation2 + $0x40] sm:$0xf]
          %v828 = vld [vmem:[#allocation2 + $0x44] sm:$0xf]
          %v829 = vld [vmem:[#allocation2 + $0x48] sm:$0xf]
          %v830 = vld [vmem:[#allocation2 + $0x4c] sm:$0xf]
          %v831 = vld [vmem:[#allocation2 + $0x50] sm:$0xf]
          %v832 = vld [vmem:[#allocation2 + $0x54] sm:$0xf]
          %v833 = vld [vmem:[#allocation2 + $0x58] sm:$0xf]
          %v834 = vld [vmem:[#allocation2 + $0x5c] sm:$0xf]
          %v835 = vld [vmem:[#allocation2 + $0x60] sm:$0xf]
          %v836 = vld [vmem:[#allocation2 + $0x64] sm:$0xf]
          %v837 = vld [vmem:[#allocation2 + $0x68] sm:$0xf]
          %v838 = vld [vmem:[#allocation2 + $0x6c] sm:$0xf]
          %v839 = vld [vmem:[#allocation2 + $0x70] sm:$0xf]
          %v840 = vld [vmem:[#allocation2 + $0x74] sm:$0xf]
          %v841 = vld [vmem:[#allocation2 + $0x78] sm:$0xf]
          %v842 = vld [vmem:[#allocation2 + $0x7c] sm:$0xf]
          %v875 = vunpack.c.l.b16 %v811
          %v876 = vunpack.c.l.b16 %v812
          %v877 = vunpack.c.l.b16 %v813
          %v878 = vunpack.c.l.b16 %v814
          %v879 = vunpack.c.l.b16 %v815
          %v880 = vunpack.c.l.b16 %v816
          %v881 = vunpack.c.l.b16 %v817
          %v882 = vunpack.c.l.b16 %v818
          %v883 = vunpack.c.l.b16 %v819
          %v884 = vunpack.c.l.b16 %v820
          %v885 = vunpack.c.l.b16 %v821
          %v886 = vunpack.c.l.b16 %v822
          %v887 = vunpack.c.l.b16 %v823
          %v888 = vunpack.c.l.b16 %v824
          %v889 = vunpack.c.l.b16 %v825
          %v890 = vunpack.c.l.b16 %v826
          %v891 = vunpack.c.l.b16 %v827
          %v892 = vunpack.c.l.b16 %v828
          %v893 = vunpack.c.l.b16 %v829
          %v894 = vunpack.c.l.b16 %v830
          %v895 = vunpack.c.l.b16 %v831
          %v896 = vunpack.c.l.b16 %v832
          %v897 = vunpack.c.l.b16 %v833
          %v898 = vunpack.c.l.b16 %v834
          %v899 = vunpack.c.l.b16 %v835
          %v900 = vunpack.c.l.b16 %v836
          %v901 = vunpack.c.l.b16 %v837
          %v902 = vunpack.c.l.b16 %v838
          %v903 = vunpack.c.l.b16 %v839
          %v904 = vunpack.c.l.b16 %v840
          %v905 = vunpack.c.l.b16 %v841
          %v906 = vunpack.c.l.b16 %v842
          %v907 = vpack.c.b16 %v876, %v875
          %v908 = vpack.c.b16 %v878, %v877
          %v909 = vpack.c.b16 %v880, %v879
          %v910 = vpack.c.b16 %v882, %v881
          %v911 = vpack.c.b16 %v884, %v883
          %v912 = vpack.c.b16 %v886, %v885
          %v913 = vpack.c.b16 %v888, %v887
          %v914 = vpack.c.b16 %v890, %v889
          %v915 = vpack.c.b16 %v892, %v891
          %v916 = vpack.c.b16 %v894, %v893
          %v917 = vpack.c.b16 %v896, %v895
          %v918 = vpack.c.b16 %v898, %v897
          %v919 = vpack.c.b16 %v900, %v899
          %v920 = vpack.c.b16 %v902, %v901
          %v921 = vpack.c.b16 %v904, %v903
          %v922 = vpack.c.b16 %v906, %v905
          %v971 = vunpack.c.l.b16 %v747
          %v972 = vunpack.c.l.b16 %v748
          %v973 = vunpack.c.l.b16 %v749
          %v974 = vunpack.c.l.b16 %v750
          %v975 = vunpack.c.l.b16 %v751
          %v976 = vunpack.c.l.b16 %v752
          %v977 = vunpack.c.l.b16 %v753
          %v978 = vunpack.c.l.b16 %v754
          %v979 = vunpack.c.l.b16 %v755
          %v980 = vunpack.c.l.b16 %v756
          %v981 = vunpack.c.l.b16 %v757
          %v982 = vunpack.c.l.b16 %v758
          %v983 = vunpack.c.l.b16 %v759
          %v984 = vunpack.c.l.b16 %v760
          %v985 = vunpack.c.l.b16 %v761
          %v986 = vunpack.c.l.b16 %v762
          %v987 = vunpack.c.l.b16 %v763
          %v988 = vunpack.c.l.b16 %v764
          %v989 = vunpack.c.l.b16 %v765
          %v990 = vunpack.c.l.b16 %v766
          %v991 = vunpack.c.l.b16 %v767
          %v992 = vunpack.c.l.b16 %v768
          %v993 = vunpack.c.l.b16 %v769
          %v994 = vunpack.c.l.b16 %v770
          %v995 = vunpack.c.l.b16 %v771
          %v996 = vunpack.c.l.b16 %v772
          %v997 = vunpack.c.l.b16 %v773
          %v998 = vunpack.c.l.b16 %v774
          %v999 = vunpack.c.l.b16 %v775
          %v1000 = vunpack.c.l.b16 %v776
          %v1001 = vunpack.c.l.b16 %v777
          %v1002 = vunpack.c.l.b16 %v778
          %v1003 = vpack.c.b16 %v972, %v971
          %v1004 = vpack.c.b16 %v974, %v973
          %v1005 = vpack.c.b16 %v976, %v975
          %v1006 = vpack.c.b16 %v978, %v977
          %v1007 = vpack.c.b16 %v980, %v979
          %v1008 = vpack.c.b16 %v982, %v981
          %v1009 = vpack.c.b16 %v984, %v983
          %v1010 = vpack.c.b16 %v986, %v985
          %v1011 = vpack.c.b16 %v988, %v987
          %v1012 = vpack.c.b16 %v990, %v989
          %v1013 = vpack.c.b16 %v992, %v991
          %v1014 = vpack.c.b16 %v994, %v993
          %v1015 = vpack.c.b16 %v996, %v995
          %v1016 = vpack.c.b16 %v998, %v997
          %v1017 = vpack.c.b16 %v1000, %v999
          %v1018 = vpack.c.b16 %v1002, %v1001
          %1035 = vmatpush.bf16.xpose.msra.mxu0 %v1010
          %1036 = vmatpush.bf16.xpose.msra.mxu0 %v1009
          %1037 = vmatpush.bf16.xpose.msra.mxu0 %v1008
          %1038 = vmatpush.bf16.xpose.msra.mxu0 %v1007
          %1039 = vmatpush.bf16.xpose.msra.mxu0 %v1006
          %1040 = vmatpush.bf16.xpose.msra.mxu0 %v1005
          %1041 = vmatpush.bf16.xpose.msra.mxu0 %v1004
          %1042 = vmatpush.bf16.xpose.msra.mxu0 %v1003
          %1043 = vmatmul.bf16.gmra.mxu0 %v907
          %v1044 = vpop.f32.mrf.mxu0
          %v1045 = vadd.f32 0.0, %v1044
          %v1046 = vpop.f32.mrf.mxu0
          %v1047 = vadd.f32 0.0, %v1046
          %1048 = vmatmul.bf16.gmra.mxu0 %v908
          %v1049 = vpop.f32.mrf.mxu0
          %v1050 = vadd.f32 0.0, %v1049
          %v1051 = vpop.f32.mrf.mxu0
          %v1052 = vadd.f32 0.0, %v1051
          %1053 = vmatmul.bf16.gmra.mxu0 %v909
          %v1054 = vpop.f32.mrf.mxu0
          %v1055 = vadd.f32 0.0, %v1054
          %v1056 = vpop.f32.mrf.mxu0
          %v1057 = vadd.f32 0.0, %v1056
          %1058 = vmatmul.bf16.gmra.mxu0 %v910
          %v1059 = vpop.f32.mrf.mxu0
          %v1060 = vadd.f32 0.0, %v1059
          %v1061 = vpop.f32.mrf.mxu0
          %v1062 = vadd.f32 0.0, %v1061
          %1063 = vmatmul.bf16.gmra.mxu0 %v911
          %v1064 = vpop.f32.mrf.mxu0
          %v1065 = vadd.f32 0.0, %v1064
          %v1066 = vpop.f32.mrf.mxu0
          %v1067 = vadd.f32 0.0, %v1066
          %1068 = vmatmul.bf16.gmra.mxu0 %v912
          %v1069 = vpop.f32.mrf.mxu0
          %v1070 = vadd.f32 0.0, %v1069
          %v1071 = vpop.f32.mrf.mxu0
          %v1072 = vadd.f32 0.0, %v1071
          %1073 = vmatmul.bf16.gmra.mxu0 %v913
          %v1074 = vpop.f32.mrf.mxu0
          %v1075 = vadd.f32 0.0, %v1074
          %v1076 = vpop.f32.mrf.mxu0
          %v1077 = vadd.f32 0.0, %v1076
          %1078 = vmatmul.bf16.gmra.mxu0 %v914
          %v1079 = vpop.f32.mrf.mxu0
          %v1080 = vadd.f32 0.0, %v1079
          %v1081 = vpop.f32.mrf.mxu0
          %v1082 = vadd.f32 0.0, %v1081
          %1083 = vmatmul.bf16.gmra.mxu0 %v915
          %v1084 = vpop.f32.mrf.mxu0
          %v1085 = vadd.f32 0.0, %v1084
          %v1086 = vpop.f32.mrf.mxu0
          %v1087 = vadd.f32 0.0, %v1086
          %1088 = vmatmul.bf16.gmra.mxu0 %v916
          %v1089 = vpop.f32.mrf.mxu0
          %v1090 = vadd.f32 0.0, %v1089
          %v1091 = vpop.f32.mrf.mxu0
          %v1092 = vadd.f32 0.0, %v1091
          %1093 = vmatmul.bf16.gmra.mxu0 %v917
          %v1094 = vpop.f32.mrf.mxu0
          %v1095 = vadd.f32 0.0, %v1094
          %v1096 = vpop.f32.mrf.mxu0
          %v1097 = vadd.f32 0.0, %v1096
          %1098 = vmatmul.bf16.gmra.mxu0 %v918
          %v1099 = vpop.f32.mrf.mxu0
          %v1100 = vadd.f32 0.0, %v1099
          %v1101 = vpop.f32.mrf.mxu0
          %v1102 = vadd.f32 0.0, %v1101
          %1103 = vmatmul.bf16.gmra.mxu0 %v919
          %v1104 = vpop.f32.mrf.mxu0
          %v1105 = vadd.f32 0.0, %v1104
          %v1106 = vpop.f32.mrf.mxu0
          %v1107 = vadd.f32 0.0, %v1106
          %1108 = vmatmul.bf16.gmra.mxu0 %v920
          %v1109 = vpop.f32.mrf.mxu0
          %v1110 = vadd.f32 0.0, %v1109
          %v1111 = vpop.f32.mrf.mxu0
          %v1112 = vadd.f32 0.0, %v1111
          %1113 = vmatmul.bf16.gmra.mxu0 %v921
          %v1114 = vpop.f32.mrf.mxu0
          %v1115 = vadd.f32 0.0, %v1114
          %v1116 = vpop.f32.mrf.mxu0
          %v1117 = vadd.f32 0.0, %v1116
          %1118 = vmatmul.bf16.gmra.mxu0 %v922
          %v1119 = vpop.f32.mrf.mxu0
          %v1120 = vadd.f32 0.0, %v1119
          %v1121 = vpop.f32.mrf.mxu0
          %v1122 = vadd.f32 0.0, %v1121
          %1123 = vdwg.mxu0
          %1124 = vmatpush.bf16.xpose.msra.mxu0 %v1018
          %1125 = vmatpush.bf16.xpose.msra.mxu0 %v1017
          %1126 = vmatpush.bf16.xpose.msra.mxu0 %v1016
          %1127 = vmatpush.bf16.xpose.msra.mxu0 %v1015
          %1128 = vmatpush.bf16.xpose.msra.mxu0 %v1014
          %1129 = vmatpush.bf16.xpose.msra.mxu0 %v1013
          %1130 = vmatpush.bf16.xpose.msra.mxu0 %v1012
          %1131 = vmatpush.bf16.xpose.msra.mxu0 %v1011
          %1132 = vmatmul.bf16.gmra.mxu0 %v907
          %v1133 = vpop.f32.mrf.mxu0
          %v1134 = vadd.f32 0.0, %v1133
          %v1135 = vpop.f32.mrf.mxu0
          %v1136 = vadd.f32 0.0, %v1135
          %1137 = vmatmul.bf16.gmra.mxu0 %v908
          %v1138 = vpop.f32.mrf.mxu0
          %v1139 = vadd.f32 0.0, %v1138
          %v1140 = vpop.f32.mrf.mxu0
          %v1141 = vadd.f32 0.0, %v1140
          %1142 = vmatmul.bf16.gmra.mxu0 %v909
          %v1143 = vpop.f32.mrf.mxu0
          %v1144 = vadd.f32 0.0, %v1143
          %v1145 = vpop.f32.mrf.mxu0
          %v1146 = vadd.f32 0.0, %v1145
          %1147 = vmatmul.bf16.gmra.mxu0 %v910
          %v1148 = vpop.f32.mrf.mxu0
          %v1149 = vadd.f32 0.0, %v1148
          %v1150 = vpop.f32.mrf.mxu0
          %v1151 = vadd.f32 0.0, %v1150
          %1152 = vmatmul.bf16.gmra.mxu0 %v911
          %v1153 = vpop.f32.mrf.mxu0
          %v1154 = vadd.f32 0.0, %v1153
          %v1155 = vpop.f32.mrf.mxu0
          %v1156 = vadd.f32 0.0, %v1155
          %1157 = vmatmul.bf16.gmra.mxu0 %v912
          %v1158 = vpop.f32.mrf.mxu0
          %v1159 = vadd.f32 0.0, %v1158
          %v1160 = vpop.f32.mrf.mxu0
          %v1161 = vadd.f32 0.0, %v1160
          %1162 = vmatmul.bf16.gmra.mxu0 %v913
          %v1163 = vpop.f32.mrf.mxu0
          %v1164 = vadd.f32 0.0, %v1163
          %v1165 = vpop.f32.mrf.mxu0
          %v1166 = vadd.f32 0.0, %v1165
          %1167 = vmatmul.bf16.gmra.mxu0 %v914
          %v1168 = vpop.f32.mrf.mxu0
          %v1169 = vadd.f32 0.0, %v1168
          %v1170 = vpop.f32.mrf.mxu0
          %v1171 = vadd.f32 0.0, %v1170
          %1172 = vmatmul.bf16.gmra.mxu0 %v915
          %v1173 = vpop.f32.mrf.mxu0
          %v1174 = vadd.f32 0.0, %v1173
          %v1175 = vpop.f32.mrf.mxu0
          %v1176 = vadd.f32 0.0, %v1175
          %1177 = vmatmul.bf16.gmra.mxu0 %v916
          %v1178 = vpop.f32.mrf.mxu0
          %v1179 = vadd.f32 0.0, %v1178
          %v1180 = vpop.f32.mrf.mxu0
          %v1181 = vadd.f32 0.0, %v1180
          %1182 = vmatmul.bf16.gmra.mxu0 %v917
          %v1183 = vpop.f32.mrf.mxu0
          %v1184 = vadd.f32 0.0, %v1183
          %v1185 = vpop.f32.mrf.mxu0
          %v1186 = vadd.f32 0.0, %v1185
          %1187 = vmatmul.bf16.gmra.mxu0 %v918
          %v1188 = vpop.f32.mrf.mxu0
          %v1189 = vadd.f32 0.0, %v1188
          %v1190 = vpop.f32.mrf.mxu0
          %v1191 = vadd.f32 0.0, %v1190
          %1192 = vmatmul.bf16.gmra.mxu0 %v919
          %v1193 = vpop.f32.mrf.mxu0
          %v1194 = vadd.f32 0.0, %v1193
          %v1195 = vpop.f32.mrf.mxu0
          %v1196 = vadd.f32 0.0, %v1195
          %1197 = vmatmul.bf16.gmra.mxu0 %v920
          %v1198 = vpop.f32.mrf.mxu0
          %v1199 = vadd.f32 0.0, %v1198
          %v1200 = vpop.f32.mrf.mxu0
          %v1201 = vadd.f32 0.0, %v1200
          %1202 = vmatmul.bf16.gmra.mxu0 %v921
          %v1203 = vpop.f32.mrf.mxu0
          %v1204 = vadd.f32 0.0, %v1203
          %v1205 = vpop.f32.mrf.mxu0
          %v1206 = vadd.f32 0.0, %v1205
          %1207 = vmatmul.bf16.gmra.mxu0 %v922
          %v1208 = vpop.f32.mrf.mxu0
          %v1209 = vadd.f32 0.0, %v1208
          %v1210 = vpop.f32.mrf.mxu0
          %v1211 = vadd.f32 0.0, %v1210
          %1212 = vdwg.mxu0
          %v1213 = vld [vmem:[#allocation3] sm:$0xff]
          %v1214 = vld [vmem:[#allocation3 + $0x8] sm:$0xff]
          %v1215 = vld [vmem:[#allocation3 + $0x10] sm:$0xff]
          %v1216 = vld [vmem:[#allocation3 + $0x18] sm:$0xff]
          %v1217 = vld [vmem:[#allocation3 + $0x20] sm:$0xff]
          %v1218 = vld [vmem:[#allocation3 + $0x28] sm:$0xff]
          %v1219 = vld [vmem:[#allocation3 + $0x30] sm:$0xff]
          %v1220 = vld [vmem:[#allocation3 + $0x38] sm:$0xff]
          %v1221 = vld [vmem:[#allocation3 + $0x40] sm:$0xff]
          %v1222 = vld [vmem:[#allocation3 + $0x48] sm:$0xff]
          %v1223 = vld [vmem:[#allocation3 + $0x50] sm:$0xff]
          %v1224 = vld [vmem:[#allocation3 + $0x58] sm:$0xff]
          %v1225 = vld [vmem:[#allocation3 + $0x60] sm:$0xff]
          %v1226 = vld [vmem:[#allocation3 + $0x68] sm:$0xff]
          %v1227 = vld [vmem:[#allocation3 + $0x70] sm:$0xff]
          %v1228 = vld [vmem:[#allocation3 + $0x78] sm:$0xff]
          %v1229 = vld [vmem:[#allocation3 + $0x80] sm:$0xff]
          %v1230 = vld [vmem:[#allocation3 + $0x88] sm:$0xff]
          %v1231 = vld [vmem:[#allocation3 + $0x90] sm:$0xff]
          %v1232 = vld [vmem:[#allocation3 + $0x98] sm:$0xff]
          %v1233 = vld [vmem:[#allocation3 + $0xa0] sm:$0xff]
          %v1234 = vld [vmem:[#allocation3 + $0xa8] sm:$0xff]
          %v1235 = vld [vmem:[#allocation3 + $0xb0] sm:$0xff]
          %v1236 = vld [vmem:[#allocation3 + $0xb8] sm:$0xff]
          %v1237 = vld [vmem:[#allocation3 + $0xc0] sm:$0xff]
          %v1238 = vld [vmem:[#allocation3 + $0xc8] sm:$0xff]
          %v1239 = vld [vmem:[#allocation3 + $0xd0] sm:$0xff]
          %v1240 = vld [vmem:[#allocation3 + $0xd8] sm:$0xff]
          %v1241 = vld [vmem:[#allocation3 + $0xe0] sm:$0xff]
          %v1242 = vld [vmem:[#allocation3 + $0xe8] sm:$0xff]
          %v1243 = vld [vmem:[#allocation3 + $0xf0] sm:$0xff]
          %v1244 = vld [vmem:[#allocation3 + $0xf8] sm:$0xff]
          %v1245 = vmax.f32 %v1045, %v1134
          %1246 = vmax.xlane.f32.xlu0 %v1245
          %v1247 = vpop.xlane.xlu0 %1246
          %v1248 = vmax.f32 %v1047, %v1136
          %1249 = vmax.xlane.f32.xlu0 %v1248
          %v1250 = vpop.xlane.xlu0 %1249
          %v1251 = vmax.f32 %v1050, %v1139
          %1252 = vmax.xlane.f32.xlu0 %v1251
          %v1253 = vpop.xlane.xlu0 %1252
          %v1254 = vmax.f32 %v1052, %v1141
          %1255 = vmax.xlane.f32.xlu0 %v1254
          %v1256 = vpop.xlane.xlu0 %1255
          %v1257 = vmax.f32 %v1055, %v1144
          %1258 = vmax.xlane.f32.xlu0 %v1257
          %v1259 = vpop.xlane.xlu0 %1258
          %v1260 = vmax.f32 %v1057, %v1146
          %1261 = vmax.xlane.f32.xlu0 %v1260
          %v1262 = vpop.xlane.xlu0 %1261
          %v1263 = vmax.f32 %v1060, %v1149
          %1264 = vmax.xlane.f32.xlu0 %v1263
          %v1265 = vpop.xlane.xlu0 %1264
          %v1266 = vmax.f32 %v1062, %v1151
          %1267 = vmax.xlane.f32.xlu0 %v1266
          %v1268 = vpop.xlane.xlu0 %1267
          %v1269 = vmax.f32 %v1065, %v1154
          %1270 = vmax.xlane.f32.xlu0 %v1269
          %v1271 = vpop.xlane.xlu0 %1270
          %v1272 = vmax.f32 %v1067, %v1156
          %1273 = vmax.xlane.f32.xlu0 %v1272
          %v1274 = vpop.xlane.xlu0 %1273
          %v1275 = vmax.f32 %v1070, %v1159
          %1276 = vmax.xlane.f32.xlu0 %v1275
          %v1277 = vpop.xlane.xlu0 %1276
          %v1278 = vmax.f32 %v1072, %v1161
          %1279 = vmax.xlane.f32.xlu0 %v1278
          %v1280 = vpop.xlane.xlu0 %1279
          %v1281 = vmax.f32 %v1075, %v1164
          %1282 = vmax.xlane.f32.xlu0 %v1281
          %v1283 = vpop.xlane.xlu0 %1282
          %v1284 = vmax.f32 %v1077, %v1166
          %1285 = vmax.xlane.f32.xlu0 %v1284
          %v1286 = vpop.xlane.xlu0 %1285
          %v1287 = vmax.f32 %v1080, %v1169
          %1288 = vmax.xlane.f32.xlu0 %v1287
          %v1289 = vpop.xlane.xlu0 %1288
          %v1290 = vmax.f32 %v1082, %v1171
          %1291 = vmax.xlane.f32.xlu0 %v1290
          %v1292 = vpop.xlane.xlu0 %1291
          %v1293 = vmax.f32 %v1085, %v1174
          %1294 = vmax.xlane.f32.xlu0 %v1293
          %v1295 = vpop.xlane.xlu0 %1294
          %v1296 = vmax.f32 %v1087, %v1176
          %1297 = vmax.xlane.f32.xlu0 %v1296
          %v1298 = vpop.xlane.xlu0 %1297
          %v1299 = vmax.f32 %v1090, %v1179
          %1300 = vmax.xlane.f32.xlu0 %v1299
          %v1301 = vpop.xlane.xlu0 %1300
          %v1302 = vmax.f32 %v1092, %v1181
          %1303 = vmax.xlane.f32.xlu0 %v1302
          %v1304 = vpop.xlane.xlu0 %1303
          %v1305 = vmax.f32 %v1095, %v1184
          %1306 = vmax.xlane.f32.xlu0 %v1305
          %v1307 = vpop.xlane.xlu0 %1306
          %v1308 = vmax.f32 %v1097, %v1186
          %1309 = vmax.xlane.f32.xlu0 %v1308
          %v1310 = vpop.xlane.xlu0 %1309
          %v1311 = vmax.f32 %v1100, %v1189
          %1312 = vmax.xlane.f32.xlu0 %v1311
          %v1313 = vpop.xlane.xlu0 %1312
          %v1314 = vmax.f32 %v1102, %v1191
          %1315 = vmax.xlane.f32.xlu0 %v1314
          %v1316 = vpop.xlane.xlu0 %1315
          %v1317 = vmax.f32 %v1105, %v1194
          %1318 = vmax.xlane.f32.xlu0 %v1317
          %v1319 = vpop.xlane.xlu0 %1318
          %v1320 = vmax.f32 %v1107, %v1196
          %1321 = vmax.xlane.f32.xlu0 %v1320
          %v1322 = vpop.xlane.xlu0 %1321
          %v1323 = vmax.f32 %v1110, %v1199
          %1324 = vmax.xlane.f32.xlu0 %v1323
          %v1325 = vpop.xlane.xlu0 %1324
          %v1326 = vmax.f32 %v1112, %v1201
          %1327 = vmax.xlane.f32.xlu0 %v1326
          %v1328 = vpop.xlane.xlu0 %1327
          %v1329 = vmax.f32 %v1115, %v1204
          %1330 = vmax.xlane.f32.xlu0 %v1329
          %v1331 = vpop.xlane.xlu0 %1330
          %v1332 = vmax.f32 %v1117, %v1206
          %1333 = vmax.xlane.f32.xlu0 %v1332
          %v1334 = vpop.xlane.xlu0 %1333
          %v1335 = vmax.f32 %v1120, %v1209
          %1336 = vmax.xlane.f32.xlu0 %v1335
          %v1337 = vpop.xlane.xlu0 %1336
          %v1338 = vmax.f32 %v1122, %v1211
          %1339 = vmax.xlane.f32.xlu0 %v1338
          %v1340 = vpop.xlane.xlu0 %1339
          %v1341 = vmax.f32 %v1213, %v1247
          %v1342 = vmax.f32 %v1214, %v1250
          %v1343 = vmax.f32 %v1215, %v1253
          %v1344 = vmax.f32 %v1216, %v1256
          %v1345 = vmax.f32 %v1217, %v1259
          %v1346 = vmax.f32 %v1218, %v1262
          %v1347 = vmax.f32 %v1219, %v1265
          %v1348 = vmax.f32 %v1220, %v1268
          %v1349 = vmax.f32 %v1221, %v1271
          %v1350 = vmax.f32 %v1222, %v1274
          %v1351 = vmax.f32 %v1223, %v1277
          %v1352 = vmax.f32 %v1224, %v1280
          %v1353 = vmax.f32 %v1225, %v1283
          %v1354 = vmax.f32 %v1226, %v1286
          %v1355 = vmax.f32 %v1227, %v1289
          %v1356 = vmax.f32 %v1228, %v1292
          %v1357 = vmax.f32 %v1229, %v1295
          %v1358 = vmax.f32 %v1230, %v1298
          %v1359 = vmax.f32 %v1231, %v1301
          %v1360 = vmax.f32 %v1232, %v1304
          %v1361 = vmax.f32 %v1233, %v1307
          %v1362 = vmax.f32 %v1234, %v1310
          %v1363 = vmax.f32 %v1235, %v1313
          %v1364 = vmax.f32 %v1236, %v1316
          %v1365 = vmax.f32 %v1237, %v1319
          %v1366 = vmax.f32 %v1238, %v1322
          %v1367 = vmax.f32 %v1239, %v1325
          %v1368 = vmax.f32 %v1240, %v1328
          %v1369 = vmax.f32 %v1241, %v1331
          %v1370 = vmax.f32 %v1242, %v1334
          %v1371 = vmax.f32 %v1243, %v1337
          %v1372 = vmax.f32 %v1244, %v1340
          %v1373 = vsub.f32 %v1213, %v1341
          %v1374 = vsub.f32 %v1214, %v1342
          %v1375 = vsub.f32 %v1215, %v1343
          %v1376 = vsub.f32 %v1216, %v1344
          %v1377 = vsub.f32 %v1217, %v1345
          %v1378 = vsub.f32 %v1218, %v1346
          %v1379 = vsub.f32 %v1219, %v1347
          %v1380 = vsub.f32 %v1220, %v1348
          %v1381 = vsub.f32 %v1221, %v1349
          %v1382 = vsub.f32 %v1222, %v1350
          %v1383 = vsub.f32 %v1223, %v1351
          %v1384 = vsub.f32 %v1224, %v1352
          %v1385 = vsub.f32 %v1225, %v1353
          %v1386 = vsub.f32 %v1226, %v1354
          %v1387 = vsub.f32 %v1227, %v1355
          %v1388 = vsub.f32 %v1228, %v1356
          %v1389 = vsub.f32 %v1229, %v1357
          %v1390 = vsub.f32 %v1230, %v1358
          %v1391 = vsub.f32 %v1231, %v1359
          %v1392 = vsub.f32 %v1232, %v1360
          %v1393 = vsub.f32 %v1233, %v1361
          %v1394 = vsub.f32 %v1234, %v1362
          %v1395 = vsub.f32 %v1235, %v1363
          %v1396 = vsub.f32 %v1236, %v1364
          %v1397 = vsub.f32 %v1237, %v1365
          %v1398 = vsub.f32 %v1238, %v1366
          %v1399 = vsub.f32 %v1239, %v1367
          %v1400 = vsub.f32 %v1240, %v1368
          %v1401 = vsub.f32 %v1241, %v1369
          %v1402 = vsub.f32 %v1242, %v1370
          %v1403 = vsub.f32 %v1243, %v1371
          %v1404 = vsub.f32 %v1244, %v1372
          %v1405 = vmul.f32 %v1373, 1.442695
          %v1406 = vpow.pop %v1405
          %v1407 = vmul.f32 %v1374, 1.442695
          %v1408 = vpow.pop %v1407
          %v1409 = vmul.f32 %v1375, 1.442695
          %v1410 = vpow.pop %v1409
          %v1411 = vmul.f32 %v1376, 1.442695
          %v1412 = vpow.pop %v1411
          %v1413 = vmul.f32 %v1377, 1.442695
          %v1414 = vpow.pop %v1413
          %v1415 = vmul.f32 %v1378, 1.442695
          %v1416 = vpow.pop %v1415
          %v1417 = vmul.f32 %v1379, 1.442695
          %v1418 = vpow.pop %v1417
          %v1419 = vmul.f32 %v1380, 1.442695
          %v1420 = vpow.pop %v1419
          %v1421 = vmul.f32 %v1381, 1.442695
          %v1422 = vpow.pop %v1421
          %v1423 = vmul.f32 %v1382, 1.442695
          %v1424 = vpow.pop %v1423
          %v1425 = vmul.f32 %v1383, 1.442695
          %v1426 = vpow.pop %v1425
          %v1427 = vmul.f32 %v1384, 1.442695
          %v1428 = vpow.pop %v1427
          %v1429 = vmul.f32 %v1385, 1.442695
          %v1430 = vpow.pop %v1429
          %v1431 = vmul.f32 %v1386, 1.442695
          %v1432 = vpow.pop %v1431
          %v1433 = vmul.f32 %v1387, 1.442695
          %v1434 = vpow.pop %v1433
          %v1435 = vmul.f32 %v1388, 1.442695
          %v1436 = vpow.pop %v1435
          %v1437 = vmul.f32 %v1389, 1.442695
          %v1438 = vpow.pop %v1437
          %v1439 = vmul.f32 %v1390, 1.442695
          %v1440 = vpow.pop %v1439
          %v1441 = vmul.f32 %v1391, 1.442695
          %v1442 = vpow.pop %v1441
          %v1443 = vmul.f32 %v1392, 1.442695
          %v1444 = vpow.pop %v1443
          %v1445 = vmul.f32 %v1393, 1.442695
          %v1446 = vpow.pop %v1445
          %v1447 = vmul.f32 %v1394, 1.442695
          %v1448 = vpow.pop %v1447
          %v1449 = vmul.f32 %v1395, 1.442695
          %v1450 = vpow.pop %v1449
          %v1451 = vmul.f32 %v1396, 1.442695
          %v1452 = vpow.pop %v1451
          %v1453 = vmul.f32 %v1397, 1.442695
          %v1454 = vpow.pop %v1453
          %v1455 = vmul.f32 %v1398, 1.442695
          %v1456 = vpow.pop %v1455
          %v1457 = vmul.f32 %v1399, 1.442695
          %v1458 = vpow.pop %v1457
          %v1459 = vmul.f32 %v1400, 1.442695
          %v1460 = vpow.pop %v1459
          %v1461 = vmul.f32 %v1401, 1.442695
          %v1462 = vpow.pop %v1461
          %v1463 = vmul.f32 %v1402, 1.442695
          %v1464 = vpow.pop %v1463
          %v1465 = vmul.f32 %v1403, 1.442695
          %v1466 = vpow.pop %v1465
          %v1467 = vmul.f32 %v1404, 1.442695
          %v1468 = vpow.pop %v1467
          %1470 = vset.pattern.permute.xlu0 0
          %1471 = vperm.xlu0 %1470, %v1341
          %v1472 = vpop.permute.xlu0 %1471
          %1475 = vset.pattern.permute.xlu0 0
          %1476 = vperm.xlu0 %1475, %v1342
          %v1477 = vpop.permute.xlu0 %1476
          %1480 = vset.pattern.permute.xlu0 0
          %1481 = vperm.xlu0 %1480, %v1343
          %v1482 = vpop.permute.xlu0 %1481
          %1485 = vset.pattern.permute.xlu0 0
          %1486 = vperm.xlu0 %1485, %v1344
          %v1487 = vpop.permute.xlu0 %1486
          %1490 = vset.pattern.permute.xlu0 0
          %1491 = vperm.xlu0 %1490, %v1345
          %v1492 = vpop.permute.xlu0 %1491
          %1495 = vset.pattern.permute.xlu0 0
          %1496 = vperm.xlu0 %1495, %v1346
          %v1497 = vpop.permute.xlu0 %1496
          %1500 = vset.pattern.permute.xlu0 0
          %1501 = vperm.xlu0 %1500, %v1347
          %v1502 = vpop.permute.xlu0 %1501
          %1505 = vset.pattern.permute.xlu0 0
          %1506 = vperm.xlu0 %1505, %v1348
          %v1507 = vpop.permute.xlu0 %1506
          %1510 = vset.pattern.permute.xlu0 0
          %1511 = vperm.xlu0 %1510, %v1349
          %v1512 = vpop.permute.xlu0 %1511
          %1515 = vset.pattern.permute.xlu0 0
          %1516 = vperm.xlu0 %1515, %v1350
          %v1517 = vpop.permute.xlu0 %1516
          %1520 = vset.pattern.permute.xlu0 0
          %1521 = vperm.xlu0 %1520, %v1351
          %v1522 = vpop.permute.xlu0 %1521
          %1525 = vset.pattern.permute.xlu0 0
          %1526 = vperm.xlu0 %1525, %v1352
          %v1527 = vpop.permute.xlu0 %1526
          %1530 = vset.pattern.permute.xlu0 0
          %1531 = vperm.xlu0 %1530, %v1353
          %v1532 = vpop.permute.xlu0 %1531
          %1535 = vset.pattern.permute.xlu0 0
          %1536 = vperm.xlu0 %1535, %v1354
          %v1537 = vpop.permute.xlu0 %1536
          %1540 = vset.pattern.permute.xlu0 0
          %1541 = vperm.xlu0 %1540, %v1355
          %v1542 = vpop.permute.xlu0 %1541
          %1545 = vset.pattern.permute.xlu0 0
          %1546 = vperm.xlu0 %1545, %v1356
          %v1547 = vpop.permute.xlu0 %1546
          %1550 = vset.pattern.permute.xlu0 0
          %1551 = vperm.xlu0 %1550, %v1357
          %v1552 = vpop.permute.xlu0 %1551
          %1555 = vset.pattern.permute.xlu0 0
          %1556 = vperm.xlu0 %1555, %v1358
          %v1557 = vpop.permute.xlu0 %1556
          %1560 = vset.pattern.permute.xlu0 0
          %1561 = vperm.xlu0 %1560, %v1359
          %v1562 = vpop.permute.xlu0 %1561
          %1565 = vset.pattern.permute.xlu0 0
          %1566 = vperm.xlu0 %1565, %v1360
          %v1567 = vpop.permute.xlu0 %1566
          %1570 = vset.pattern.permute.xlu0 0
          %1571 = vperm.xlu0 %1570, %v1361
          %v1572 = vpop.permute.xlu0 %1571
          %1575 = vset.pattern.permute.xlu0 0
          %1576 = vperm.xlu0 %1575, %v1362
          %v1577 = vpop.permute.xlu0 %1576
          %1580 = vset.pattern.permute.xlu0 0
          %1581 = vperm.xlu0 %1580, %v1363
          %v1582 = vpop.permute.xlu0 %1581
          %1585 = vset.pattern.permute.xlu0 0
          %1586 = vperm.xlu0 %1585, %v1364
          %v1587 = vpop.permute.xlu0 %1586
          %1590 = vset.pattern.permute.xlu0 0
          %1591 = vperm.xlu0 %1590, %v1365
          %v1592 = vpop.permute.xlu0 %1591
          %1595 = vset.pattern.permute.xlu0 0
          %1596 = vperm.xlu0 %1595, %v1366
          %v1597 = vpop.permute.xlu0 %1596
          %1600 = vset.pattern.permute.xlu0 0
          %1601 = vperm.xlu0 %1600, %v1367
          %v1602 = vpop.permute.xlu0 %1601
          %1605 = vset.pattern.permute.xlu0 0
          %1606 = vperm.xlu0 %1605, %v1368
          %v1607 = vpop.permute.xlu0 %1606
          %1610 = vset.pattern.permute.xlu0 0
          %1611 = vperm.xlu0 %1610, %v1369
          %v1612 = vpop.permute.xlu0 %1611
          %1615 = vset.pattern.permute.xlu0 0
          %1616 = vperm.xlu0 %1615, %v1370
          %v1617 = vpop.permute.xlu0 %1616
          %1620 = vset.pattern.permute.xlu0 0
          %1621 = vperm.xlu0 %1620, %v1371
          %v1622 = vpop.permute.xlu0 %1621
          %1625 = vset.pattern.permute.xlu0 0
          %1626 = vperm.xlu0 %1625, %v1372
          %v1627 = vpop.permute.xlu0 %1626
          %v1629 = vsub.f32 %v1045, %v1472
          %v1630 = vsub.f32 %v1134, %v1472
          %v1631 = vsub.f32 %v1047, %v1477
          %v1632 = vsub.f32 %v1136, %v1477
          %v1633 = vsub.f32 %v1050, %v1482
          %v1634 = vsub.f32 %v1139, %v1482
          %v1635 = vsub.f32 %v1052, %v1487
          %v1636 = vsub.f32 %v1141, %v1487
          %v1637 = vsub.f32 %v1055, %v1492
          %v1638 = vsub.f32 %v1144, %v1492
          %v1639 = vsub.f32 %v1057, %v1497
          %v1640 = vsub.f32 %v1146, %v1497
          %v1641 = vsub.f32 %v1060, %v1502
          %v1642 = vsub.f32 %v1149, %v1502
          %v1643 = vsub.f32 %v1062, %v1507
          %v1644 = vsub.f32 %v1151, %v1507
          %v1645 = vsub.f32 %v1065, %v1512
          %v1646 = vsub.f32 %v1154, %v1512
          %v1647 = vsub.f32 %v1067, %v1517
          %v1648 = vsub.f32 %v1156, %v1517
          %v1649 = vsub.f32 %v1070, %v1522
          %v1650 = vsub.f32 %v1159, %v1522
          %v1651 = vsub.f32 %v1072, %v1527
          %v1652 = vsub.f32 %v1161, %v1527
          %v1653 = vsub.f32 %v1075, %v1532
          %v1654 = vsub.f32 %v1164, %v1532
          %v1655 = vsub.f32 %v1077, %v1537
          %v1656 = vsub.f32 %v1166, %v1537
          %v1657 = vsub.f32 %v1080, %v1542
          %v1658 = vsub.f32 %v1169, %v1542
          %v1659 = vsub.f32 %v1082, %v1547
          %v1660 = vsub.f32 %v1171, %v1547
          %v1661 = vsub.f32 %v1085, %v1552
          %v1662 = vsub.f32 %v1174, %v1552
          %v1663 = vsub.f32 %v1087, %v1557
          %v1664 = vsub.f32 %v1176, %v1557
          %v1665 = vsub.f32 %v1090, %v1562
          %v1666 = vsub.f32 %v1179, %v1562
          %v1667 = vsub.f32 %v1092, %v1567
          %v1668 = vsub.f32 %v1181, %v1567
          %v1669 = vsub.f32 %v1095, %v1572
          %v1670 = vsub.f32 %v1184, %v1572
          %v1671 = vsub.f32 %v1097, %v1577
          %v1672 = vsub.f32 %v1186, %v1577
          %v1673 = vsub.f32 %v1100, %v1582
          %v1674 = vsub.f32 %v1189, %v1582
          %v1675 = vsub.f32 %v1102, %v1587
          %v1676 = vsub.f32 %v1191, %v1587
          %v1677 = vsub.f32 %v1105, %v1592
          %v1678 = vsub.f32 %v1194, %v1592
          %v1679 = vsub.f32 %v1107, %v1597
          %v1680 = vsub.f32 %v1196, %v1597
          %v1681 = vsub.f32 %v1110, %v1602
          %v1682 = vsub.f32 %v1199, %v1602
          %v1683 = vsub.f32 %v1112, %v1607
          %v1684 = vsub.f32 %v1201, %v1607
          %v1685 = vsub.f32 %v1115, %v1612
          %v1686 = vsub.f32 %v1204, %v1612
          %v1687 = vsub.f32 %v1117, %v1617
          %v1688 = vsub.f32 %v1206, %v1617
          %v1689 = vsub.f32 %v1120, %v1622
          %v1690 = vsub.f32 %v1209, %v1622
          %v1691 = vsub.f32 %v1122, %v1627
          %v1692 = vsub.f32 %v1211, %v1627
          %v1693 = vmul.f32 %v1629, 1.442695
          %v1694 = vpow.pop %v1693
          %v1695 = vmul.f32 %v1630, 1.442695
          %v1696 = vpow.pop %v1695
          %v1697 = vmul.f32 %v1631, 1.442695
          %v1698 = vpow.pop %v1697
          %v1699 = vmul.f32 %v1632, 1.442695
          %v1700 = vpow.pop %v1699
          %v1701 = vmul.f32 %v1633, 1.442695
          %v1702 = vpow.pop %v1701
          %v1703 = vmul.f32 %v1634, 1.442695
          %v1704 = vpow.pop %v1703
          %v1705 = vmul.f32 %v1635, 1.442695
          %v1706 = vpow.pop %v1705
          %v1707 = vmul.f32 %v1636, 1.442695
          %v1708 = vpow.pop %v1707
          %v1709 = vmul.f32 %v1637, 1.442695
          %v1710 = vpow.pop %v1709
          %v1711 = vmul.f32 %v1638, 1.442695
          %v1712 = vpow.pop %v1711
          %v1713 = vmul.f32 %v1639, 1.442695
          %v1714 = vpow.pop %v1713
          %v1715 = vmul.f32 %v1640, 1.442695
          %v1716 = vpow.pop %v1715
          %v1717 = vmul.f32 %v1641, 1.442695
          %v1718 = vpow.pop %v1717
          %v1719 = vmul.f32 %v1642, 1.442695
          %v1720 = vpow.pop %v1719
          %v1721 = vmul.f32 %v1643, 1.442695
          %v1722 = vpow.pop %v1721
          %v1723 = vmul.f32 %v1644, 1.442695
          %v1724 = vpow.pop %v1723
          %v1725 = vmul.f32 %v1645, 1.442695
          %v1726 = vpow.pop %v1725
          %v1727 = vmul.f32 %v1646, 1.442695
          %v1728 = vpow.pop %v1727
          %v1729 = vmul.f32 %v1647, 1.442695
          %v1730 = vpow.pop %v1729
          %v1731 = vmul.f32 %v1648, 1.442695
          %v1732 = vpow.pop %v1731
          %v1733 = vmul.f32 %v1649, 1.442695
          %v1734 = vpow.pop %v1733
          %v1735 = vmul.f32 %v1650, 1.442695
          %v1736 = vpow.pop %v1735
          %v1737 = vmul.f32 %v1651, 1.442695
          %v1738 = vpow.pop %v1737
          %v1739 = vmul.f32 %v1652, 1.442695
          %v1740 = vpow.pop %v1739
          %v1741 = vmul.f32 %v1653, 1.442695
          %v1742 = vpow.pop %v1741
          %v1743 = vmul.f32 %v1654, 1.442695
          %v1744 = vpow.pop %v1743
          %v1745 = vmul.f32 %v1655, 1.442695
          %v1746 = vpow.pop %v1745
          %v1747 = vmul.f32 %v1656, 1.442695
          %v1748 = vpow.pop %v1747
          %v1749 = vmul.f32 %v1657, 1.442695
          %v1750 = vpow.pop %v1749
          %v1751 = vmul.f32 %v1658, 1.442695
          %v1752 = vpow.pop %v1751
          %v1753 = vmul.f32 %v1659, 1.442695
          %v1754 = vpow.pop %v1753
          %v1755 = vmul.f32 %v1660, 1.442695
          %v1756 = vpow.pop %v1755
          %v1757 = vmul.f32 %v1661, 1.442695
          %v1758 = vpow.pop %v1757
          %v1759 = vmul.f32 %v1662, 1.442695
          %v1760 = vpow.pop %v1759
          %v1761 = vmul.f32 %v1663, 1.442695
          %v1762 = vpow.pop %v1761
          %v1763 = vmul.f32 %v1664, 1.442695
          %v1764 = vpow.pop %v1763
          %v1765 = vmul.f32 %v1665, 1.442695
          %v1766 = vpow.pop %v1765
          %v1767 = vmul.f32 %v1666, 1.442695
          %v1768 = vpow.pop %v1767
          %v1769 = vmul.f32 %v1667, 1.442695
          %v1770 = vpow.pop %v1769
          %v1771 = vmul.f32 %v1668, 1.442695
          %v1772 = vpow.pop %v1771
          %v1773 = vmul.f32 %v1669, 1.442695
          %v1774 = vpow.pop %v1773
          %v1775 = vmul.f32 %v1670, 1.442695
          %v1776 = vpow.pop %v1775
          %v1777 = vmul.f32 %v1671, 1.442695
          %v1778 = vpow.pop %v1777
          %v1779 = vmul.f32 %v1672, 1.442695
          %v1780 = vpow.pop %v1779
          %v1781 = vmul.f32 %v1673, 1.442695
          %v1782 = vpow.pop %v1781
          %v1783 = vmul.f32 %v1674, 1.442695
          %v1784 = vpow.pop %v1783
          %v1785 = vmul.f32 %v1675, 1.442695
          %v1786 = vpow.pop %v1785
          %v1787 = vmul.f32 %v1676, 1.442695
          %v1788 = vpow.pop %v1787
          %v1789 = vmul.f32 %v1677, 1.442695
          %v1790 = vpow.pop %v1789
          %v1791 = vmul.f32 %v1678, 1.442695
          %v1792 = vpow.pop %v1791
          %v1793 = vmul.f32 %v1679, 1.442695
          %v1794 = vpow.pop %v1793
          %v1795 = vmul.f32 %v1680, 1.442695
          %v1796 = vpow.pop %v1795
          %v1797 = vmul.f32 %v1681, 1.442695
          %v1798 = vpow.pop %v1797
          %v1799 = vmul.f32 %v1682, 1.442695
          %v1800 = vpow.pop %v1799
          %v1801 = vmul.f32 %v1683, 1.442695
          %v1802 = vpow.pop %v1801
          %v1803 = vmul.f32 %v1684, 1.442695
          %v1804 = vpow.pop %v1803
          %v1805 = vmul.f32 %v1685, 1.442695
          %v1806 = vpow.pop %v1805
          %v1807 = vmul.f32 %v1686, 1.442695
          %v1808 = vpow.pop %v1807
          %v1809 = vmul.f32 %v1687, 1.442695
          %v1810 = vpow.pop %v1809
          %v1811 = vmul.f32 %v1688, 1.442695
          %v1812 = vpow.pop %v1811
          %v1813 = vmul.f32 %v1689, 1.442695
          %v1814 = vpow.pop %v1813
          %v1815 = vmul.f32 %v1690, 1.442695
          %v1816 = vpow.pop %v1815
          %v1817 = vmul.f32 %v1691, 1.442695
          %v1818 = vpow.pop %v1817
          %v1819 = vmul.f32 %v1692, 1.442695
          %v1820 = vpow.pop %v1819
          %v1821 = vld [vmem:[#allocation4] sm:$0xff]
          %v1822 = vld [vmem:[#allocation4 + $0x8] sm:$0xff]
          %v1823 = vld [vmem:[#allocation4 + $0x10] sm:$0xff]
          %v1824 = vld [vmem:[#allocation4 + $0x18] sm:$0xff]
          %v1825 = vld [vmem:[#allocation4 + $0x20] sm:$0xff]
          %v1826 = vld [vmem:[#allocation4 + $0x28] sm:$0xff]
          %v1827 = vld [vmem:[#allocation4 + $0x30] sm:$0xff]
          %v1828 = vld [vmem:[#allocation4 + $0x38] sm:$0xff]
          %v1829 = vld [vmem:[#allocation4 + $0x40] sm:$0xff]
          %v1830 = vld [vmem:[#allocation4 + $0x48] sm:$0xff]
          %v1831 = vld [vmem:[#allocation4 + $0x50] sm:$0xff]
          %v1832 = vld [vmem:[#allocation4 + $0x58] sm:$0xff]
          %v1833 = vld [vmem:[#allocation4 + $0x60] sm:$0xff]
          %v1834 = vld [vmem:[#allocation4 + $0x68] sm:$0xff]
          %v1835 = vld [vmem:[#allocation4 + $0x70] sm:$0xff]
          %v1836 = vld [vmem:[#allocation4 + $0x78] sm:$0xff]
          %v1837 = vld [vmem:[#allocation4 + $0x80] sm:$0xff]
          %v1838 = vld [vmem:[#allocation4 + $0x88] sm:$0xff]
          %v1839 = vld [vmem:[#allocation4 + $0x90] sm:$0xff]
          %v1840 = vld [vmem:[#allocation4 + $0x98] sm:$0xff]
          %v1841 = vld [vmem:[#allocation4 + $0xa0] sm:$0xff]
          %v1842 = vld [vmem:[#allocation4 + $0xa8] sm:$0xff]
          %v1843 = vld [vmem:[#allocation4 + $0xb0] sm:$0xff]
          %v1844 = vld [vmem:[#allocation4 + $0xb8] sm:$0xff]
          %v1845 = vld [vmem:[#allocation4 + $0xc0] sm:$0xff]
          %v1846 = vld [vmem:[#allocation4 + $0xc8] sm:$0xff]
          %v1847 = vld [vmem:[#allocation4 + $0xd0] sm:$0xff]
          %v1848 = vld [vmem:[#allocation4 + $0xd8] sm:$0xff]
          %v1849 = vld [vmem:[#allocation4 + $0xe0] sm:$0xff]
          %v1850 = vld [vmem:[#allocation4 + $0xe8] sm:$0xff]
          %v1851 = vld [vmem:[#allocation4 + $0xf0] sm:$0xff]
          %v1852 = vld [vmem:[#allocation4 + $0xf8] sm:$0xff]
          %v1853 = vmul.f32 %v1406, %v1821
          %v1854 = vmul.f32 %v1408, %v1822
          %v1855 = vmul.f32 %v1410, %v1823
          %v1856 = vmul.f32 %v1412, %v1824
          %v1857 = vmul.f32 %v1414, %v1825
          %v1858 = vmul.f32 %v1416, %v1826
          %v1859 = vmul.f32 %v1418, %v1827
          %v1860 = vmul.f32 %v1420, %v1828
          %v1861 = vmul.f32 %v1422, %v1829
          %v1862 = vmul.f32 %v1424, %v1830
          %v1863 = vmul.f32 %v1426, %v1831
          %v1864 = vmul.f32 %v1428, %v1832
          %v1865 = vmul.f32 %v1430, %v1833
          %v1866 = vmul.f32 %v1432, %v1834
          %v1867 = vmul.f32 %v1434, %v1835
          %v1868 = vmul.f32 %v1436, %v1836
          %v1869 = vmul.f32 %v1438, %v1837
          %v1870 = vmul.f32 %v1440, %v1838
          %v1871 = vmul.f32 %v1442, %v1839
          %v1872 = vmul.f32 %v1444, %v1840
          %v1873 = vmul.f32 %v1446, %v1841
          %v1874 = vmul.f32 %v1448, %v1842
          %v1875 = vmul.f32 %v1450, %v1843
          %v1876 = vmul.f32 %v1452, %v1844
          %v1877 = vmul.f32 %v1454, %v1845
          %v1878 = vmul.f32 %v1456, %v1846
          %v1879 = vmul.f32 %v1458, %v1847
          %v1880 = vmul.f32 %v1460, %v1848
          %v1881 = vmul.f32 %v1462, %v1849
          %v1882 = vmul.f32 %v1464, %v1850
          %v1883 = vmul.f32 %v1466, %v1851
          %v1884 = vmul.f32 %v1468, %v1852
          %v1885 = vadd.f32 %v1694, %v1696
          %1886 = vadd.xlane.f32.xlu0 %v1885
          %v1887 = vpop.xlane.xlu0 %1886
          %v1888 = vadd.f32 %v1698, %v1700
          %1889 = vadd.xlane.f32.xlu0 %v1888
          %v1890 = vpop.xlane.xlu0 %1889
          %v1891 = vadd.f32 %v1702, %v1704
          %1892 = vadd.xlane.f32.xlu0 %v1891
          %v1893 = vpop.xlane.xlu0 %1892
          %v1894 = vadd.f32 %v1706, %v1708
          %1895 = vadd.xlane.f32.xlu0 %v1894
          %v1896 = vpop.xlane.xlu0 %1895
          %v1897 = vadd.f32 %v1710, %v1712
          %1898 = vadd.xlane.f32.xlu0 %v1897
          %v1899 = vpop.xlane.xlu0 %1898
          %v1900 = vadd.f32 %v1714, %v1716
          %1901 = vadd.xlane.f32.xlu0 %v1900
          %v1902 = vpop.xlane.xlu0 %1901
          %v1903 = vadd.f32 %v1718, %v1720
          %1904 = vadd.xlane.f32.xlu0 %v1903
          %v1905 = vpop.xlane.xlu0 %1904
          %v1906 = vadd.f32 %v1722, %v1724
          %1907 = vadd.xlane.f32.xlu0 %v1906
          %v1908 = vpop.xlane.xlu0 %1907
          %v1909 = vadd.f32 %v1726, %v1728
          %1910 = vadd.xlane.f32.xlu0 %v1909
          %v1911 = vpop.xlane.xlu0 %1910
          %v1912 = vadd.f32 %v1730, %v1732
          %1913 = vadd.xlane.f32.xlu0 %v1912
          %v1914 = vpop.xlane.xlu0 %1913
          %v1915 = vadd.f32 %v1734, %v1736
          %1916 = vadd.xlane.f32.xlu0 %v1915
          %v1917 = vpop.xlane.xlu0 %1916
          %v1918 = vadd.f32 %v1738, %v1740
          %1919 = vadd.xlane.f32.xlu0 %v1918
          %v1920 = vpop.xlane.xlu0 %1919
          %v1921 = vadd.f32 %v1742, %v1744
          %1922 = vadd.xlane.f32.xlu0 %v1921
          %v1923 = vpop.xlane.xlu0 %1922
          %v1924 = vadd.f32 %v1746, %v1748
          %1925 = vadd.xlane.f32.xlu0 %v1924
          %v1926 = vpop.xlane.xlu0 %1925
          %v1927 = vadd.f32 %v1750, %v1752
          %1928 = vadd.xlane.f32.xlu0 %v1927
          %v1929 = vpop.xlane.xlu0 %1928
          %v1930 = vadd.f32 %v1754, %v1756
          %1931 = vadd.xlane.f32.xlu0 %v1930
          %v1932 = vpop.xlane.xlu0 %1931
          %v1933 = vadd.f32 %v1758, %v1760
          %1934 = vadd.xlane.f32.xlu0 %v1933
          %v1935 = vpop.xlane.xlu0 %1934
          %v1936 = vadd.f32 %v1762, %v1764
          %1937 = vadd.xlane.f32.xlu0 %v1936
          %v1938 = vpop.xlane.xlu0 %1937
          %v1939 = vadd.f32 %v1766, %v1768
          %1940 = vadd.xlane.f32.xlu0 %v1939
          %v1941 = vpop.xlane.xlu0 %1940
          %v1942 = vadd.f32 %v1770, %v1772
          %1943 = vadd.xlane.f32.xlu0 %v1942
          %v1944 = vpop.xlane.xlu0 %1943
          %v1945 = vadd.f32 %v1774, %v1776
          %1946 = vadd.xlane.f32.xlu0 %v1945
          %v1947 = vpop.xlane.xlu0 %1946
          %v1948 = vadd.f32 %v1778, %v1780
          %1949 = vadd.xlane.f32.xlu0 %v1948
          %v1950 = vpop.xlane.xlu0 %1949
          %v1951 = vadd.f32 %v1782, %v1784
          %1952 = vadd.xlane.f32.xlu0 %v1951
          %v1953 = vpop.xlane.xlu0 %1952
          %v1954 = vadd.f32 %v1786, %v1788
          %1955 = vadd.xlane.f32.xlu0 %v1954
          %v1956 = vpop.xlane.xlu0 %1955
          %v1957 = vadd.f32 %v1790, %v1792
          %1958 = vadd.xlane.f32.xlu0 %v1957
          %v1959 = vpop.xlane.xlu0 %1958
          %v1960 = vadd.f32 %v1794, %v1796
          %1961 = vadd.xlane.f32.xlu0 %v1960
          %v1962 = vpop.xlane.xlu0 %1961
          %v1963 = vadd.f32 %v1798, %v1800
          %1964 = vadd.xlane.f32.xlu0 %v1963
          %v1965 = vpop.xlane.xlu0 %1964
          %v1966 = vadd.f32 %v1802, %v1804
          %1967 = vadd.xlane.f32.xlu0 %v1966
          %v1968 = vpop.xlane.xlu0 %1967
          %v1969 = vadd.f32 %v1806, %v1808
          %1970 = vadd.xlane.f32.xlu0 %v1969
          %v1971 = vpop.xlane.xlu0 %1970
          %v1972 = vadd.f32 %v1810, %v1812
          %1973 = vadd.xlane.f32.xlu0 %v1972
          %v1974 = vpop.xlane.xlu0 %1973
          %v1975 = vadd.f32 %v1814, %v1816
          %1976 = vadd.xlane.f32.xlu0 %v1975
          %v1977 = vpop.xlane.xlu0 %1976
          %v1978 = vadd.f32 %v1818, %v1820
          %1979 = vadd.xlane.f32.xlu0 %v1978
          %v1980 = vpop.xlane.xlu0 %1979
          %v1981 = vadd.f32 %v1853, %v1887
          %v1982 = vadd.f32 %v1854, %v1890
          %v1983 = vadd.f32 %v1855, %v1893
          %v1984 = vadd.f32 %v1856, %v1896
          %v1985 = vadd.f32 %v1857, %v1899
          %v1986 = vadd.f32 %v1858, %v1902
          %v1987 = vadd.f32 %v1859, %v1905
          %v1988 = vadd.f32 %v1860, %v1908
          %v1989 = vadd.f32 %v1861, %v1911
          %v1990 = vadd.f32 %v1862, %v1914
          %v1991 = vadd.f32 %v1863, %v1917
          %v1992 = vadd.f32 %v1864, %v1920
          %v1993 = vadd.f32 %v1865, %v1923
          %v1994 = vadd.f32 %v1866, %v1926
          %v1995 = vadd.f32 %v1867, %v1929
          %v1996 = vadd.f32 %v1868, %v1932
          %v1997 = vadd.f32 %v1869, %v1935
          %v1998 = vadd.f32 %v1870, %v1938
          %v1999 = vadd.f32 %v1871, %v1941
          %v2000 = vadd.f32 %v1872, %v1944
          %v2001 = vadd.f32 %v1873, %v1947
          %v2002 = vadd.f32 %v1874, %v1950
          %v2003 = vadd.f32 %v1875, %v1953
          %v2004 = vadd.f32 %v1876, %v1956
          %v2005 = vadd.f32 %v1877, %v1959
          %v2006 = vadd.f32 %v1878, %v1962
          %v2007 = vadd.f32 %v1879, %v1965
          %v2008 = vadd.f32 %v1880, %v1968
          %v2009 = vadd.f32 %v1881, %v1971
          %v2010 = vadd.f32 %v1882, %v1974
          %v2011 = vadd.f32 %v1883, %v1977
          %v2012 = vadd.f32 %v1884, %v1980
          %vm2013 = vcmask 7168
          %2014 = vst.msk [vmem:[#allocation4] sm:$0xff] %vm2013, %v1981
          %2015 = vst.msk [vmem:[#allocation4 + $0x8] sm:$0xff] %vm2013, %v1982
          %2016 = vst.msk [vmem:[#allocation4 + $0x10] sm:$0xff] %vm2013, %v1983
          %2017 = vst.msk [vmem:[#allocation4 + $0x18] sm:$0xff] %vm2013, %v1984
          %2018 = vst.msk [vmem:[#allocation4 + $0x20] sm:$0xff] %vm2013, %v1985
          %2019 = vst.msk [vmem:[#allocation4 + $0x28] sm:$0xff] %vm2013, %v1986
          %2020 = vst.msk [vmem:[#allocation4 + $0x30] sm:$0xff] %vm2013, %v1987
          %2021 = vst.msk [vmem:[#allocation4 + $0x38] sm:$0xff] %vm2013, %v1988
          %2022 = vst.msk [vmem:[#allocation4 + $0x40] sm:$0xff] %vm2013, %v1989
          %2023 = vst.msk [vmem:[#allocation4 + $0x48] sm:$0xff] %vm2013, %v1990
          %2024 = vst.msk [vmem:[#allocation4 + $0x50] sm:$0xff] %vm2013, %v1991
          %2025 = vst.msk [vmem:[#allocation4 + $0x58] sm:$0xff] %vm2013, %v1992
          %2026 = vst.msk [vmem:[#allocation4 + $0x60] sm:$0xff] %vm2013, %v1993
          %2027 = vst.msk [vmem:[#allocation4 + $0x68] sm:$0xff] %vm2013, %v1994
          %2028 = vst.msk [vmem:[#allocation4 + $0x70] sm:$0xff] %vm2013, %v1995
          %2029 = vst.msk [vmem:[#allocation4 + $0x78] sm:$0xff] %vm2013, %v1996
          %2030 = vst.msk [vmem:[#allocation4 + $0x80] sm:$0xff] %vm2013, %v1997
          %2031 = vst.msk [vmem:[#allocation4 + $0x88] sm:$0xff] %vm2013, %v1998
          %2032 = vst.msk [vmem:[#allocation4 + $0x90] sm:$0xff] %vm2013, %v1999
          %2033 = vst.msk [vmem:[#allocation4 + $0x98] sm:$0xff] %vm2013, %v2000
          %2034 = vst.msk [vmem:[#allocation4 + $0xa0] sm:$0xff] %vm2013, %v2001
          %2035 = vst.msk [vmem:[#allocation4 + $0xa8] sm:$0xff] %vm2013, %v2002
          %2036 = vst.msk [vmem:[#allocation4 + $0xb0] sm:$0xff] %vm2013, %v2003
          %2037 = vst.msk [vmem:[#allocation4 + $0xb8] sm:$0xff] %vm2013, %v2004
          %2038 = vst.msk [vmem:[#allocation4 + $0xc0] sm:$0xff] %vm2013, %v2005
          %2039 = vst.msk [vmem:[#allocation4 + $0xc8] sm:$0xff] %vm2013, %v2006
          %2040 = vst.msk [vmem:[#allocation4 + $0xd0] sm:$0xff] %vm2013, %v2007
          %2041 = vst.msk [vmem:[#allocation4 + $0xd8] sm:$0xff] %vm2013, %v2008
          %2042 = vst.msk [vmem:[#allocation4 + $0xe0] sm:$0xff] %vm2013, %v2009
          %2043 = vst.msk [vmem:[#allocation4 + $0xe8] sm:$0xff] %vm2013, %v2010
          %2044 = vst.msk [vmem:[#allocation4 + $0xf0] sm:$0xff] %vm2013, %v2011
          %2045 = vst.msk [vmem:[#allocation4 + $0xf8] sm:$0xff] %vm2013, %v2012
          %v2046 = vld [vmem:[#allocation5] sm:$0xff]
          %v2047 = vld [vmem:[#allocation5 + $0x8] sm:$0xff]
          %v2048 = vld [vmem:[#allocation5 + $0x10] sm:$0xff]
          %v2049 = vld [vmem:[#allocation5 + $0x18] sm:$0xff]
          %v2050 = vld [vmem:[#allocation5 + $0x20] sm:$0xff]
          %v2051 = vld [vmem:[#allocation5 + $0x28] sm:$0xff]
          %v2052 = vld [vmem:[#allocation5 + $0x30] sm:$0xff]
          %v2053 = vld [vmem:[#allocation5 + $0x38] sm:$0xff]
          %v2054 = vld [vmem:[#allocation5 + $0x40] sm:$0xff]
          %v2055 = vld [vmem:[#allocation5 + $0x48] sm:$0xff]
          %v2056 = vld [vmem:[#allocation5 + $0x50] sm:$0xff]
          %v2057 = vld [vmem:[#allocation5 + $0x58] sm:$0xff]
          %v2058 = vld [vmem:[#allocation5 + $0x60] sm:$0xff]
          %v2059 = vld [vmem:[#allocation5 + $0x68] sm:$0xff]
          %v2060 = vld [vmem:[#allocation5 + $0x70] sm:$0xff]
          %v2061 = vld [vmem:[#allocation5 + $0x78] sm:$0xff]
          %v2062 = vld [vmem:[#allocation5 + $0x80] sm:$0xff]
          %v2063 = vld [vmem:[#allocation5 + $0x88] sm:$0xff]
          %v2064 = vld [vmem:[#allocation5 + $0x90] sm:$0xff]
          %v2065 = vld [vmem:[#allocation5 + $0x98] sm:$0xff]
          %v2066 = vld [vmem:[#allocation5 + $0xa0] sm:$0xff]
          %v2067 = vld [vmem:[#allocation5 + $0xa8] sm:$0xff]
          %v2068 = vld [vmem:[#allocation5 + $0xb0] sm:$0xff]
          %v2069 = vld [vmem:[#allocation5 + $0xb8] sm:$0xff]
          %v2070 = vld [vmem:[#allocation5 + $0xc0] sm:$0xff]
          %v2071 = vld [vmem:[#allocation5 + $0xc8] sm:$0xff]
          %v2072 = vld [vmem:[#allocation5 + $0xd0] sm:$0xff]
          %v2073 = vld [vmem:[#allocation5 + $0xd8] sm:$0xff]
          %v2074 = vld [vmem:[#allocation5 + $0xe0] sm:$0xff]
          %v2075 = vld [vmem:[#allocation5 + $0xe8] sm:$0xff]
          %v2076 = vld [vmem:[#allocation5 + $0xf0] sm:$0xff]
          %v2077 = vld [vmem:[#allocation5 + $0xf8] sm:$0xff]
          %2079 = vset.pattern.permute.xlu0 0
          %2080 = vperm.xlu0 %2079, %v1406
          %v2081 = vpop.permute.xlu0 %2080
          %2084 = vset.pattern.permute.xlu0 0
          %2085 = vperm.xlu0 %2084, %v1408
          %v2086 = vpop.permute.xlu0 %2085
          %2089 = vset.pattern.permute.xlu0 0
          %2090 = vperm.xlu0 %2089, %v1410
          %v2091 = vpop.permute.xlu0 %2090
          %2094 = vset.pattern.permute.xlu0 0
          %2095 = vperm.xlu0 %2094, %v1412
          %v2096 = vpop.permute.xlu0 %2095
          %2099 = vset.pattern.permute.xlu0 0
          %2100 = vperm.xlu0 %2099, %v1414
          %v2101 = vpop.permute.xlu0 %2100
          %2104 = vset.pattern.permute.xlu0 0
          %2105 = vperm.xlu0 %2104, %v1416
          %v2106 = vpop.permute.xlu0 %2105
          %2109 = vset.pattern.permute.xlu0 0
          %2110 = vperm.xlu0 %2109, %v1418
          %v2111 = vpop.permute.xlu0 %2110
          %2114 = vset.pattern.permute.xlu0 0
          %2115 = vperm.xlu0 %2114, %v1420
          %v2116 = vpop.permute.xlu0 %2115
          %2119 = vset.pattern.permute.xlu0 0
          %2120 = vperm.xlu0 %2119, %v1422
          %v2121 = vpop.permute.xlu0 %2120
          %2124 = vset.pattern.permute.xlu0 0
          %2125 = vperm.xlu0 %2124, %v1424
          %v2126 = vpop.permute.xlu0 %2125
          %2129 = vset.pattern.permute.xlu0 0
          %2130 = vperm.xlu0 %2129, %v1426
          %v2131 = vpop.permute.xlu0 %2130
          %2134 = vset.pattern.permute.xlu0 0
          %2135 = vperm.xlu0 %2134, %v1428
          %v2136 = vpop.permute.xlu0 %2135
          %2139 = vset.pattern.permute.xlu0 0
          %2140 = vperm.xlu0 %2139, %v1430
          %v2141 = vpop.permute.xlu0 %2140
          %2144 = vset.pattern.permute.xlu0 0
          %2145 = vperm.xlu0 %2144, %v1432
          %v2146 = vpop.permute.xlu0 %2145
          %2149 = vset.pattern.permute.xlu0 0
          %2150 = vperm.xlu0 %2149, %v1434
          %v2151 = vpop.permute.xlu0 %2150
          %2154 = vset.pattern.permute.xlu0 0
          %2155 = vperm.xlu0 %2154, %v1436
          %v2156 = vpop.permute.xlu0 %2155
          %2159 = vset.pattern.permute.xlu0 0
          %2160 = vperm.xlu0 %2159, %v1438
          %v2161 = vpop.permute.xlu0 %2160
          %2164 = vset.pattern.permute.xlu0 0
          %2165 = vperm.xlu0 %2164, %v1440
          %v2166 = vpop.permute.xlu0 %2165
          %2169 = vset.pattern.permute.xlu0 0
          %2170 = vperm.xlu0 %2169, %v1442
          %v2171 = vpop.permute.xlu0 %2170
          %2174 = vset.pattern.permute.xlu0 0
          %2175 = vperm.xlu0 %2174, %v1444
          %v2176 = vpop.permute.xlu0 %2175
          %2179 = vset.pattern.permute.xlu0 0
          %2180 = vperm.xlu0 %2179, %v1446
          %v2181 = vpop.permute.xlu0 %2180
          %2184 = vset.pattern.permute.xlu0 0
          %2185 = vperm.xlu0 %2184, %v1448
          %v2186 = vpop.permute.xlu0 %2185
          %2189 = vset.pattern.permute.xlu0 0
          %2190 = vperm.xlu0 %2189, %v1450
          %v2191 = vpop.permute.xlu0 %2190
          %2194 = vset.pattern.permute.xlu0 0
          %2195 = vperm.xlu0 %2194, %v1452
          %v2196 = vpop.permute.xlu0 %2195
          %2199 = vset.pattern.permute.xlu0 0
          %2200 = vperm.xlu0 %2199, %v1454
          %v2201 = vpop.permute.xlu0 %2200
          %2204 = vset.pattern.permute.xlu0 0
          %2205 = vperm.xlu0 %2204, %v1456
          %v2206 = vpop.permute.xlu0 %2205
          %2209 = vset.pattern.permute.xlu0 0
          %2210 = vperm.xlu0 %2209, %v1458
          %v2211 = vpop.permute.xlu0 %2210
          %2214 = vset.pattern.permute.xlu0 0
          %2215 = vperm.xlu0 %2214, %v1460
          %v2216 = vpop.permute.xlu0 %2215
          %2219 = vset.pattern.permute.xlu0 0
          %2220 = vperm.xlu0 %2219, %v1462
          %v2221 = vpop.permute.xlu0 %2220
          %2224 = vset.pattern.permute.xlu0 0
          %2225 = vperm.xlu0 %2224, %v1464
          %v2226 = vpop.permute.xlu0 %2225
          %2229 = vset.pattern.permute.xlu0 0
          %2230 = vperm.xlu0 %2229, %v1466
          %v2231 = vpop.permute.xlu0 %2230
          %2234 = vset.pattern.permute.xlu0 0
          %2235 = vperm.xlu0 %2234, %v1468
          %v2236 = vpop.permute.xlu0 %2235
          %v2238 = vmul.f32 %v2081, %v2046
          %v2239 = vmul.f32 %v2086, %v2047
          %v2240 = vmul.f32 %v2091, %v2048
          %v2241 = vmul.f32 %v2096, %v2049
          %v2242 = vmul.f32 %v2101, %v2050
          %v2243 = vmul.f32 %v2106, %v2051
          %v2244 = vmul.f32 %v2111, %v2052
          %v2245 = vmul.f32 %v2116, %v2053
          %v2246 = vmul.f32 %v2121, %v2054
          %v2247 = vmul.f32 %v2126, %v2055
          %v2248 = vmul.f32 %v2131, %v2056
          %v2249 = vmul.f32 %v2136, %v2057
          %v2250 = vmul.f32 %v2141, %v2058
          %v2251 = vmul.f32 %v2146, %v2059
          %v2252 = vmul.f32 %v2151, %v2060
          %v2253 = vmul.f32 %v2156, %v2061
          %v2254 = vmul.f32 %v2161, %v2062
          %v2255 = vmul.f32 %v2166, %v2063
          %v2256 = vmul.f32 %v2171, %v2064
          %v2257 = vmul.f32 %v2176, %v2065
          %v2258 = vmul.f32 %v2181, %v2066
          %v2259 = vmul.f32 %v2186, %v2067
          %v2260 = vmul.f32 %v2191, %v2068
          %v2261 = vmul.f32 %v2196, %v2069
          %v2262 = vmul.f32 %v2201, %v2070
          %v2263 = vmul.f32 %v2206, %v2071
          %v2264 = vmul.f32 %v2211, %v2072
          %v2265 = vmul.f32 %v2216, %v2073
          %v2266 = vmul.f32 %v2221, %v2074
          %v2267 = vmul.f32 %v2226, %v2075
          %v2268 = vmul.f32 %v2231, %v2076
          %v2269 = vmul.f32 %v2236, %v2077
          %v2270 = vpack.c.bf16 %v1698, %v1694
          %v2271 = vpack.c.bf16 %v1700, %v1696
          %v2272 = vpack.c.bf16 %v1706, %v1702
          %v2273 = vpack.c.bf16 %v1708, %v1704
          %v2274 = vpack.c.bf16 %v1714, %v1710
          %v2275 = vpack.c.bf16 %v1716, %v1712
          %v2276 = vpack.c.bf16 %v1722, %v1718
          %v2277 = vpack.c.bf16 %v1724, %v1720
          %v2278 = vpack.c.bf16 %v1730, %v1726
          %v2279 = vpack.c.bf16 %v1732, %v1728
          %v2280 = vpack.c.bf16 %v1738, %v1734
          %v2281 = vpack.c.bf16 %v1740, %v1736
          %v2282 = vpack.c.bf16 %v1746, %v1742
          %v2283 = vpack.c.bf16 %v1748, %v1744
          %v2284 = vpack.c.bf16 %v1754, %v1750
          %v2285 = vpack.c.bf16 %v1756, %v1752
          %v2286 = vpack.c.bf16 %v1762, %v1758
          %v2287 = vpack.c.bf16 %v1764, %v1760
          %v2288 = vpack.c.bf16 %v1770, %v1766
          %v2289 = vpack.c.bf16 %v1772, %v1768
          %v2290 = vpack.c.bf16 %v1778, %v1774
          %v2291 = vpack.c.bf16 %v1780, %v1776
          %v2292 = vpack.c.bf16 %v1786, %v1782
          %v2293 = vpack.c.bf16 %v1788, %v1784
          %v2294 = vpack.c.bf16 %v1794, %v1790
          %v2295 = vpack.c.bf16 %v1796, %v1792
          %v2296 = vpack.c.bf16 %v1802, %v1798
          %v2297 = vpack.c.bf16 %v1804, %v1800
          %v2298 = vpack.c.bf16 %v1810, %v1806
          %v2299 = vpack.c.bf16 %v1812, %v1808
          %v2300 = vpack.c.bf16 %v1818, %v1814
          %v2301 = vpack.c.bf16 %v1820, %v1816
          %v2334 = vunpack.c.l.b16 %v779
          %v2335 = vunpack.c.l.b16 %v780
          %v2336 = vunpack.c.l.b16 %v781
          %v2337 = vunpack.c.l.b16 %v782
          %v2338 = vunpack.c.l.b16 %v783
          %v2339 = vunpack.c.l.b16 %v784
          %v2340 = vunpack.c.l.b16 %v785
          %v2341 = vunpack.c.l.b16 %v786
          %v2342 = vunpack.c.l.b16 %v787
          %v2343 = vunpack.c.l.b16 %v788
          %v2344 = vunpack.c.l.b16 %v789
          %v2345 = vunpack.c.l.b16 %v790
          %v2346 = vunpack.c.l.b16 %v791
          %v2347 = vunpack.c.l.b16 %v792
          %v2348 = vunpack.c.l.b16 %v793
          %v2349 = vunpack.c.l.b16 %v794
          %v2350 = vunpack.c.l.b16 %v795
          %v2351 = vunpack.c.l.b16 %v796
          %v2352 = vunpack.c.l.b16 %v797
          %v2353 = vunpack.c.l.b16 %v798
          %v2354 = vunpack.c.l.b16 %v799
          %v2355 = vunpack.c.l.b16 %v800
          %v2356 = vunpack.c.l.b16 %v801
          %v2357 = vunpack.c.l.b16 %v802
          %v2358 = vunpack.c.l.b16 %v803
          %v2359 = vunpack.c.l.b16 %v804
          %v2360 = vunpack.c.l.b16 %v805
          %v2361 = vunpack.c.l.b16 %v806
          %v2362 = vunpack.c.l.b16 %v807
          %v2363 = vunpack.c.l.b16 %v808
          %v2364 = vunpack.c.l.b16 %v809
          %v2365 = vunpack.c.l.b16 %v810
          %v2366 = vpack.c.b16 %v2335, %v2334
          %v2367 = vpack.c.b16 %v2337, %v2336
          %v2368 = vpack.c.b16 %v2339, %v2338
          %v2369 = vpack.c.b16 %v2341, %v2340
          %v2370 = vpack.c.b16 %v2343, %v2342
          %v2371 = vpack.c.b16 %v2345, %v2344
          %v2372 = vpack.c.b16 %v2347, %v2346
          %v2373 = vpack.c.b16 %v2349, %v2348
          %v2374 = vpack.c.b16 %v2351, %v2350
          %v2375 = vpack.c.b16 %v2353, %v2352
          %v2376 = vpack.c.b16 %v2355, %v2354
          %v2377 = vpack.c.b16 %v2357, %v2356
          %v2378 = vpack.c.b16 %v2359, %v2358
          %v2379 = vpack.c.b16 %v2361, %v2360
          %v2380 = vpack.c.b16 %v2363, %v2362
          %v2381 = vpack.c.b16 %v2365, %v2364
          %2398 = vmatpush.bf16.msra.mxu0 %v2373
          %2399 = vmatpush.bf16.msra.mxu0 %v2372
          %2400 = vmatpush.bf16.msra.mxu0 %v2371
          %2401 = vmatpush.bf16.msra.mxu0 %v2370
          %2402 = vmatpush.bf16.msra.mxu0 %v2369
          %2403 = vmatpush.bf16.msra.mxu0 %v2368
          %2404 = vmatpush.bf16.msra.mxu0 %v2367
          %2405 = vmatpush.bf16.msra.mxu0 %v2366
          %2406 = vmatmul.bf16.gmra.mxu0 %v2270
          %v2407 = vpop.f32.mrf.mxu0
          %v2408 = vadd.f32 0.0, %v2407
          %v2409 = vpop.f32.mrf.mxu0
          %v2410 = vadd.f32 0.0, %v2409
          %2411 = vmatmul.bf16.gmra.mxu0 %v2272
          %v2412 = vpop.f32.mrf.mxu0
          %v2413 = vadd.f32 0.0, %v2412
          %v2414 = vpop.f32.mrf.mxu0
          %v2415 = vadd.f32 0.0, %v2414
          %2416 = vmatmul.bf16.gmra.mxu0 %v2274
          %v2417 = vpop.f32.mrf.mxu0
          %v2418 = vadd.f32 0.0, %v2417
          %v2419 = vpop.f32.mrf.mxu0
          %v2420 = vadd.f32 0.0, %v2419
          %2421 = vmatmul.bf16.gmra.mxu0 %v2276
          %v2422 = vpop.f32.mrf.mxu0
          %v2423 = vadd.f32 0.0, %v2422
          %v2424 = vpop.f32.mrf.mxu0
          %v2425 = vadd.f32 0.0, %v2424
          %2426 = vmatmul.bf16.gmra.mxu0 %v2278
          %v2427 = vpop.f32.mrf.mxu0
          %v2428 = vadd.f32 0.0, %v2427
          %v2429 = vpop.f32.mrf.mxu0
          %v2430 = vadd.f32 0.0, %v2429
          %2431 = vmatmul.bf16.gmra.mxu0 %v2280
          %v2432 = vpop.f32.mrf.mxu0
          %v2433 = vadd.f32 0.0, %v2432
          %v2434 = vpop.f32.mrf.mxu0
          %v2435 = vadd.f32 0.0, %v2434
          %2436 = vmatmul.bf16.gmra.mxu0 %v2282
          %v2437 = vpop.f32.mrf.mxu0
          %v2438 = vadd.f32 0.0, %v2437
          %v2439 = vpop.f32.mrf.mxu0
          %v2440 = vadd.f32 0.0, %v2439
          %2441 = vmatmul.bf16.gmra.mxu0 %v2284
          %v2442 = vpop.f32.mrf.mxu0
          %v2443 = vadd.f32 0.0, %v2442
          %v2444 = vpop.f32.mrf.mxu0
          %v2445 = vadd.f32 0.0, %v2444
          %2446 = vmatmul.bf16.gmra.mxu0 %v2286
          %v2447 = vpop.f32.mrf.mxu0
          %v2448 = vadd.f32 0.0, %v2447
          %v2449 = vpop.f32.mrf.mxu0
          %v2450 = vadd.f32 0.0, %v2449
          %2451 = vmatmul.bf16.gmra.mxu0 %v2288
          %v2452 = vpop.f32.mrf.mxu0
          %v2453 = vadd.f32 0.0, %v2452
          %v2454 = vpop.f32.mrf.mxu0
          %v2455 = vadd.f32 0.0, %v2454
          %2456 = vmatmul.bf16.gmra.mxu0 %v2290
          %v2457 = vpop.f32.mrf.mxu0
          %v2458 = vadd.f32 0.0, %v2457
          %v2459 = vpop.f32.mrf.mxu0
          %v2460 = vadd.f32 0.0, %v2459
          %2461 = vmatmul.bf16.gmra.mxu0 %v2292
          %v2462 = vpop.f32.mrf.mxu0
          %v2463 = vadd.f32 0.0, %v2462
          %v2464 = vpop.f32.mrf.mxu0
          %v2465 = vadd.f32 0.0, %v2464
          %2466 = vmatmul.bf16.gmra.mxu0 %v2294
          %v2467 = vpop.f32.mrf.mxu0
          %v2468 = vadd.f32 0.0, %v2467
          %v2469 = vpop.f32.mrf.mxu0
          %v2470 = vadd.f32 0.0, %v2469
          %2471 = vmatmul.bf16.gmra.mxu0 %v2296
          %v2472 = vpop.f32.mrf.mxu0
          %v2473 = vadd.f32 0.0, %v2472
          %v2474 = vpop.f32.mrf.mxu0
          %v2475 = vadd.f32 0.0, %v2474
          %2476 = vmatmul.bf16.gmra.mxu0 %v2298
          %v2477 = vpop.f32.mrf.mxu0
          %v2478 = vadd.f32 0.0, %v2477
          %v2479 = vpop.f32.mrf.mxu0
          %v2480 = vadd.f32 0.0, %v2479
          %2481 = vmatmul.bf16.gmra.mxu0 %v2300
          %v2482 = vpop.f32.mrf.mxu0
          %v2483 = vadd.f32 0.0, %v2482
          %v2484 = vpop.f32.mrf.mxu0
          %v2485 = vadd.f32 0.0, %v2484
          %2486 = vdwg.mxu0
          %2487 = vmatpush.bf16.msra.mxu0 %v2381
          %2488 = vmatpush.bf16.msra.mxu0 %v2380
          %2489 = vmatpush.bf16.msra.mxu0 %v2379
          %2490 = vmatpush.bf16.msra.mxu0 %v2378
          %2491 = vmatpush.bf16.msra.mxu0 %v2377
          %2492 = vmatpush.bf16.msra.mxu0 %v2376
          %2493 = vmatpush.bf16.msra.mxu0 %v2375
          %2494 = vmatpush.bf16.msra.mxu0 %v2374
          %2495 = vmatmul.bf16.gmra.mxu0 %v2271
          %v2496 = vpop.f32.mrf.mxu0
          %v2497 = vadd.f32 %v2408, %v2496
          %v2498 = vpop.f32.mrf.mxu0
          %v2499 = vadd.f32 %v2410, %v2498
          %2500 = vmatmul.bf16.gmra.mxu0 %v2273
          %v2501 = vpop.f32.mrf.mxu0
          %v2502 = vadd.f32 %v2413, %v2501
          %v2503 = vpop.f32.mrf.mxu0
          %v2504 = vadd.f32 %v2415, %v2503
          %2505 = vmatmul.bf16.gmra.mxu0 %v2275
          %v2506 = vpop.f32.mrf.mxu0
          %v2507 = vadd.f32 %v2418, %v2506
          %v2508 = vpop.f32.mrf.mxu0
          %v2509 = vadd.f32 %v2420, %v2508
          %2510 = vmatmul.bf16.gmra.mxu0 %v2277
          %v2511 = vpop.f32.mrf.mxu0
          %v2512 = vadd.f32 %v2423, %v2511
          %v2513 = vpop.f32.mrf.mxu0
          %v2514 = vadd.f32 %v2425, %v2513
          %2515 = vmatmul.bf16.gmra.mxu0 %v2279
          %v2516 = vpop.f32.mrf.mxu0
          %v2517 = vadd.f32 %v2428, %v2516
          %v2518 = vpop.f32.mrf.mxu0
          %v2519 = vadd.f32 %v2430, %v2518
          %2520 = vmatmul.bf16.gmra.mxu0 %v2281
          %v2521 = vpop.f32.mrf.mxu0
          %v2522 = vadd.f32 %v2433, %v2521
          %v2523 = vpop.f32.mrf.mxu0
          %v2524 = vadd.f32 %v2435, %v2523
          %2525 = vmatmul.bf16.gmra.mxu0 %v2283
          %v2526 = vpop.f32.mrf.mxu0
          %v2527 = vadd.f32 %v2438, %v2526
          %v2528 = vpop.f32.mrf.mxu0
          %v2529 = vadd.f32 %v2440, %v2528
          %2530 = vmatmul.bf16.gmra.mxu0 %v2285
          %v2531 = vpop.f32.mrf.mxu0
          %v2532 = vadd.f32 %v2443, %v2531
          %v2533 = vpop.f32.mrf.mxu0
          %v2534 = vadd.f32 %v2445, %v2533
          %2535 = vmatmul.bf16.gmra.mxu0 %v2287
          %v2536 = vpop.f32.mrf.mxu0
          %v2537 = vadd.f32 %v2448, %v2536
          %v2538 = vpop.f32.mrf.mxu0
          %v2539 = vadd.f32 %v2450, %v2538
          %2540 = vmatmul.bf16.gmra.mxu0 %v2289
          %v2541 = vpop.f32.mrf.mxu0
          %v2542 = vadd.f32 %v2453, %v2541
          %v2543 = vpop.f32.mrf.mxu0
          %v2544 = vadd.f32 %v2455, %v2543
          %2545 = vmatmul.bf16.gmra.mxu0 %v2291
          %v2546 = vpop.f32.mrf.mxu0
          %v2547 = vadd.f32 %v2458, %v2546
          %v2548 = vpop.f32.mrf.mxu0
          %v2549 = vadd.f32 %v2460, %v2548
          %2550 = vmatmul.bf16.gmra.mxu0 %v2293
          %v2551 = vpop.f32.mrf.mxu0
          %v2552 = vadd.f32 %v2463, %v2551
          %v2553 = vpop.f32.mrf.mxu0
          %v2554 = vadd.f32 %v2465, %v2553
          %2555 = vmatmul.bf16.gmra.mxu0 %v2295
          %v2556 = vpop.f32.mrf.mxu0
          %v2557 = vadd.f32 %v2468, %v2556
          %v2558 = vpop.f32.mrf.mxu0
          %v2559 = vadd.f32 %v2470, %v2558
          %2560 = vmatmul.bf16.gmra.mxu0 %v2297
          %v2561 = vpop.f32.mrf.mxu0
          %v2562 = vadd.f32 %v2473, %v2561
          %v2563 = vpop.f32.mrf.mxu0
          %v2564 = vadd.f32 %v2475, %v2563
          %2565 = vmatmul.bf16.gmra.mxu0 %v2299
          %v2566 = vpop.f32.mrf.mxu0
          %v2567 = vadd.f32 %v2478, %v2566
          %v2568 = vpop.f32.mrf.mxu0
          %v2569 = vadd.f32 %v2480, %v2568
          %2570 = vmatmul.bf16.gmra.mxu0 %v2301
          %v2571 = vpop.f32.mrf.mxu0
          %v2572 = vadd.f32 %v2483, %v2571
          %v2573 = vpop.f32.mrf.mxu0
          %v2574 = vadd.f32 %v2485, %v2573
          %2575 = vdwg.mxu0
          %v2576 = vadd.f32 %v2238, %v2497
          %v2577 = vadd.f32 %v2239, %v2499
          %v2578 = vadd.f32 %v2240, %v2502
          %v2579 = vadd.f32 %v2241, %v2504
          %v2580 = vadd.f32 %v2242, %v2507
          %v2581 = vadd.f32 %v2243, %v2509
          %v2582 = vadd.f32 %v2244, %v2512
          %v2583 = vadd.f32 %v2245, %v2514
          %v2584 = vadd.f32 %v2246, %v2517
          %v2585 = vadd.f32 %v2247, %v2519
          %v2586 = vadd.f32 %v2248, %v2522
          %v2587 = vadd.f32 %v2249, %v2524
          %v2588 = vadd.f32 %v2250, %v2527
          %v2589 = vadd.f32 %v2251, %v2529
          %v2590 = vadd.f32 %v2252, %v2532
          %v2591 = vadd.f32 %v2253, %v2534
          %v2592 = vadd.f32 %v2254, %v2537
          %v2593 = vadd.f32 %v2255, %v2539
          %v2594 = vadd.f32 %v2256, %v2542
          %v2595 = vadd.f32 %v2257, %v2544
          %v2596 = vadd.f32 %v2258, %v2547
          %v2597 = vadd.f32 %v2259, %v2549
          %v2598 = vadd.f32 %v2260, %v2552
          %v2599 = vadd.f32 %v2261, %v2554
          %v2600 = vadd.f32 %v2262, %v2557
          %v2601 = vadd.f32 %v2263, %v2559
          %v2602 = vadd.f32 %v2264, %v2562
          %v2603 = vadd.f32 %v2265, %v2564
          %v2604 = vadd.f32 %v2266, %v2567
          %v2605 = vadd.f32 %v2267, %v2569
          %v2606 = vadd.f32 %v2268, %v2572
          %v2607 = vadd.f32 %v2269, %v2574
          %2608 = vst [vmem:[#allocation5] sm:$0xff] %v2576
          %2609 = vst [vmem:[#allocation5 + $0x8] sm:$0xff] %v2577
          %2610 = vst [vmem:[#allocation5 + $0x10] sm:$0xff] %v2578
          %2611 = vst [vmem:[#allocation5 + $0x18] sm:$0xff] %v2579
          %2612 = vst [vmem:[#allocation5 + $0x20] sm:$0xff] %v2580
          %2613 = vst [vmem:[#allocation5 + $0x28] sm:$0xff] %v2581
          %2614 = vst [vmem:[#allocation5 + $0x30] sm:$0xff] %v2582
          %2615 = vst [vmem:[#allocation5 + $0x38] sm:$0xff] %v2583
          %2616 = vst [vmem:[#allocation5 + $0x40] sm:$0xff] %v2584
          %2617 = vst [vmem:[#allocation5 + $0x48] sm:$0xff] %v2585
          %2618 = vst [vmem:[#allocation5 + $0x50] sm:$0xff] %v2586
          %2619 = vst [vmem:[#allocation5 + $0x58] sm:$0xff] %v2587
          %2620 = vst [vmem:[#allocation5 + $0x60] sm:$0xff] %v2588
          %2621 = vst [vmem:[#allocation5 + $0x68] sm:$0xff] %v2589
          %2622 = vst [vmem:[#allocation5 + $0x70] sm:$0xff] %v2590
          %2623 = vst [vmem:[#allocation5 + $0x78] sm:$0xff] %v2591
          %2624 = vst [vmem:[#allocation5 + $0x80] sm:$0xff] %v2592
          %2625 = vst [vmem:[#allocation5 + $0x88] sm:$0xff] %v2593
          %2626 = vst [vmem:[#allocation5 + $0x90] sm:$0xff] %v2594
          %2627 = vst [vmem:[#allocation5 + $0x98] sm:$0xff] %v2595
          %2628 = vst [vmem:[#allocation5 + $0xa0] sm:$0xff] %v2596
          %2629 = vst [vmem:[#allocation5 + $0xa8] sm:$0xff] %v2597
          %2630 = vst [vmem:[#allocation5 + $0xb0] sm:$0xff] %v2598
          %2631 = vst [vmem:[#allocation5 + $0xb8] sm:$0xff] %v2599
          %2632 = vst [vmem:[#allocation5 + $0xc0] sm:$0xff] %v2600
          %2633 = vst [vmem:[#allocation5 + $0xc8] sm:$0xff] %v2601
          %2634 = vst [vmem:[#allocation5 + $0xd0] sm:$0xff] %v2602
          %2635 = vst [vmem:[#allocation5 + $0xd8] sm:$0xff] %v2603
          %2636 = vst [vmem:[#allocation5 + $0xe0] sm:$0xff] %v2604
          %2637 = vst [vmem:[#allocation5 + $0xe8] sm:$0xff] %v2605
          %2638 = vst [vmem:[#allocation5 + $0xf0] sm:$0xff] %v2606
          %2639 = vst [vmem:[#allocation5 + $0xf8] sm:$0xff] %v2607
          %2640 = vst.msk [vmem:[#allocation3] sm:$0xff] %vm2013, %v1341
          %2641 = vst.msk [vmem:[#allocation3 + $0x8] sm:$0xff] %vm2013, %v1342
          %2642 = vst.msk [vmem:[#allocation3 + $0x10] sm:$0xff] %vm2013, %v1343
          %2643 = vst.msk [vmem:[#allocation3 + $0x18] sm:$0xff] %vm2013, %v1344
          %2644 = vst.msk [vmem:[#allocation3 + $0x20] sm:$0xff] %vm2013, %v1345
          %2645 = vst.msk [vmem:[#allocation3 + $0x28] sm:$0xff] %vm2013, %v1346
          %2646 = vst.msk [vmem:[#allocation3 + $0x30] sm:$0xff] %vm2013, %v1347
          %2647 = vst.msk [vmem:[#allocation3 + $0x38] sm:$0xff] %vm2013, %v1348
          %2648 = vst.msk [vmem:[#allocation3 + $0x40] sm:$0xff] %vm2013, %v1349
          %2649 = vst.msk [vmem:[#allocation3 + $0x48] sm:$0xff] %vm2013, %v1350
          %2650 = vst.msk [vmem:[#allocation3 + $0x50] sm:$0xff] %vm2013, %v1351
          %2651 = vst.msk [vmem:[#allocation3 + $0x58] sm:$0xff] %vm2013, %v1352
          %2652 = vst.msk [vmem:[#allocation3 + $0x60] sm:$0xff] %vm2013, %v1353
          %2653 = vst.msk [vmem:[#allocation3 + $0x68] sm:$0xff] %vm2013, %v1354
          %2654 = vst.msk [vmem:[#allocation3 + $0x70] sm:$0xff] %vm2013, %v1355
          %2655 = vst.msk [vmem:[#allocation3 + $0x78] sm:$0xff] %vm2013, %v1356
          %2656 = vst.msk [vmem:[#allocation3 + $0x80] sm:$0xff] %vm2013, %v1357
          %2657 = vst.msk [vmem:[#allocation3 + $0x88] sm:$0xff] %vm2013, %v1358
          %2658 = vst.msk [vmem:[#allocation3 + $0x90] sm:$0xff] %vm2013, %v1359
          %2659 = vst.msk [vmem:[#allocation3 + $0x98] sm:$0xff] %vm2013, %v1360
          %2660 = vst.msk [vmem:[#allocation3 + $0xa0] sm:$0xff] %vm2013, %v1361
          %2661 = vst.msk [vmem:[#allocation3 + $0xa8] sm:$0xff] %vm2013, %v1362
          %2662 = vst.msk [vmem:[#allocation3 + $0xb0] sm:$0xff] %vm2013, %v1363
          %2663 = vst.msk [vmem:[#allocation3 + $0xb8] sm:$0xff] %vm2013, %v1364
          %2664 = vst.msk [vmem:[#allocation3 + $0xc0] sm:$0xff] %vm2013, %v1365
          %2665 = vst.msk [vmem:[#allocation3 + $0xc8] sm:$0xff] %vm2013, %v1366
          %2666 = vst.msk [vmem:[#allocation3 + $0xd0] sm:$0xff] %vm2013, %v1367
          %2667 = vst.msk [vmem:[#allocation3 + $0xd8] sm:$0xff] %vm2013, %v1368
          %2668 = vst.msk [vmem:[#allocation3 + $0xe0] sm:$0xff] %vm2013, %v1369
          %2669 = vst.msk [vmem:[#allocation3 + $0xe8] sm:$0xff] %vm2013, %v1370
          %2670 = vst.msk [vmem:[#allocation3 + $0xf0] sm:$0xff] %vm2013, %v1371
          %2671 = vst.msk [vmem:[#allocation3 + $0xf8] sm:$0xff] %vm2013, %v1372
        $region48: #{attention_module_forward.3} parent=35 // pred_fallthru
          _
        %p2672 = scmp.eq.s32.totalorder %s28, %s27
        // Predicated region
        $region49: #{attention_module_forward.3} parent=35 // pred_check
          %p2673 = pneg %p2672
        $region50: #{attention_module_forward.3} parent=35 // pred_check_branch
          %2675 = sbr.rel (%p2673) target = $region52
        $region51: #{attention_module_forward.3} parent=35 // pred_region
          %v2676 = vld [vmem:[%s326] sm:$0xf]
          %v2677 = vld [vmem:[%s326 + $0x4] sm:$0xf]
          %v2678 = vld [vmem:[%s326 + $0x8] sm:$0xf]
          %v2679 = vld [vmem:[%s326 + $0xc] sm:$0xf]
          %v2680 = vld [vmem:[%s326 + $0x10] sm:$0xf]
          %v2681 = vld [vmem:[%s326 + $0x14] sm:$0xf]
          %v2682 = vld [vmem:[%s326 + $0x18] sm:$0xf]
          %v2683 = vld [vmem:[%s326 + $0x1c] sm:$0xf]
          %v2684 = vld [vmem:[%s326 + $0x20] sm:$0xf]
          %v2685 = vld [vmem:[%s326 + $0x24] sm:$0xf]
          %v2686 = vld [vmem:[%s326 + $0x28] sm:$0xf]
          %v2687 = vld [vmem:[%s326 + $0x2c] sm:$0xf]
          %v2688 = vld [vmem:[%s326 + $0x30] sm:$0xf]
          %v2689 = vld [vmem:[%s326 + $0x34] sm:$0xf]
          %v2690 = vld [vmem:[%s326 + $0x38] sm:$0xf]
          %v2691 = vld [vmem:[%s326 + $0x3c] sm:$0xf]
          %v2692 = vld [vmem:[%s326 + $0x40] sm:$0xf]
          %v2693 = vld [vmem:[%s326 + $0x44] sm:$0xf]
          %v2694 = vld [vmem:[%s326 + $0x48] sm:$0xf]
          %v2695 = vld [vmem:[%s326 + $0x4c] sm:$0xf]
          %v2696 = vld [vmem:[%s326 + $0x50] sm:$0xf]
          %v2697 = vld [vmem:[%s326 + $0x54] sm:$0xf]
          %v2698 = vld [vmem:[%s326 + $0x58] sm:$0xf]
          %v2699 = vld [vmem:[%s326 + $0x5c] sm:$0xf]
          %v2700 = vld [vmem:[%s326 + $0x60] sm:$0xf]
          %v2701 = vld [vmem:[%s326 + $0x64] sm:$0xf]
          %v2702 = vld [vmem:[%s326 + $0x68] sm:$0xf]
          %v2703 = vld [vmem:[%s326 + $0x6c] sm:$0xf]
          %v2704 = vld [vmem:[%s326 + $0x70] sm:$0xf]
          %v2705 = vld [vmem:[%s326 + $0x74] sm:$0xf]
          %v2706 = vld [vmem:[%s326 + $0x78] sm:$0xf]
          %v2707 = vld [vmem:[%s326 + $0x7c] sm:$0xf]
          %v2708 = vld [vmem:[%s340] sm:$0xf]
          %v2709 = vld [vmem:[%s340 + $0x4] sm:$0xf]
          %v2710 = vld [vmem:[%s340 + $0x8] sm:$0xf]
          %v2711 = vld [vmem:[%s340 + $0xc] sm:$0xf]
          %v2712 = vld [vmem:[%s340 + $0x10] sm:$0xf]
          %v2713 = vld [vmem:[%s340 + $0x14] sm:$0xf]
          %v2714 = vld [vmem:[%s340 + $0x18] sm:$0xf]
          %v2715 = vld [vmem:[%s340 + $0x1c] sm:$0xf]
          %v2716 = vld [vmem:[%s340 + $0x20] sm:$0xf]
          %v2717 = vld [vmem:[%s340 + $0x24] sm:$0xf]
          %v2718 = vld [vmem:[%s340 + $0x28] sm:$0xf]
          %v2719 = vld [vmem:[%s340 + $0x2c] sm:$0xf]
          %v2720 = vld [vmem:[%s340 + $0x30] sm:$0xf]
          %v2721 = vld [vmem:[%s340 + $0x34] sm:$0xf]
          %v2722 = vld [vmem:[%s340 + $0x38] sm:$0xf]
          %v2723 = vld [vmem:[%s340 + $0x3c] sm:$0xf]
          %v2724 = vld [vmem:[%s340 + $0x40] sm:$0xf]
          %v2725 = vld [vmem:[%s340 + $0x44] sm:$0xf]
          %v2726 = vld [vmem:[%s340 + $0x48] sm:$0xf]
          %v2727 = vld [vmem:[%s340 + $0x4c] sm:$0xf]
          %v2728 = vld [vmem:[%s340 + $0x50] sm:$0xf]
          %v2729 = vld [vmem:[%s340 + $0x54] sm:$0xf]
          %v2730 = vld [vmem:[%s340 + $0x58] sm:$0xf]
          %v2731 = vld [vmem:[%s340 + $0x5c] sm:$0xf]
          %v2732 = vld [vmem:[%s340 + $0x60] sm:$0xf]
          %v2733 = vld [vmem:[%s340 + $0x64] sm:$0xf]
          %v2734 = vld [vmem:[%s340 + $0x68] sm:$0xf]
          %v2735 = vld [vmem:[%s340 + $0x6c] sm:$0xf]
          %v2736 = vld [vmem:[%s340 + $0x70] sm:$0xf]
          %v2737 = vld [vmem:[%s340 + $0x74] sm:$0xf]
          %v2738 = vld [vmem:[%s340 + $0x78] sm:$0xf]
          %v2739 = vld [vmem:[%s340 + $0x7c] sm:$0xf]
          %v2740 = vld [vmem:[#allocation2] sm:$0xf]
          %v2741 = vld [vmem:[#allocation2 + $0x4] sm:$0xf]
          %v2742 = vld [vmem:[#allocation2 + $0x8] sm:$0xf]
          %v2743 = vld [vmem:[#allocation2 + $0xc] sm:$0xf]
          %v2744 = vld [vmem:[#allocation2 + $0x10] sm:$0xf]
          %v2745 = vld [vmem:[#allocation2 + $0x14] sm:$0xf]
          %v2746 = vld [vmem:[#allocation2 + $0x18] sm:$0xf]
          %v2747 = vld [vmem:[#allocation2 + $0x1c] sm:$0xf]
          %v2748 = vld [vmem:[#allocation2 + $0x20] sm:$0xf]
          %v2749 = vld [vmem:[#allocation2 + $0x24] sm:$0xf]
          %v2750 = vld [vmem:[#allocation2 + $0x28] sm:$0xf]
          %v2751 = vld [vmem:[#allocation2 + $0x2c] sm:$0xf]
          %v2752 = vld [vmem:[#allocation2 + $0x30] sm:$0xf]
          %v2753 = vld [vmem:[#allocation2 + $0x34] sm:$0xf]
          %v2754 = vld [vmem:[#allocation2 + $0x38] sm:$0xf]
          %v2755 = vld [vmem:[#allocation2 + $0x3c] sm:$0xf]
          %v2756 = vld [vmem:[#allocation2 + $0x40] sm:$0xf]
          %v2757 = vld [vmem:[#allocation2 + $0x44] sm:$0xf]
          %v2758 = vld [vmem:[#allocation2 + $0x48] sm:$0xf]
          %v2759 = vld [vmem:[#allocation2 + $0x4c] sm:$0xf]
          %v2760 = vld [vmem:[#allocation2 + $0x50] sm:$0xf]
          %v2761 = vld [vmem:[#allocation2 + $0x54] sm:$0xf]
          %v2762 = vld [vmem:[#allocation2 + $0x58] sm:$0xf]
          %v2763 = vld [vmem:[#allocation2 + $0x5c] sm:$0xf]
          %v2764 = vld [vmem:[#allocation2 + $0x60] sm:$0xf]
          %v2765 = vld [vmem:[#allocation2 + $0x64] sm:$0xf]
          %v2766 = vld [vmem:[#allocation2 + $0x68] sm:$0xf]
          %v2767 = vld [vmem:[#allocation2 + $0x6c] sm:$0xf]
          %v2768 = vld [vmem:[#allocation2 + $0x70] sm:$0xf]
          %v2769 = vld [vmem:[#allocation2 + $0x74] sm:$0xf]
          %v2770 = vld [vmem:[#allocation2 + $0x78] sm:$0xf]
          %v2771 = vld [vmem:[#allocation2 + $0x7c] sm:$0xf]
          %v2804 = vunpack.c.l.b16 %v2740
          %v2805 = vunpack.c.l.b16 %v2741
          %v2806 = vunpack.c.l.b16 %v2742
          %v2807 = vunpack.c.l.b16 %v2743
          %v2808 = vunpack.c.l.b16 %v2744
          %v2809 = vunpack.c.l.b16 %v2745
          %v2810 = vunpack.c.l.b16 %v2746
          %v2811 = vunpack.c.l.b16 %v2747
          %v2812 = vunpack.c.l.b16 %v2748
          %v2813 = vunpack.c.l.b16 %v2749
          %v2814 = vunpack.c.l.b16 %v2750
          %v2815 = vunpack.c.l.b16 %v2751
          %v2816 = vunpack.c.l.b16 %v2752
          %v2817 = vunpack.c.l.b16 %v2753
          %v2818 = vunpack.c.l.b16 %v2754
          %v2819 = vunpack.c.l.b16 %v2755
          %v2820 = vunpack.c.l.b16 %v2756
          %v2821 = vunpack.c.l.b16 %v2757
          %v2822 = vunpack.c.l.b16 %v2758
          %v2823 = vunpack.c.l.b16 %v2759
          %v2824 = vunpack.c.l.b16 %v2760
          %v2825 = vunpack.c.l.b16 %v2761
          %v2826 = vunpack.c.l.b16 %v2762
          %v2827 = vunpack.c.l.b16 %v2763
          %v2828 = vunpack.c.l.b16 %v2764
          %v2829 = vunpack.c.l.b16 %v2765
          %v2830 = vunpack.c.l.b16 %v2766
          %v2831 = vunpack.c.l.b16 %v2767
          %v2832 = vunpack.c.l.b16 %v2768
          %v2833 = vunpack.c.l.b16 %v2769
          %v2834 = vunpack.c.l.b16 %v2770
          %v2835 = vunpack.c.l.b16 %v2771
          %v2836 = vpack.c.b16 %v2805, %v2804
          %v2837 = vpack.c.b16 %v2807, %v2806
          %v2838 = vpack.c.b16 %v2809, %v2808
          %v2839 = vpack.c.b16 %v2811, %v2810
          %v2840 = vpack.c.b16 %v2813, %v2812
          %v2841 = vpack.c.b16 %v2815, %v2814
          %v2842 = vpack.c.b16 %v2817, %v2816
          %v2843 = vpack.c.b16 %v2819, %v2818
          %v2844 = vpack.c.b16 %v2821, %v2820
          %v2845 = vpack.c.b16 %v2823, %v2822
          %v2846 = vpack.c.b16 %v2825, %v2824
          %v2847 = vpack.c.b16 %v2827, %v2826
          %v2848 = vpack.c.b16 %v2829, %v2828
          %v2849 = vpack.c.b16 %v2831, %v2830
          %v2850 = vpack.c.b16 %v2833, %v2832
          %v2851 = vpack.c.b16 %v2835, %v2834
          %v2900 = vunpack.c.l.b16 %v2676
          %v2901 = vunpack.c.l.b16 %v2677
          %v2902 = vunpack.c.l.b16 %v2678
          %v2903 = vunpack.c.l.b16 %v2679
          %v2904 = vunpack.c.l.b16 %v2680
          %v2905 = vunpack.c.l.b16 %v2681
          %v2906 = vunpack.c.l.b16 %v2682
          %v2907 = vunpack.c.l.b16 %v2683
          %v2908 = vunpack.c.l.b16 %v2684
          %v2909 = vunpack.c.l.b16 %v2685
          %v2910 = vunpack.c.l.b16 %v2686
          %v2911 = vunpack.c.l.b16 %v2687
          %v2912 = vunpack.c.l.b16 %v2688
          %v2913 = vunpack.c.l.b16 %v2689
          %v2914 = vunpack.c.l.b16 %v2690
          %v2915 = vunpack.c.l.b16 %v2691
          %v2916 = vunpack.c.l.b16 %v2692
          %v2917 = vunpack.c.l.b16 %v2693
          %v2918 = vunpack.c.l.b16 %v2694
          %v2919 = vunpack.c.l.b16 %v2695
          %v2920 = vunpack.c.l.b16 %v2696
          %v2921 = vunpack.c.l.b16 %v2697
          %v2922 = vunpack.c.l.b16 %v2698
          %v2923 = vunpack.c.l.b16 %v2699
          %v2924 = vunpack.c.l.b16 %v2700
          %v2925 = vunpack.c.l.b16 %v2701
          %v2926 = vunpack.c.l.b16 %v2702
          %v2927 = vunpack.c.l.b16 %v2703
          %v2928 = vunpack.c.l.b16 %v2704
          %v2929 = vunpack.c.l.b16 %v2705
          %v2930 = vunpack.c.l.b16 %v2706
          %v2931 = vunpack.c.l.b16 %v2707
          %v2932 = vpack.c.b16 %v2901, %v2900
          %v2933 = vpack.c.b16 %v2903, %v2902
          %v2934 = vpack.c.b16 %v2905, %v2904
          %v2935 = vpack.c.b16 %v2907, %v2906
          %v2936 = vpack.c.b16 %v2909, %v2908
          %v2937 = vpack.c.b16 %v2911, %v2910
          %v2938 = vpack.c.b16 %v2913, %v2912
          %v2939 = vpack.c.b16 %v2915, %v2914
          %v2940 = vpack.c.b16 %v2917, %v2916
          %v2941 = vpack.c.b16 %v2919, %v2918
          %v2942 = vpack.c.b16 %v2921, %v2920
          %v2943 = vpack.c.b16 %v2923, %v2922
          %v2944 = vpack.c.b16 %v2925, %v2924
          %v2945 = vpack.c.b16 %v2927, %v2926
          %v2946 = vpack.c.b16 %v2929, %v2928
          %v2947 = vpack.c.b16 %v2931, %v2930
          %2964 = vmatpush.bf16.xpose.msra.mxu0 %v2939
          %2965 = vmatpush.bf16.xpose.msra.mxu0 %v2938
          %2966 = vmatpush.bf16.xpose.msra.mxu0 %v2937
          %2967 = vmatpush.bf16.xpose.msra.mxu0 %v2936
          %2968 = vmatpush.bf16.xpose.msra.mxu0 %v2935
          %2969 = vmatpush.bf16.xpose.msra.mxu0 %v2934
          %2970 = vmatpush.bf16.xpose.msra.mxu0 %v2933
          %2971 = vmatpush.bf16.xpose.msra.mxu0 %v2932
          %2972 = vmatmul.bf16.gmra.mxu0 %v2836
          %v2973 = vpop.f32.mrf.mxu0
          %v2974 = vadd.f32 0.0, %v2973
          %v2975 = vpop.f32.mrf.mxu0
          %v2976 = vadd.f32 0.0, %v2975
          %2977 = vmatmul.bf16.gmra.mxu0 %v2837
          %v2978 = vpop.f32.mrf.mxu0
          %v2979 = vadd.f32 0.0, %v2978
          %v2980 = vpop.f32.mrf.mxu0
          %v2981 = vadd.f32 0.0, %v2980
          %2982 = vmatmul.bf16.gmra.mxu0 %v2838
          %v2983 = vpop.f32.mrf.mxu0
          %v2984 = vadd.f32 0.0, %v2983
          %v2985 = vpop.f32.mrf.mxu0
          %v2986 = vadd.f32 0.0, %v2985
          %2987 = vmatmul.bf16.gmra.mxu0 %v2839
          %v2988 = vpop.f32.mrf.mxu0
          %v2989 = vadd.f32 0.0, %v2988
          %v2990 = vpop.f32.mrf.mxu0
          %v2991 = vadd.f32 0.0, %v2990
          %2992 = vmatmul.bf16.gmra.mxu0 %v2840
          %v2993 = vpop.f32.mrf.mxu0
          %v2994 = vadd.f32 0.0, %v2993
          %v2995 = vpop.f32.mrf.mxu0
          %v2996 = vadd.f32 0.0, %v2995
          %2997 = vmatmul.bf16.gmra.mxu0 %v2841
          %v2998 = vpop.f32.mrf.mxu0
          %v2999 = vadd.f32 0.0, %v2998
          %v3000 = vpop.f32.mrf.mxu0
          %v3001 = vadd.f32 0.0, %v3000
          %3002 = vmatmul.bf16.gmra.mxu0 %v2842
          %v3003 = vpop.f32.mrf.mxu0
          %v3004 = vadd.f32 0.0, %v3003
          %v3005 = vpop.f32.mrf.mxu0
          %v3006 = vadd.f32 0.0, %v3005
          %3007 = vmatmul.bf16.gmra.mxu0 %v2843
          %v3008 = vpop.f32.mrf.mxu0
          %v3009 = vadd.f32 0.0, %v3008
          %v3010 = vpop.f32.mrf.mxu0
          %v3011 = vadd.f32 0.0, %v3010
          %3012 = vmatmul.bf16.gmra.mxu0 %v2844
          %v3013 = vpop.f32.mrf.mxu0
          %v3014 = vadd.f32 0.0, %v3013
          %v3015 = vpop.f32.mrf.mxu0
          %v3016 = vadd.f32 0.0, %v3015
          %3017 = vmatmul.bf16.gmra.mxu0 %v2845
          %v3018 = vpop.f32.mrf.mxu0
          %v3019 = vadd.f32 0.0, %v3018
          %v3020 = vpop.f32.mrf.mxu0
          %v3021 = vadd.f32 0.0, %v3020
          %3022 = vmatmul.bf16.gmra.mxu0 %v2846
          %v3023 = vpop.f32.mrf.mxu0
          %v3024 = vadd.f32 0.0, %v3023
          %v3025 = vpop.f32.mrf.mxu0
          %v3026 = vadd.f32 0.0, %v3025
          %3027 = vmatmul.bf16.gmra.mxu0 %v2847
          %v3028 = vpop.f32.mrf.mxu0
          %v3029 = vadd.f32 0.0, %v3028
          %v3030 = vpop.f32.mrf.mxu0
          %v3031 = vadd.f32 0.0, %v3030
          %3032 = vmatmul.bf16.gmra.mxu0 %v2848
          %v3033 = vpop.f32.mrf.mxu0
          %v3034 = vadd.f32 0.0, %v3033
          %v3035 = vpop.f32.mrf.mxu0
          %v3036 = vadd.f32 0.0, %v3035
          %3037 = vmatmul.bf16.gmra.mxu0 %v2849
          %v3038 = vpop.f32.mrf.mxu0
          %v3039 = vadd.f32 0.0, %v3038
          %v3040 = vpop.f32.mrf.mxu0
          %v3041 = vadd.f32 0.0, %v3040
          %3042 = vmatmul.bf16.gmra.mxu0 %v2850
          %v3043 = vpop.f32.mrf.mxu0
          %v3044 = vadd.f32 0.0, %v3043
          %v3045 = vpop.f32.mrf.mxu0
          %v3046 = vadd.f32 0.0, %v3045
          %3047 = vmatmul.bf16.gmra.mxu0 %v2851
          %v3048 = vpop.f32.mrf.mxu0
          %v3049 = vadd.f32 0.0, %v3048
          %v3050 = vpop.f32.mrf.mxu0
          %v3051 = vadd.f32 0.0, %v3050
          %3052 = vdwg.mxu0
          %3053 = vmatpush.bf16.xpose.msra.mxu0 %v2947
          %3054 = vmatpush.bf16.xpose.msra.mxu0 %v2946
          %3055 = vmatpush.bf16.xpose.msra.mxu0 %v2945
          %3056 = vmatpush.bf16.xpose.msra.mxu0 %v2944
          %3057 = vmatpush.bf16.xpose.msra.mxu0 %v2943
          %3058 = vmatpush.bf16.xpose.msra.mxu0 %v2942
          %3059 = vmatpush.bf16.xpose.msra.mxu0 %v2941
          %3060 = vmatpush.bf16.xpose.msra.mxu0 %v2940
          %3061 = vmatmul.bf16.gmra.mxu0 %v2836
          %v3062 = vpop.f32.mrf.mxu0
          %v3063 = vadd.f32 0.0, %v3062
          %v3064 = vpop.f32.mrf.mxu0
          %v3065 = vadd.f32 0.0, %v3064
          %3066 = vmatmul.bf16.gmra.mxu0 %v2837
          %v3067 = vpop.f32.mrf.mxu0
          %v3068 = vadd.f32 0.0, %v3067
          %v3069 = vpop.f32.mrf.mxu0
          %v3070 = vadd.f32 0.0, %v3069
          %3071 = vmatmul.bf16.gmra.mxu0 %v2838
          %v3072 = vpop.f32.mrf.mxu0
          %v3073 = vadd.f32 0.0, %v3072
          %v3074 = vpop.f32.mrf.mxu0
          %v3075 = vadd.f32 0.0, %v3074
          %3076 = vmatmul.bf16.gmra.mxu0 %v2839
          %v3077 = vpop.f32.mrf.mxu0
          %v3078 = vadd.f32 0.0, %v3077
          %v3079 = vpop.f32.mrf.mxu0
          %v3080 = vadd.f32 0.0, %v3079
          %3081 = vmatmul.bf16.gmra.mxu0 %v2840
          %v3082 = vpop.f32.mrf.mxu0
          %v3083 = vadd.f32 0.0, %v3082
          %v3084 = vpop.f32.mrf.mxu0
          %v3085 = vadd.f32 0.0, %v3084
          %3086 = vmatmul.bf16.gmra.mxu0 %v2841
          %v3087 = vpop.f32.mrf.mxu0
          %v3088 = vadd.f32 0.0, %v3087
          %v3089 = vpop.f32.mrf.mxu0
          %v3090 = vadd.f32 0.0, %v3089
          %3091 = vmatmul.bf16.gmra.mxu0 %v2842
          %v3092 = vpop.f32.mrf.mxu0
          %v3093 = vadd.f32 0.0, %v3092
          %v3094 = vpop.f32.mrf.mxu0
          %v3095 = vadd.f32 0.0, %v3094
          %3096 = vmatmul.bf16.gmra.mxu0 %v2843
          %v3097 = vpop.f32.mrf.mxu0
          %v3098 = vadd.f32 0.0, %v3097
          %v3099 = vpop.f32.mrf.mxu0
          %v3100 = vadd.f32 0.0, %v3099
          %3101 = vmatmul.bf16.gmra.mxu0 %v2844
          %v3102 = vpop.f32.mrf.mxu0
          %v3103 = vadd.f32 0.0, %v3102
          %v3104 = vpop.f32.mrf.mxu0
          %v3105 = vadd.f32 0.0, %v3104
          %3106 = vmatmul.bf16.gmra.mxu0 %v2845
          %v3107 = vpop.f32.mrf.mxu0
          %v3108 = vadd.f32 0.0, %v3107
          %v3109 = vpop.f32.mrf.mxu0
          %v3110 = vadd.f32 0.0, %v3109
          %3111 = vmatmul.bf16.gmra.mxu0 %v2846
          %v3112 = vpop.f32.mrf.mxu0
          %v3113 = vadd.f32 0.0, %v3112
          %v3114 = vpop.f32.mrf.mxu0
          %v3115 = vadd.f32 0.0, %v3114
          %3116 = vmatmul.bf16.gmra.mxu0 %v2847
          %v3117 = vpop.f32.mrf.mxu0
          %v3118 = vadd.f32 0.0, %v3117
          %v3119 = vpop.f32.mrf.mxu0
          %v3120 = vadd.f32 0.0, %v3119
          %3121 = vmatmul.bf16.gmra.mxu0 %v2848
          %v3122 = vpop.f32.mrf.mxu0
          %v3123 = vadd.f32 0.0, %v3122
          %v3124 = vpop.f32.mrf.mxu0
          %v3125 = vadd.f32 0.0, %v3124
          %3126 = vmatmul.bf16.gmra.mxu0 %v2849
          %v3127 = vpop.f32.mrf.mxu0
          %v3128 = vadd.f32 0.0, %v3127
          %v3129 = vpop.f32.mrf.mxu0
          %v3130 = vadd.f32 0.0, %v3129
          %3131 = vmatmul.bf16.gmra.mxu0 %v2850
          %v3132 = vpop.f32.mrf.mxu0
          %v3133 = vadd.f32 0.0, %v3132
          %v3134 = vpop.f32.mrf.mxu0
          %v3135 = vadd.f32 0.0, %v3134
          %3136 = vmatmul.bf16.gmra.mxu0 %v2851
          %v3137 = vpop.f32.mrf.mxu0
          %v3138 = vadd.f32 0.0, %v3137
          %v3139 = vpop.f32.mrf.mxu0
          %v3140 = vadd.f32 0.0, %v3139
          %3141 = vdwg.mxu0
          %s3142 = smul.u32 %s27, 256
          %v3143 = vlaneseq
          %v3144 = vshrl.u32 %v3143, 7
          %v3145 = vadd.s32 %v3144, 8
          %v3146 = vadd.s32 %v3144, 16
          %v3147 = vadd.s32 %v3144, 24
          %v3148 = vadd.s32 %v3144, 32
          %v3149 = vadd.s32 %v3144, 40
          %v3150 = vadd.s32 %v3144, 48
          %v3151 = vadd.s32 %v3144, 56
          %v3152 = vadd.s32 %v3144, 64
          %v3153 = vadd.s32 %v3144, 72
          %v3154 = vadd.s32 %v3144, 80
          %v3155 = vadd.s32 %v3144, 88
          %v3156 = vadd.s32 %v3144, 96
          %v3157 = vadd.s32 %v3144, 104
          %v3158 = vadd.s32 %v3144, 112
          %v3159 = vadd.s32 %v3144, 120
          %v3160 = vadd.s32 %v3144, 128
          %v3161 = vadd.s32 %v3144, 136
          %v3162 = vadd.s32 %v3144, 144
          %v3163 = vadd.s32 %v3144, 152
          %v3164 = vadd.s32 %v3144, 160
          %v3165 = vadd.s32 %v3144, 168
          %v3166 = vadd.s32 %v3144, 176
          %v3167 = vadd.s32 %v3144, 184
          %v3168 = vadd.s32 %v3144, 192
          %v3169 = vadd.s32 %v3144, 200
          %v3170 = vadd.s32 %v3144, 208
          %v3171 = vadd.s32 %v3144, 216
          %v3172 = vadd.s32 %v3144, 224
          %v3173 = vadd.s32 %v3144, 232
          %v3174 = vadd.s32 %v3144, 240
          %v3175 = vadd.s32 %v3144, 248
          %v3176 = vstv %s3142
          %v3177 = vadd.s32 %v3176, %v3144
          %v3178 = vadd.s32 %v3176, %v3145
          %v3179 = vadd.s32 %v3176, %v3146
          %v3180 = vadd.s32 %v3176, %v3147
          %v3181 = vadd.s32 %v3176, %v3148
          %v3182 = vadd.s32 %v3176, %v3149
          %v3183 = vadd.s32 %v3176, %v3150
          %v3184 = vadd.s32 %v3176, %v3151
          %v3185 = vadd.s32 %v3176, %v3152
          %v3186 = vadd.s32 %v3176, %v3153
          %v3187 = vadd.s32 %v3176, %v3154
          %v3188 = vadd.s32 %v3176, %v3155
          %v3189 = vadd.s32 %v3176, %v3156
          %v3190 = vadd.s32 %v3176, %v3157
          %v3191 = vadd.s32 %v3176, %v3158
          %v3192 = vadd.s32 %v3176, %v3159
          %v3193 = vadd.s32 %v3176, %v3160
          %v3194 = vadd.s32 %v3176, %v3161
          %v3195 = vadd.s32 %v3176, %v3162
          %v3196 = vadd.s32 %v3176, %v3163
          %v3197 = vadd.s32 %v3176, %v3164
          %v3198 = vadd.s32 %v3176, %v3165
          %v3199 = vadd.s32 %v3176, %v3166
          %v3200 = vadd.s32 %v3176, %v3167
          %v3201 = vadd.s32 %v3176, %v3168
          %v3202 = vadd.s32 %v3176, %v3169
          %v3203 = vadd.s32 %v3176, %v3170
          %v3204 = vadd.s32 %v3176, %v3171
          %v3205 = vadd.s32 %v3176, %v3172
          %v3206 = vadd.s32 %v3176, %v3173
          %v3207 = vadd.s32 %v3176, %v3174
          %v3208 = vadd.s32 %v3176, %v3175
          %s3209 = smul.u32 %s28, 256
          %v3210 = vlaneseq
          %v3211 = vand.u32 %v3210, 127
          %v3212 = vadd.s32 %v3211, 128
          %v3213 = vstv %s3209
          %v3214 = vadd.s32 %v3213, %v3211
          %v3215 = vadd.s32 %v3213, %v3212
          %vm3216 = vcmp.gt.s32.totalorder %v3214, %v3177
          %vm3217 = vcmp.gt.s32.totalorder %v3215, %v3177
          %vm3218 = vcmp.gt.s32.totalorder %v3214, %v3178
          %vm3219 = vcmp.gt.s32.totalorder %v3215, %v3178
          %vm3220 = vcmp.gt.s32.totalorder %v3214, %v3179
          %vm3221 = vcmp.gt.s32.totalorder %v3215, %v3179
          %vm3222 = vcmp.gt.s32.totalorder %v3214, %v3180
          %vm3223 = vcmp.gt.s32.totalorder %v3215, %v3180
          %vm3224 = vcmp.gt.s32.totalorder %v3214, %v3181
          %vm3225 = vcmp.gt.s32.totalorder %v3215, %v3181
          %vm3226 = vcmp.gt.s32.totalorder %v3214, %v3182
          %vm3227 = vcmp.gt.s32.totalorder %v3215, %v3182
          %vm3228 = vcmp.gt.s32.totalorder %v3214, %v3183
          %vm3229 = vcmp.gt.s32.totalorder %v3215, %v3183
          %vm3230 = vcmp.gt.s32.totalorder %v3214, %v3184
          %vm3231 = vcmp.gt.s32.totalorder %v3215, %v3184
          %vm3232 = vcmp.gt.s32.totalorder %v3214, %v3185
          %vm3233 = vcmp.gt.s32.totalorder %v3215, %v3185
          %vm3234 = vcmp.gt.s32.totalorder %v3214, %v3186
          %vm3235 = vcmp.gt.s32.totalorder %v3215, %v3186
          %vm3236 = vcmp.gt.s32.totalorder %v3214, %v3187
          %vm3237 = vcmp.gt.s32.totalorder %v3215, %v3187
          %vm3238 = vcmp.gt.s32.totalorder %v3214, %v3188
          %vm3239 = vcmp.gt.s32.totalorder %v3215, %v3188
          %vm3240 = vcmp.gt.s32.totalorder %v3214, %v3189
          %vm3241 = vcmp.gt.s32.totalorder %v3215, %v3189
          %vm3242 = vcmp.gt.s32.totalorder %v3214, %v3190
          %vm3243 = vcmp.gt.s32.totalorder %v3215, %v3190
          %vm3244 = vcmp.gt.s32.totalorder %v3214, %v3191
          %vm3245 = vcmp.gt.s32.totalorder %v3215, %v3191
          %vm3246 = vcmp.gt.s32.totalorder %v3214, %v3192
          %vm3247 = vcmp.gt.s32.totalorder %v3215, %v3192
          %vm3248 = vcmp.gt.s32.totalorder %v3214, %v3193
          %vm3249 = vcmp.gt.s32.totalorder %v3215, %v3193
          %vm3250 = vcmp.gt.s32.totalorder %v3214, %v3194
          %vm3251 = vcmp.gt.s32.totalorder %v3215, %v3194
          %vm3252 = vcmp.gt.s32.totalorder %v3214, %v3195
          %vm3253 = vcmp.gt.s32.totalorder %v3215, %v3195
          %vm3254 = vcmp.gt.s32.totalorder %v3214, %v3196
          %vm3255 = vcmp.gt.s32.totalorder %v3215, %v3196
          %vm3256 = vcmp.gt.s32.totalorder %v3214, %v3197
          %vm3257 = vcmp.gt.s32.totalorder %v3215, %v3197
          %vm3258 = vcmp.gt.s32.totalorder %v3214, %v3198
          %vm3259 = vcmp.gt.s32.totalorder %v3215, %v3198
          %vm3260 = vcmp.gt.s32.totalorder %v3214, %v3199
          %vm3261 = vcmp.gt.s32.totalorder %v3215, %v3199
          %vm3262 = vcmp.gt.s32.totalorder %v3214, %v3200
          %vm3263 = vcmp.gt.s32.totalorder %v3215, %v3200
          %vm3264 = vcmp.gt.s32.totalorder %v3214, %v3201
          %vm3265 = vcmp.gt.s32.totalorder %v3215, %v3201
          %vm3266 = vcmp.gt.s32.totalorder %v3214, %v3202
          %vm3267 = vcmp.gt.s32.totalorder %v3215, %v3202
          %vm3268 = vcmp.gt.s32.totalorder %v3214, %v3203
          %vm3269 = vcmp.gt.s32.totalorder %v3215, %v3203
          %vm3270 = vcmp.gt.s32.totalorder %v3214, %v3204
          %vm3271 = vcmp.gt.s32.totalorder %v3215, %v3204
          %vm3272 = vcmp.gt.s32.totalorder %v3214, %v3205
          %vm3273 = vcmp.gt.s32.totalorder %v3215, %v3205
          %vm3274 = vcmp.gt.s32.totalorder %v3214, %v3206
          %vm3275 = vcmp.gt.s32.totalorder %v3215, %v3206
          %vm3276 = vcmp.gt.s32.totalorder %v3214, %v3207
          %vm3277 = vcmp.gt.s32.totalorder %v3215, %v3207
          %vm3278 = vcmp.gt.s32.totalorder %v3214, %v3208
          %vm3279 = vcmp.gt.s32.totalorder %v3215, %v3208
          %v3280 = vsel %vm3216, -inf, %v2974
          %v3281 = vsel %vm3217, -inf, %v3063
          %v3282 = vsel %vm3218, -inf, %v2976
          %v3283 = vsel %vm3219, -inf, %v3065
          %v3284 = vsel %vm3220, -inf, %v2979
          %v3285 = vsel %vm3221, -inf, %v3068
          %v3286 = vsel %vm3222, -inf, %v2981
          %v3287 = vsel %vm3223, -inf, %v3070
          %v3288 = vsel %vm3224, -inf, %v2984
          %v3289 = vsel %vm3225, -inf, %v3073
          %v3290 = vsel %vm3226, -inf, %v2986
          %v3291 = vsel %vm3227, -inf, %v3075
          %v3292 = vsel %vm3228, -inf, %v2989
          %v3293 = vsel %vm3229, -inf, %v3078
          %v3294 = vsel %vm3230, -inf, %v2991
          %v3295 = vsel %vm3231, -inf, %v3080
          %v3296 = vsel %vm3232, -inf, %v2994
          %v3297 = vsel %vm3233, -inf, %v3083
          %v3298 = vsel %vm3234, -inf, %v2996
          %v3299 = vsel %vm3235, -inf, %v3085
          %v3300 = vsel %vm3236, -inf, %v2999
          %v3301 = vsel %vm3237, -inf, %v3088
          %v3302 = vsel %vm3238, -inf, %v3001
          %v3303 = vsel %vm3239, -inf, %v3090
          %v3304 = vsel %vm3240, -inf, %v3004
          %v3305 = vsel %vm3241, -inf, %v3093
          %v3306 = vsel %vm3242, -inf, %v3006
          %v3307 = vsel %vm3243, -inf, %v3095
          %v3308 = vsel %vm3244, -inf, %v3009
          %v3309 = vsel %vm3245, -inf, %v3098
          %v3310 = vsel %vm3246, -inf, %v3011
          %v3311 = vsel %vm3247, -inf, %v3100
          %v3312 = vsel %vm3248, -inf, %v3014
          %v3313 = vsel %vm3249, -inf, %v3103
          %v3314 = vsel %vm3250, -inf, %v3016
          %v3315 = vsel %vm3251, -inf, %v3105
          %v3316 = vsel %vm3252, -inf, %v3019
          %v3317 = vsel %vm3253, -inf, %v3108
          %v3318 = vsel %vm3254, -inf, %v3021
          %v3319 = vsel %vm3255, -inf, %v3110
          %v3320 = vsel %vm3256, -inf, %v3024
          %v3321 = vsel %vm3257, -inf, %v3113
          %v3322 = vsel %vm3258, -inf, %v3026
          %v3323 = vsel %vm3259, -inf, %v3115
          %v3324 = vsel %vm3260, -inf, %v3029
          %v3325 = vsel %vm3261, -inf, %v3118
          %v3326 = vsel %vm3262, -inf, %v3031
          %v3327 = vsel %vm3263, -inf, %v3120
          %v3328 = vsel %vm3264, -inf, %v3034
          %v3329 = vsel %vm3265, -inf, %v3123
          %v3330 = vsel %vm3266, -inf, %v3036
          %v3331 = vsel %vm3267, -inf, %v3125
          %v3332 = vsel %vm3268, -inf, %v3039
          %v3333 = vsel %vm3269, -inf, %v3128
          %v3334 = vsel %vm3270, -inf, %v3041
          %v3335 = vsel %vm3271, -inf, %v3130
          %v3336 = vsel %vm3272, -inf, %v3044
          %v3337 = vsel %vm3273, -inf, %v3133
          %v3338 = vsel %vm3274, -inf, %v3046
          %v3339 = vsel %vm3275, -inf, %v3135
          %v3340 = vsel %vm3276, -inf, %v3049
          %v3341 = vsel %vm3277, -inf, %v3138
          %v3342 = vsel %vm3278, -inf, %v3051
          %v3343 = vsel %vm3279, -inf, %v3140
          %v3344 = vld [vmem:[#allocation3] sm:$0xff]
          %v3345 = vld [vmem:[#allocation3 + $0x8] sm:$0xff]
          %v3346 = vld [vmem:[#allocation3 + $0x10] sm:$0xff]
          %v3347 = vld [vmem:[#allocation3 + $0x18] sm:$0xff]
          %v3348 = vld [vmem:[#allocation3 + $0x20] sm:$0xff]
          %v3349 = vld [vmem:[#allocation3 + $0x28] sm:$0xff]
          %v3350 = vld [vmem:[#allocation3 + $0x30] sm:$0xff]
          %v3351 = vld [vmem:[#allocation3 + $0x38] sm:$0xff]
          %v3352 = vld [vmem:[#allocation3 + $0x40] sm:$0xff]
          %v3353 = vld [vmem:[#allocation3 + $0x48] sm:$0xff]
          %v3354 = vld [vmem:[#allocation3 + $0x50] sm:$0xff]
          %v3355 = vld [vmem:[#allocation3 + $0x58] sm:$0xff]
          %v3356 = vld [vmem:[#allocation3 + $0x60] sm:$0xff]
          %v3357 = vld [vmem:[#allocation3 + $0x68] sm:$0xff]
          %v3358 = vld [vmem:[#allocation3 + $0x70] sm:$0xff]
          %v3359 = vld [vmem:[#allocation3 + $0x78] sm:$0xff]
          %v3360 = vld [vmem:[#allocation3 + $0x80] sm:$0xff]
          %v3361 = vld [vmem:[#allocation3 + $0x88] sm:$0xff]
          %v3362 = vld [vmem:[#allocation3 + $0x90] sm:$0xff]
          %v3363 = vld [vmem:[#allocation3 + $0x98] sm:$0xff]
          %v3364 = vld [vmem:[#allocation3 + $0xa0] sm:$0xff]
          %v3365 = vld [vmem:[#allocation3 + $0xa8] sm:$0xff]
          %v3366 = vld [vmem:[#allocation3 + $0xb0] sm:$0xff]
          %v3367 = vld [vmem:[#allocation3 + $0xb8] sm:$0xff]
          %v3368 = vld [vmem:[#allocation3 + $0xc0] sm:$0xff]
          %v3369 = vld [vmem:[#allocation3 + $0xc8] sm:$0xff]
          %v3370 = vld [vmem:[#allocation3 + $0xd0] sm:$0xff]
          %v3371 = vld [vmem:[#allocation3 + $0xd8] sm:$0xff]
          %v3372 = vld [vmem:[#allocation3 + $0xe0] sm:$0xff]
          %v3373 = vld [vmem:[#allocation3 + $0xe8] sm:$0xff]
          %v3374 = vld [vmem:[#allocation3 + $0xf0] sm:$0xff]
          %v3375 = vld [vmem:[#allocation3 + $0xf8] sm:$0xff]
          %v3376 = vmax.f32 %v3280, %v3281
          %3377 = vmax.xlane.f32.xlu0 %v3376
          %v3378 = vpop.xlane.xlu0 %3377
          %v3379 = vmax.f32 %v3282, %v3283
          %3380 = vmax.xlane.f32.xlu0 %v3379
          %v3381 = vpop.xlane.xlu0 %3380
          %v3382 = vmax.f32 %v3284, %v3285
          %3383 = vmax.xlane.f32.xlu0 %v3382
          %v3384 = vpop.xlane.xlu0 %3383
          %v3385 = vmax.f32 %v3286, %v3287
          %3386 = vmax.xlane.f32.xlu0 %v3385
          %v3387 = vpop.xlane.xlu0 %3386
          %v3388 = vmax.f32 %v3288, %v3289
          %3389 = vmax.xlane.f32.xlu0 %v3388
          %v3390 = vpop.xlane.xlu0 %3389
          %v3391 = vmax.f32 %v3290, %v3291
          %3392 = vmax.xlane.f32.xlu0 %v3391
          %v3393 = vpop.xlane.xlu0 %3392
          %v3394 = vmax.f32 %v3292, %v3293
          %3395 = vmax.xlane.f32.xlu0 %v3394
          %v3396 = vpop.xlane.xlu0 %3395
          %v3397 = vmax.f32 %v3294, %v3295
          %3398 = vmax.xlane.f32.xlu0 %v3397
          %v3399 = vpop.xlane.xlu0 %3398
          %v3400 = vmax.f32 %v3296, %v3297
          %3401 = vmax.xlane.f32.xlu0 %v3400
          %v3402 = vpop.xlane.xlu0 %3401
          %v3403 = vmax.f32 %v3298, %v3299
          %3404 = vmax.xlane.f32.xlu0 %v3403
          %v3405 = vpop.xlane.xlu0 %3404
          %v3406 = vmax.f32 %v3300, %v3301
          %3407 = vmax.xlane.f32.xlu0 %v3406
          %v3408 = vpop.xlane.xlu0 %3407
          %v3409 = vmax.f32 %v3302, %v3303
          %3410 = vmax.xlane.f32.xlu0 %v3409
          %v3411 = vpop.xlane.xlu0 %3410
          %v3412 = vmax.f32 %v3304, %v3305
          %3413 = vmax.xlane.f32.xlu0 %v3412
          %v3414 = vpop.xlane.xlu0 %3413
          %v3415 = vmax.f32 %v3306, %v3307
          %3416 = vmax.xlane.f32.xlu0 %v3415
          %v3417 = vpop.xlane.xlu0 %3416
          %v3418 = vmax.f32 %v3308, %v3309
          %3419 = vmax.xlane.f32.xlu0 %v3418
          %v3420 = vpop.xlane.xlu0 %3419
          %v3421 = vmax.f32 %v3310, %v3311
          %3422 = vmax.xlane.f32.xlu0 %v3421
          %v3423 = vpop.xlane.xlu0 %3422
          %v3424 = vmax.f32 %v3312, %v3313
          %3425 = vmax.xlane.f32.xlu0 %v3424
          %v3426 = vpop.xlane.xlu0 %3425
          %v3427 = vmax.f32 %v3314, %v3315
          %3428 = vmax.xlane.f32.xlu0 %v3427
          %v3429 = vpop.xlane.xlu0 %3428
          %v3430 = vmax.f32 %v3316, %v3317
          %3431 = vmax.xlane.f32.xlu0 %v3430
          %v3432 = vpop.xlane.xlu0 %3431
          %v3433 = vmax.f32 %v3318, %v3319
          %3434 = vmax.xlane.f32.xlu0 %v3433
          %v3435 = vpop.xlane.xlu0 %3434
          %v3436 = vmax.f32 %v3320, %v3321
          %3437 = vmax.xlane.f32.xlu0 %v3436
          %v3438 = vpop.xlane.xlu0 %3437
          %v3439 = vmax.f32 %v3322, %v3323
          %3440 = vmax.xlane.f32.xlu0 %v3439
          %v3441 = vpop.xlane.xlu0 %3440
          %v3442 = vmax.f32 %v3324, %v3325
          %3443 = vmax.xlane.f32.xlu0 %v3442
          %v3444 = vpop.xlane.xlu0 %3443
          %v3445 = vmax.f32 %v3326, %v3327
          %3446 = vmax.xlane.f32.xlu0 %v3445
          %v3447 = vpop.xlane.xlu0 %3446
          %v3448 = vmax.f32 %v3328, %v3329
          %3449 = vmax.xlane.f32.xlu0 %v3448
          %v3450 = vpop.xlane.xlu0 %3449
          %v3451 = vmax.f32 %v3330, %v3331
          %3452 = vmax.xlane.f32.xlu0 %v3451
          %v3453 = vpop.xlane.xlu0 %3452
          %v3454 = vmax.f32 %v3332, %v3333
          %3455 = vmax.xlane.f32.xlu0 %v3454
          %v3456 = vpop.xlane.xlu0 %3455
          %v3457 = vmax.f32 %v3334, %v3335
          %3458 = vmax.xlane.f32.xlu0 %v3457
          %v3459 = vpop.xlane.xlu0 %3458
          %v3460 = vmax.f32 %v3336, %v3337
          %3461 = vmax.xlane.f32.xlu0 %v3460
          %v3462 = vpop.xlane.xlu0 %3461
          %v3463 = vmax.f32 %v3338, %v3339
          %3464 = vmax.xlane.f32.xlu0 %v3463
          %v3465 = vpop.xlane.xlu0 %3464
          %v3466 = vmax.f32 %v3340, %v3341
          %3467 = vmax.xlane.f32.xlu0 %v3466
          %v3468 = vpop.xlane.xlu0 %3467
          %v3469 = vmax.f32 %v3342, %v3343
          %3470 = vmax.xlane.f32.xlu0 %v3469
          %v3471 = vpop.xlane.xlu0 %3470
          %v3472 = vmax.f32 %v3344, %v3378
          %v3473 = vmax.f32 %v3345, %v3381
          %v3474 = vmax.f32 %v3346, %v3384
          %v3475 = vmax.f32 %v3347, %v3387
          %v3476 = vmax.f32 %v3348, %v3390
          %v3477 = vmax.f32 %v3349, %v3393
          %v3478 = vmax.f32 %v3350, %v3396
          %v3479 = vmax.f32 %v3351, %v3399
          %v3480 = vmax.f32 %v3352, %v3402
          %v3481 = vmax.f32 %v3353, %v3405
          %v3482 = vmax.f32 %v3354, %v3408
          %v3483 = vmax.f32 %v3355, %v3411
          %v3484 = vmax.f32 %v3356, %v3414
          %v3485 = vmax.f32 %v3357, %v3417
          %v3486 = vmax.f32 %v3358, %v3420
          %v3487 = vmax.f32 %v3359, %v3423
          %v3488 = vmax.f32 %v3360, %v3426
          %v3489 = vmax.f32 %v3361, %v3429
          %v3490 = vmax.f32 %v3362, %v3432
          %v3491 = vmax.f32 %v3363, %v3435
          %v3492 = vmax.f32 %v3364, %v3438
          %v3493 = vmax.f32 %v3365, %v3441
          %v3494 = vmax.f32 %v3366, %v3444
          %v3495 = vmax.f32 %v3367, %v3447
          %v3496 = vmax.f32 %v3368, %v3450
          %v3497 = vmax.f32 %v3369, %v3453
          %v3498 = vmax.f32 %v3370, %v3456
          %v3499 = vmax.f32 %v3371, %v3459
          %v3500 = vmax.f32 %v3372, %v3462
          %v3501 = vmax.f32 %v3373, %v3465
          %v3502 = vmax.f32 %v3374, %v3468
          %v3503 = vmax.f32 %v3375, %v3471
          %v3504 = vsub.f32 %v3344, %v3472
          %v3505 = vsub.f32 %v3345, %v3473
          %v3506 = vsub.f32 %v3346, %v3474
          %v3507 = vsub.f32 %v3347, %v3475
          %v3508 = vsub.f32 %v3348, %v3476
          %v3509 = vsub.f32 %v3349, %v3477
          %v3510 = vsub.f32 %v3350, %v3478
          %v3511 = vsub.f32 %v3351, %v3479
          %v3512 = vsub.f32 %v3352, %v3480
          %v3513 = vsub.f32 %v3353, %v3481
          %v3514 = vsub.f32 %v3354, %v3482
          %v3515 = vsub.f32 %v3355, %v3483
          %v3516 = vsub.f32 %v3356, %v3484
          %v3517 = vsub.f32 %v3357, %v3485
          %v3518 = vsub.f32 %v3358, %v3486
          %v3519 = vsub.f32 %v3359, %v3487
          %v3520 = vsub.f32 %v3360, %v3488
          %v3521 = vsub.f32 %v3361, %v3489
          %v3522 = vsub.f32 %v3362, %v3490
          %v3523 = vsub.f32 %v3363, %v3491
          %v3524 = vsub.f32 %v3364, %v3492
          %v3525 = vsub.f32 %v3365, %v3493
          %v3526 = vsub.f32 %v3366, %v3494
          %v3527 = vsub.f32 %v3367, %v3495
          %v3528 = vsub.f32 %v3368, %v3496
          %v3529 = vsub.f32 %v3369, %v3497
          %v3530 = vsub.f32 %v3370, %v3498
          %v3531 = vsub.f32 %v3371, %v3499
          %v3532 = vsub.f32 %v3372, %v3500
          %v3533 = vsub.f32 %v3373, %v3501
          %v3534 = vsub.f32 %v3374, %v3502
          %v3535 = vsub.f32 %v3375, %v3503
          %v3536 = vmul.f32 %v3504, 1.442695
          %v3537 = vpow.pop %v3536
          %v3538 = vmul.f32 %v3505, 1.442695
          %v3539 = vpow.pop %v3538
          %v3540 = vmul.f32 %v3506, 1.442695
          %v3541 = vpow.pop %v3540
          %v3542 = vmul.f32 %v3507, 1.442695
          %v3543 = vpow.pop %v3542
          %v3544 = vmul.f32 %v3508, 1.442695
          %v3545 = vpow.pop %v3544
          %v3546 = vmul.f32 %v3509, 1.442695
          %v3547 = vpow.pop %v3546
          %v3548 = vmul.f32 %v3510, 1.442695
          %v3549 = vpow.pop %v3548
          %v3550 = vmul.f32 %v3511, 1.442695
          %v3551 = vpow.pop %v3550
          %v3552 = vmul.f32 %v3512, 1.442695
          %v3553 = vpow.pop %v3552
          %v3554 = vmul.f32 %v3513, 1.442695
          %v3555 = vpow.pop %v3554
          %v3556 = vmul.f32 %v3514, 1.442695
          %v3557 = vpow.pop %v3556
          %v3558 = vmul.f32 %v3515, 1.442695
          %v3559 = vpow.pop %v3558
          %v3560 = vmul.f32 %v3516, 1.442695
          %v3561 = vpow.pop %v3560
          %v3562 = vmul.f32 %v3517, 1.442695
          %v3563 = vpow.pop %v3562
          %v3564 = vmul.f32 %v3518, 1.442695
          %v3565 = vpow.pop %v3564
          %v3566 = vmul.f32 %v3519, 1.442695
          %v3567 = vpow.pop %v3566
          %v3568 = vmul.f32 %v3520, 1.442695
          %v3569 = vpow.pop %v3568
          %v3570 = vmul.f32 %v3521, 1.442695
          %v3571 = vpow.pop %v3570
          %v3572 = vmul.f32 %v3522, 1.442695
          %v3573 = vpow.pop %v3572
          %v3574 = vmul.f32 %v3523, 1.442695
          %v3575 = vpow.pop %v3574
          %v3576 = vmul.f32 %v3524, 1.442695
          %v3577 = vpow.pop %v3576
          %v3578 = vmul.f32 %v3525, 1.442695
          %v3579 = vpow.pop %v3578
          %v3580 = vmul.f32 %v3526, 1.442695
          %v3581 = vpow.pop %v3580
          %v3582 = vmul.f32 %v3527, 1.442695
          %v3583 = vpow.pop %v3582
          %v3584 = vmul.f32 %v3528, 1.442695
          %v3585 = vpow.pop %v3584
          %v3586 = vmul.f32 %v3529, 1.442695
          %v3587 = vpow.pop %v3586
          %v3588 = vmul.f32 %v3530, 1.442695
          %v3589 = vpow.pop %v3588
          %v3590 = vmul.f32 %v3531, 1.442695
          %v3591 = vpow.pop %v3590
          %v3592 = vmul.f32 %v3532, 1.442695
          %v3593 = vpow.pop %v3592
          %v3594 = vmul.f32 %v3533, 1.442695
          %v3595 = vpow.pop %v3594
          %v3596 = vmul.f32 %v3534, 1.442695
          %v3597 = vpow.pop %v3596
          %v3598 = vmul.f32 %v3535, 1.442695
          %v3599 = vpow.pop %v3598
          %3601 = vset.pattern.permute.xlu0 0
          %3602 = vperm.xlu0 %3601, %v3472
          %v3603 = vpop.permute.xlu0 %3602
          %3606 = vset.pattern.permute.xlu0 0
          %3607 = vperm.xlu0 %3606, %v3473
          %v3608 = vpop.permute.xlu0 %3607
          %3611 = vset.pattern.permute.xlu0 0
          %3612 = vperm.xlu0 %3611, %v3474
          %v3613 = vpop.permute.xlu0 %3612
          %3616 = vset.pattern.permute.xlu0 0
          %3617 = vperm.xlu0 %3616, %v3475
          %v3618 = vpop.permute.xlu0 %3617
          %3621 = vset.pattern.permute.xlu0 0
          %3622 = vperm.xlu0 %3621, %v3476
          %v3623 = vpop.permute.xlu0 %3622
          %3626 = vset.pattern.permute.xlu0 0
          %3627 = vperm.xlu0 %3626, %v3477
          %v3628 = vpop.permute.xlu0 %3627
          %3631 = vset.pattern.permute.xlu0 0
          %3632 = vperm.xlu0 %3631, %v3478
          %v3633 = vpop.permute.xlu0 %3632
          %3636 = vset.pattern.permute.xlu0 0
          %3637 = vperm.xlu0 %3636, %v3479
          %v3638 = vpop.permute.xlu0 %3637
          %3641 = vset.pattern.permute.xlu0 0
          %3642 = vperm.xlu0 %3641, %v3480
          %v3643 = vpop.permute.xlu0 %3642
          %3646 = vset.pattern.permute.xlu0 0
          %3647 = vperm.xlu0 %3646, %v3481
          %v3648 = vpop.permute.xlu0 %3647
          %3651 = vset.pattern.permute.xlu0 0
          %3652 = vperm.xlu0 %3651, %v3482
          %v3653 = vpop.permute.xlu0 %3652
          %3656 = vset.pattern.permute.xlu0 0
          %3657 = vperm.xlu0 %3656, %v3483
          %v3658 = vpop.permute.xlu0 %3657
          %3661 = vset.pattern.permute.xlu0 0
          %3662 = vperm.xlu0 %3661, %v3484
          %v3663 = vpop.permute.xlu0 %3662
          %3666 = vset.pattern.permute.xlu0 0
          %3667 = vperm.xlu0 %3666, %v3485
          %v3668 = vpop.permute.xlu0 %3667
          %3671 = vset.pattern.permute.xlu0 0
          %3672 = vperm.xlu0 %3671, %v3486
          %v3673 = vpop.permute.xlu0 %3672
          %3676 = vset.pattern.permute.xlu0 0
          %3677 = vperm.xlu0 %3676, %v3487
          %v3678 = vpop.permute.xlu0 %3677
          %3681 = vset.pattern.permute.xlu0 0
          %3682 = vperm.xlu0 %3681, %v3488
          %v3683 = vpop.permute.xlu0 %3682
          %3686 = vset.pattern.permute.xlu0 0
          %3687 = vperm.xlu0 %3686, %v3489
          %v3688 = vpop.permute.xlu0 %3687
          %3691 = vset.pattern.permute.xlu0 0
          %3692 = vperm.xlu0 %3691, %v3490
          %v3693 = vpop.permute.xlu0 %3692
          %3696 = vset.pattern.permute.xlu0 0
          %3697 = vperm.xlu0 %3696, %v3491
          %v3698 = vpop.permute.xlu0 %3697
          %3701 = vset.pattern.permute.xlu0 0
          %3702 = vperm.xlu0 %3701, %v3492
          %v3703 = vpop.permute.xlu0 %3702
          %3706 = vset.pattern.permute.xlu0 0
          %3707 = vperm.xlu0 %3706, %v3493
          %v3708 = vpop.permute.xlu0 %3707
          %3711 = vset.pattern.permute.xlu0 0
          %3712 = vperm.xlu0 %3711, %v3494
          %v3713 = vpop.permute.xlu0 %3712
          %3716 = vset.pattern.permute.xlu0 0
          %3717 = vperm.xlu0 %3716, %v3495
          %v3718 = vpop.permute.xlu0 %3717
          %3721 = vset.pattern.permute.xlu0 0
          %3722 = vperm.xlu0 %3721, %v3496
          %v3723 = vpop.permute.xlu0 %3722
          %3726 = vset.pattern.permute.xlu0 0
          %3727 = vperm.xlu0 %3726, %v3497
          %v3728 = vpop.permute.xlu0 %3727
          %3731 = vset.pattern.permute.xlu0 0
          %3732 = vperm.xlu0 %3731, %v3498
          %v3733 = vpop.permute.xlu0 %3732
          %3736 = vset.pattern.permute.xlu0 0
          %3737 = vperm.xlu0 %3736, %v3499
          %v3738 = vpop.permute.xlu0 %3737
          %3741 = vset.pattern.permute.xlu0 0
          %3742 = vperm.xlu0 %3741, %v3500
          %v3743 = vpop.permute.xlu0 %3742
          %3746 = vset.pattern.permute.xlu0 0
          %3747 = vperm.xlu0 %3746, %v3501
          %v3748 = vpop.permute.xlu0 %3747
          %3751 = vset.pattern.permute.xlu0 0
          %3752 = vperm.xlu0 %3751, %v3502
          %v3753 = vpop.permute.xlu0 %3752
          %3756 = vset.pattern.permute.xlu0 0
          %3757 = vperm.xlu0 %3756, %v3503
          %v3758 = vpop.permute.xlu0 %3757
          %v3760 = vsub.f32 %v3280, %v3603
          %v3761 = vsub.f32 %v3281, %v3603
          %v3762 = vsub.f32 %v3282, %v3608
          %v3763 = vsub.f32 %v3283, %v3608
          %v3764 = vsub.f32 %v3284, %v3613
          %v3765 = vsub.f32 %v3285, %v3613
          %v3766 = vsub.f32 %v3286, %v3618
          %v3767 = vsub.f32 %v3287, %v3618
          %v3768 = vsub.f32 %v3288, %v3623
          %v3769 = vsub.f32 %v3289, %v3623
          %v3770 = vsub.f32 %v3290, %v3628
          %v3771 = vsub.f32 %v3291, %v3628
          %v3772 = vsub.f32 %v3292, %v3633
          %v3773 = vsub.f32 %v3293, %v3633
          %v3774 = vsub.f32 %v3294, %v3638
          %v3775 = vsub.f32 %v3295, %v3638
          %v3776 = vsub.f32 %v3296, %v3643
          %v3777 = vsub.f32 %v3297, %v3643
          %v3778 = vsub.f32 %v3298, %v3648
          %v3779 = vsub.f32 %v3299, %v3648
          %v3780 = vsub.f32 %v3300, %v3653
          %v3781 = vsub.f32 %v3301, %v3653
          %v3782 = vsub.f32 %v3302, %v3658
          %v3783 = vsub.f32 %v3303, %v3658
          %v3784 = vsub.f32 %v3304, %v3663
          %v3785 = vsub.f32 %v3305, %v3663
          %v3786 = vsub.f32 %v3306, %v3668
          %v3787 = vsub.f32 %v3307, %v3668
          %v3788 = vsub.f32 %v3308, %v3673
          %v3789 = vsub.f32 %v3309, %v3673
          %v3790 = vsub.f32 %v3310, %v3678
          %v3791 = vsub.f32 %v3311, %v3678
          %v3792 = vsub.f32 %v3312, %v3683
          %v3793 = vsub.f32 %v3313, %v3683
          %v3794 = vsub.f32 %v3314, %v3688
          %v3795 = vsub.f32 %v3315, %v3688
          %v3796 = vsub.f32 %v3316, %v3693
          %v3797 = vsub.f32 %v3317, %v3693
          %v3798 = vsub.f32 %v3318, %v3698
          %v3799 = vsub.f32 %v3319, %v3698
          %v3800 = vsub.f32 %v3320, %v3703
          %v3801 = vsub.f32 %v3321, %v3703
          %v3802 = vsub.f32 %v3322, %v3708
          %v3803 = vsub.f32 %v3323, %v3708
          %v3804 = vsub.f32 %v3324, %v3713
          %v3805 = vsub.f32 %v3325, %v3713
          %v3806 = vsub.f32 %v3326, %v3718
          %v3807 = vsub.f32 %v3327, %v3718
          %v3808 = vsub.f32 %v3328, %v3723
          %v3809 = vsub.f32 %v3329, %v3723
          %v3810 = vsub.f32 %v3330, %v3728
          %v3811 = vsub.f32 %v3331, %v3728
          %v3812 = vsub.f32 %v3332, %v3733
          %v3813 = vsub.f32 %v3333, %v3733
          %v3814 = vsub.f32 %v3334, %v3738
          %v3815 = vsub.f32 %v3335, %v3738
          %v3816 = vsub.f32 %v3336, %v3743
          %v3817 = vsub.f32 %v3337, %v3743
          %v3818 = vsub.f32 %v3338, %v3748
          %v3819 = vsub.f32 %v3339, %v3748
          %v3820 = vsub.f32 %v3340, %v3753
          %v3821 = vsub.f32 %v3341, %v3753
          %v3822 = vsub.f32 %v3342, %v3758
          %v3823 = vsub.f32 %v3343, %v3758
          %v3824 = vmul.f32 %v3760, 1.442695
          %v3825 = vpow.pop %v3824
          %v3826 = vmul.f32 %v3761, 1.442695
          %v3827 = vpow.pop %v3826
          %v3828 = vmul.f32 %v3762, 1.442695
          %v3829 = vpow.pop %v3828
          %v3830 = vmul.f32 %v3763, 1.442695
          %v3831 = vpow.pop %v3830
          %v3832 = vmul.f32 %v3764, 1.442695
          %v3833 = vpow.pop %v3832
          %v3834 = vmul.f32 %v3765, 1.442695
          %v3835 = vpow.pop %v3834
          %v3836 = vmul.f32 %v3766, 1.442695
          %v3837 = vpow.pop %v3836
          %v3838 = vmul.f32 %v3767, 1.442695
          %v3839 = vpow.pop %v3838
          %v3840 = vmul.f32 %v3768, 1.442695
          %v3841 = vpow.pop %v3840
          %v3842 = vmul.f32 %v3769, 1.442695
          %v3843 = vpow.pop %v3842
          %v3844 = vmul.f32 %v3770, 1.442695
          %v3845 = vpow.pop %v3844
          %v3846 = vmul.f32 %v3771, 1.442695
          %v3847 = vpow.pop %v3846
          %v3848 = vmul.f32 %v3772, 1.442695
          %v3849 = vpow.pop %v3848
          %v3850 = vmul.f32 %v3773, 1.442695
          %v3851 = vpow.pop %v3850
          %v3852 = vmul.f32 %v3774, 1.442695
          %v3853 = vpow.pop %v3852
          %v3854 = vmul.f32 %v3775, 1.442695
          %v3855 = vpow.pop %v3854
          %v3856 = vmul.f32 %v3776, 1.442695
          %v3857 = vpow.pop %v3856
          %v3858 = vmul.f32 %v3777, 1.442695
          %v3859 = vpow.pop %v3858
          %v3860 = vmul.f32 %v3778, 1.442695
          %v3861 = vpow.pop %v3860
          %v3862 = vmul.f32 %v3779, 1.442695
          %v3863 = vpow.pop %v3862
          %v3864 = vmul.f32 %v3780, 1.442695
          %v3865 = vpow.pop %v3864
          %v3866 = vmul.f32 %v3781, 1.442695
          %v3867 = vpow.pop %v3866
          %v3868 = vmul.f32 %v3782, 1.442695
          %v3869 = vpow.pop %v3868
          %v3870 = vmul.f32 %v3783, 1.442695
          %v3871 = vpow.pop %v3870
          %v3872 = vmul.f32 %v3784, 1.442695
          %v3873 = vpow.pop %v3872
          %v3874 = vmul.f32 %v3785, 1.442695
          %v3875 = vpow.pop %v3874
          %v3876 = vmul.f32 %v3786, 1.442695
          %v3877 = vpow.pop %v3876
          %v3878 = vmul.f32 %v3787, 1.442695
          %v3879 = vpow.pop %v3878
          %v3880 = vmul.f32 %v3788, 1.442695
          %v3881 = vpow.pop %v3880
          %v3882 = vmul.f32 %v3789, 1.442695
          %v3883 = vpow.pop %v3882
          %v3884 = vmul.f32 %v3790, 1.442695
          %v3885 = vpow.pop %v3884
          %v3886 = vmul.f32 %v3791, 1.442695
          %v3887 = vpow.pop %v3886
          %v3888 = vmul.f32 %v3792, 1.442695
          %v3889 = vpow.pop %v3888
          %v3890 = vmul.f32 %v3793, 1.442695
          %v3891 = vpow.pop %v3890
          %v3892 = vmul.f32 %v3794, 1.442695
          %v3893 = vpow.pop %v3892
          %v3894 = vmul.f32 %v3795, 1.442695
          %v3895 = vpow.pop %v3894
          %v3896 = vmul.f32 %v3796, 1.442695
          %v3897 = vpow.pop %v3896
          %v3898 = vmul.f32 %v3797, 1.442695
          %v3899 = vpow.pop %v3898
          %v3900 = vmul.f32 %v3798, 1.442695
          %v3901 = vpow.pop %v3900
          %v3902 = vmul.f32 %v3799, 1.442695
          %v3903 = vpow.pop %v3902
          %v3904 = vmul.f32 %v3800, 1.442695
          %v3905 = vpow.pop %v3904
          %v3906 = vmul.f32 %v3801, 1.442695
          %v3907 = vpow.pop %v3906
          %v3908 = vmul.f32 %v3802, 1.442695
          %v3909 = vpow.pop %v3908
          %v3910 = vmul.f32 %v3803, 1.442695
          %v3911 = vpow.pop %v3910
          %v3912 = vmul.f32 %v3804, 1.442695
          %v3913 = vpow.pop %v3912
          %v3914 = vmul.f32 %v3805, 1.442695
          %v3915 = vpow.pop %v3914
          %v3916 = vmul.f32 %v3806, 1.442695
          %v3917 = vpow.pop %v3916
          %v3918 = vmul.f32 %v3807, 1.442695
          %v3919 = vpow.pop %v3918
          %v3920 = vmul.f32 %v3808, 1.442695
          %v3921 = vpow.pop %v3920
          %v3922 = vmul.f32 %v3809, 1.442695
          %v3923 = vpow.pop %v3922
          %v3924 = vmul.f32 %v3810, 1.442695
          %v3925 = vpow.pop %v3924
          %v3926 = vmul.f32 %v3811, 1.442695
          %v3927 = vpow.pop %v3926
          %v3928 = vmul.f32 %v3812, 1.442695
          %v3929 = vpow.pop %v3928
          %v3930 = vmul.f32 %v3813, 1.442695
          %v3931 = vpow.pop %v3930
          %v3932 = vmul.f32 %v3814, 1.442695
          %v3933 = vpow.pop %v3932
          %v3934 = vmul.f32 %v3815, 1.442695
          %v3935 = vpow.pop %v3934
          %v3936 = vmul.f32 %v3816, 1.442695
          %v3937 = vpow.pop %v3936
          %v3938 = vmul.f32 %v3817, 1.442695
          %v3939 = vpow.pop %v3938
          %v3940 = vmul.f32 %v3818, 1.442695
          %v3941 = vpow.pop %v3940
          %v3942 = vmul.f32 %v3819, 1.442695
          %v3943 = vpow.pop %v3942
          %v3944 = vmul.f32 %v3820, 1.442695
          %v3945 = vpow.pop %v3944
          %v3946 = vmul.f32 %v3821, 1.442695
          %v3947 = vpow.pop %v3946
          %v3948 = vmul.f32 %v3822, 1.442695
          %v3949 = vpow.pop %v3948
          %v3950 = vmul.f32 %v3823, 1.442695
          %v3951 = vpow.pop %v3950
          %v3952 = vld [vmem:[#allocation4] sm:$0xff]
          %v3953 = vld [vmem:[#allocation4 + $0x8] sm:$0xff]
          %v3954 = vld [vmem:[#allocation4 + $0x10] sm:$0xff]
          %v3955 = vld [vmem:[#allocation4 + $0x18] sm:$0xff]
          %v3956 = vld [vmem:[#allocation4 + $0x20] sm:$0xff]
          %v3957 = vld [vmem:[#allocation4 + $0x28] sm:$0xff]
          %v3958 = vld [vmem:[#allocation4 + $0x30] sm:$0xff]
          %v3959 = vld [vmem:[#allocation4 + $0x38] sm:$0xff]
          %v3960 = vld [vmem:[#allocation4 + $0x40] sm:$0xff]
          %v3961 = vld [vmem:[#allocation4 + $0x48] sm:$0xff]
          %v3962 = vld [vmem:[#allocation4 + $0x50] sm:$0xff]
          %v3963 = vld [vmem:[#allocation4 + $0x58] sm:$0xff]
          %v3964 = vld [vmem:[#allocation4 + $0x60] sm:$0xff]
          %v3965 = vld [vmem:[#allocation4 + $0x68] sm:$0xff]
          %v3966 = vld [vmem:[#allocation4 + $0x70] sm:$0xff]
          %v3967 = vld [vmem:[#allocation4 + $0x78] sm:$0xff]
          %v3968 = vld [vmem:[#allocation4 + $0x80] sm:$0xff]
          %v3969 = vld [vmem:[#allocation4 + $0x88] sm:$0xff]
          %v3970 = vld [vmem:[#allocation4 + $0x90] sm:$0xff]
          %v3971 = vld [vmem:[#allocation4 + $0x98] sm:$0xff]
          %v3972 = vld [vmem:[#allocation4 + $0xa0] sm:$0xff]
          %v3973 = vld [vmem:[#allocation4 + $0xa8] sm:$0xff]
          %v3974 = vld [vmem:[#allocation4 + $0xb0] sm:$0xff]
          %v3975 = vld [vmem:[#allocation4 + $0xb8] sm:$0xff]
          %v3976 = vld [vmem:[#allocation4 + $0xc0] sm:$0xff]
          %v3977 = vld [vmem:[#allocation4 + $0xc8] sm:$0xff]
          %v3978 = vld [vmem:[#allocation4 + $0xd0] sm:$0xff]
          %v3979 = vld [vmem:[#allocation4 + $0xd8] sm:$0xff]
          %v3980 = vld [vmem:[#allocation4 + $0xe0] sm:$0xff]
          %v3981 = vld [vmem:[#allocation4 + $0xe8] sm:$0xff]
          %v3982 = vld [vmem:[#allocation4 + $0xf0] sm:$0xff]
          %v3983 = vld [vmem:[#allocation4 + $0xf8] sm:$0xff]
          %v3984 = vmul.f32 %v3537, %v3952
          %v3985 = vmul.f32 %v3539, %v3953
          %v3986 = vmul.f32 %v3541, %v3954
          %v3987 = vmul.f32 %v3543, %v3955
          %v3988 = vmul.f32 %v3545, %v3956
          %v3989 = vmul.f32 %v3547, %v3957
          %v3990 = vmul.f32 %v3549, %v3958
          %v3991 = vmul.f32 %v3551, %v3959
          %v3992 = vmul.f32 %v3553, %v3960
          %v3993 = vmul.f32 %v3555, %v3961
          %v3994 = vmul.f32 %v3557, %v3962
          %v3995 = vmul.f32 %v3559, %v3963
          %v3996 = vmul.f32 %v3561, %v3964
          %v3997 = vmul.f32 %v3563, %v3965
          %v3998 = vmul.f32 %v3565, %v3966
          %v3999 = vmul.f32 %v3567, %v3967
          %v4000 = vmul.f32 %v3569, %v3968
          %v4001 = vmul.f32 %v3571, %v3969
          %v4002 = vmul.f32 %v3573, %v3970
          %v4003 = vmul.f32 %v3575, %v3971
          %v4004 = vmul.f32 %v3577, %v3972
          %v4005 = vmul.f32 %v3579, %v3973
          %v4006 = vmul.f32 %v3581, %v3974
          %v4007 = vmul.f32 %v3583, %v3975
          %v4008 = vmul.f32 %v3585, %v3976
          %v4009 = vmul.f32 %v3587, %v3977
          %v4010 = vmul.f32 %v3589, %v3978
          %v4011 = vmul.f32 %v3591, %v3979
          %v4012 = vmul.f32 %v3593, %v3980
          %v4013 = vmul.f32 %v3595, %v3981
          %v4014 = vmul.f32 %v3597, %v3982
          %v4015 = vmul.f32 %v3599, %v3983
          %v4016 = vadd.f32 %v3825, %v3827
          %4017 = vadd.xlane.f32.xlu0 %v4016
          %v4018 = vpop.xlane.xlu0 %4017
          %v4019 = vadd.f32 %v3829, %v3831
          %4020 = vadd.xlane.f32.xlu0 %v4019
          %v4021 = vpop.xlane.xlu0 %4020
          %v4022 = vadd.f32 %v3833, %v3835
          %4023 = vadd.xlane.f32.xlu0 %v4022
          %v4024 = vpop.xlane.xlu0 %4023
          %v4025 = vadd.f32 %v3837, %v3839
          %4026 = vadd.xlane.f32.xlu0 %v4025
          %v4027 = vpop.xlane.xlu0 %4026
          %v4028 = vadd.f32 %v3841, %v3843
          %4029 = vadd.xlane.f32.xlu0 %v4028
          %v4030 = vpop.xlane.xlu0 %4029
          %v4031 = vadd.f32 %v3845, %v3847
          %4032 = vadd.xlane.f32.xlu0 %v4031
          %v4033 = vpop.xlane.xlu0 %4032
          %v4034 = vadd.f32 %v3849, %v3851
          %4035 = vadd.xlane.f32.xlu0 %v4034
          %v4036 = vpop.xlane.xlu0 %4035
          %v4037 = vadd.f32 %v3853, %v3855
          %4038 = vadd.xlane.f32.xlu0 %v4037
          %v4039 = vpop.xlane.xlu0 %4038
          %v4040 = vadd.f32 %v3857, %v3859
          %4041 = vadd.xlane.f32.xlu0 %v4040
          %v4042 = vpop.xlane.xlu0 %4041
          %v4043 = vadd.f32 %v3861, %v3863
          %4044 = vadd.xlane.f32.xlu0 %v4043
          %v4045 = vpop.xlane.xlu0 %4044
          %v4046 = vadd.f32 %v3865, %v3867
          %4047 = vadd.xlane.f32.xlu0 %v4046
          %v4048 = vpop.xlane.xlu0 %4047
          %v4049 = vadd.f32 %v3869, %v3871
          %4050 = vadd.xlane.f32.xlu0 %v4049
          %v4051 = vpop.xlane.xlu0 %4050
          %v4052 = vadd.f32 %v3873, %v3875
          %4053 = vadd.xlane.f32.xlu0 %v4052
          %v4054 = vpop.xlane.xlu0 %4053
          %v4055 = vadd.f32 %v3877, %v3879
          %4056 = vadd.xlane.f32.xlu0 %v4055
          %v4057 = vpop.xlane.xlu0 %4056
          %v4058 = vadd.f32 %v3881, %v3883
          %4059 = vadd.xlane.f32.xlu0 %v4058
          %v4060 = vpop.xlane.xlu0 %4059
          %v4061 = vadd.f32 %v3885, %v3887
          %4062 = vadd.xlane.f32.xlu0 %v4061
          %v4063 = vpop.xlane.xlu0 %4062
          %v4064 = vadd.f32 %v3889, %v3891
          %4065 = vadd.xlane.f32.xlu0 %v4064
          %v4066 = vpop.xlane.xlu0 %4065
          %v4067 = vadd.f32 %v3893, %v3895
          %4068 = vadd.xlane.f32.xlu0 %v4067
          %v4069 = vpop.xlane.xlu0 %4068
          %v4070 = vadd.f32 %v3897, %v3899
          %4071 = vadd.xlane.f32.xlu0 %v4070
          %v4072 = vpop.xlane.xlu0 %4071
          %v4073 = vadd.f32 %v3901, %v3903
          %4074 = vadd.xlane.f32.xlu0 %v4073
          %v4075 = vpop.xlane.xlu0 %4074
          %v4076 = vadd.f32 %v3905, %v3907
          %4077 = vadd.xlane.f32.xlu0 %v4076
          %v4078 = vpop.xlane.xlu0 %4077
          %v4079 = vadd.f32 %v3909, %v3911
          %4080 = vadd.xlane.f32.xlu0 %v4079
          %v4081 = vpop.xlane.xlu0 %4080
          %v4082 = vadd.f32 %v3913, %v3915
          %4083 = vadd.xlane.f32.xlu0 %v4082
          %v4084 = vpop.xlane.xlu0 %4083
          %v4085 = vadd.f32 %v3917, %v3919
          %4086 = vadd.xlane.f32.xlu0 %v4085
          %v4087 = vpop.xlane.xlu0 %4086
          %v4088 = vadd.f32 %v3921, %v3923
          %4089 = vadd.xlane.f32.xlu0 %v4088
          %v4090 = vpop.xlane.xlu0 %4089
          %v4091 = vadd.f32 %v3925, %v3927
          %4092 = vadd.xlane.f32.xlu0 %v4091
          %v4093 = vpop.xlane.xlu0 %4092
          %v4094 = vadd.f32 %v3929, %v3931
          %4095 = vadd.xlane.f32.xlu0 %v4094
          %v4096 = vpop.xlane.xlu0 %4095
          %v4097 = vadd.f32 %v3933, %v3935
          %4098 = vadd.xlane.f32.xlu0 %v4097
          %v4099 = vpop.xlane.xlu0 %4098
          %v4100 = vadd.f32 %v3937, %v3939
          %4101 = vadd.xlane.f32.xlu0 %v4100
          %v4102 = vpop.xlane.xlu0 %4101
          %v4103 = vadd.f32 %v3941, %v3943
          %4104 = vadd.xlane.f32.xlu0 %v4103
          %v4105 = vpop.xlane.xlu0 %4104
          %v4106 = vadd.f32 %v3945, %v3947
          %4107 = vadd.xlane.f32.xlu0 %v4106
          %v4108 = vpop.xlane.xlu0 %4107
          %v4109 = vadd.f32 %v3949, %v3951
          %4110 = vadd.xlane.f32.xlu0 %v4109
          %v4111 = vpop.xlane.xlu0 %4110
          %v4112 = vadd.f32 %v3984, %v4018
          %v4113 = vadd.f32 %v3985, %v4021
          %v4114 = vadd.f32 %v3986, %v4024
          %v4115 = vadd.f32 %v3987, %v4027
          %v4116 = vadd.f32 %v3988, %v4030
          %v4117 = vadd.f32 %v3989, %v4033
          %v4118 = vadd.f32 %v3990, %v4036
          %v4119 = vadd.f32 %v3991, %v4039
          %v4120 = vadd.f32 %v3992, %v4042
          %v4121 = vadd.f32 %v3993, %v4045
          %v4122 = vadd.f32 %v3994, %v4048
          %v4123 = vadd.f32 %v3995, %v4051
          %v4124 = vadd.f32 %v3996, %v4054
          %v4125 = vadd.f32 %v3997, %v4057
          %v4126 = vadd.f32 %v3998, %v4060
          %v4127 = vadd.f32 %v3999, %v4063
          %v4128 = vadd.f32 %v4000, %v4066
          %v4129 = vadd.f32 %v4001, %v4069
          %v4130 = vadd.f32 %v4002, %v4072
          %v4131 = vadd.f32 %v4003, %v4075
          %v4132 = vadd.f32 %v4004, %v4078
          %v4133 = vadd.f32 %v4005, %v4081
          %v4134 = vadd.f32 %v4006, %v4084
          %v4135 = vadd.f32 %v4007, %v4087
          %v4136 = vadd.f32 %v4008, %v4090
          %v4137 = vadd.f32 %v4009, %v4093
          %v4138 = vadd.f32 %v4010, %v4096
          %v4139 = vadd.f32 %v4011, %v4099
          %v4140 = vadd.f32 %v4012, %v4102
          %v4141 = vadd.f32 %v4013, %v4105
          %v4142 = vadd.f32 %v4014, %v4108
          %v4143 = vadd.f32 %v4015, %v4111
          %vm4144 = vcmask 7168
          %4145 = vst.msk [vmem:[#allocation4] sm:$0xff] %vm4144, %v4112
          %4146 = vst.msk [vmem:[#allocation4 + $0x8] sm:$0xff] %vm4144, %v4113
          %4147 = vst.msk [vmem:[#allocation4 + $0x10] sm:$0xff] %vm4144, %v4114
          %4148 = vst.msk [vmem:[#allocation4 + $0x18] sm:$0xff] %vm4144, %v4115
          %4149 = vst.msk [vmem:[#allocation4 + $0x20] sm:$0xff] %vm4144, %v4116
          %4150 = vst.msk [vmem:[#allocation4 + $0x28] sm:$0xff] %vm4144, %v4117
          %4151 = vst.msk [vmem:[#allocation4 + $0x30] sm:$0xff] %vm4144, %v4118
          %4152 = vst.msk [vmem:[#allocation4 + $0x38] sm:$0xff] %vm4144, %v4119
          %4153 = vst.msk [vmem:[#allocation4 + $0x40] sm:$0xff] %vm4144, %v4120
          %4154 = vst.msk [vmem:[#allocation4 + $0x48] sm:$0xff] %vm4144, %v4121
          %4155 = vst.msk [vmem:[#allocation4 + $0x50] sm:$0xff] %vm4144, %v4122
          %4156 = vst.msk [vmem:[#allocation4 + $0x58] sm:$0xff] %vm4144, %v4123
          %4157 = vst.msk [vmem:[#allocation4 + $0x60] sm:$0xff] %vm4144, %v4124
          %4158 = vst.msk [vmem:[#allocation4 + $0x68] sm:$0xff] %vm4144, %v4125
          %4159 = vst.msk [vmem:[#allocation4 + $0x70] sm:$0xff] %vm4144, %v4126
          %4160 = vst.msk [vmem:[#allocation4 + $0x78] sm:$0xff] %vm4144, %v4127
          %4161 = vst.msk [vmem:[#allocation4 + $0x80] sm:$0xff] %vm4144, %v4128
          %4162 = vst.msk [vmem:[#allocation4 + $0x88] sm:$0xff] %vm4144, %v4129
          %4163 = vst.msk [vmem:[#allocation4 + $0x90] sm:$0xff] %vm4144, %v4130
          %4164 = vst.msk [vmem:[#allocation4 + $0x98] sm:$0xff] %vm4144, %v4131
          %4165 = vst.msk [vmem:[#allocation4 + $0xa0] sm:$0xff] %vm4144, %v4132
          %4166 = vst.msk [vmem:[#allocation4 + $0xa8] sm:$0xff] %vm4144, %v4133
          %4167 = vst.msk [vmem:[#allocation4 + $0xb0] sm:$0xff] %vm4144, %v4134
          %4168 = vst.msk [vmem:[#allocation4 + $0xb8] sm:$0xff] %vm4144, %v4135
          %4169 = vst.msk [vmem:[#allocation4 + $0xc0] sm:$0xff] %vm4144, %v4136
          %4170 = vst.msk [vmem:[#allocation4 + $0xc8] sm:$0xff] %vm4144, %v4137
          %4171 = vst.msk [vmem:[#allocation4 + $0xd0] sm:$0xff] %vm4144, %v4138
          %4172 = vst.msk [vmem:[#allocation4 + $0xd8] sm:$0xff] %vm4144, %v4139
          %4173 = vst.msk [vmem:[#allocation4 + $0xe0] sm:$0xff] %vm4144, %v4140
          %4174 = vst.msk [vmem:[#allocation4 + $0xe8] sm:$0xff] %vm4144, %v4141
          %4175 = vst.msk [vmem:[#allocation4 + $0xf0] sm:$0xff] %vm4144, %v4142
          %4176 = vst.msk [vmem:[#allocation4 + $0xf8] sm:$0xff] %vm4144, %v4143
          %v4177 = vld [vmem:[#allocation5] sm:$0xff]
          %v4178 = vld [vmem:[#allocation5 + $0x8] sm:$0xff]
          %v4179 = vld [vmem:[#allocation5 + $0x10] sm:$0xff]
          %v4180 = vld [vmem:[#allocation5 + $0x18] sm:$0xff]
          %v4181 = vld [vmem:[#allocation5 + $0x20] sm:$0xff]
          %v4182 = vld [vmem:[#allocation5 + $0x28] sm:$0xff]
          %v4183 = vld [vmem:[#allocation5 + $0x30] sm:$0xff]
          %v4184 = vld [vmem:[#allocation5 + $0x38] sm:$0xff]
          %v4185 = vld [vmem:[#allocation5 + $0x40] sm:$0xff]
          %v4186 = vld [vmem:[#allocation5 + $0x48] sm:$0xff]
          %v4187 = vld [vmem:[#allocation5 + $0x50] sm:$0xff]
          %v4188 = vld [vmem:[#allocation5 + $0x58] sm:$0xff]
          %v4189 = vld [vmem:[#allocation5 + $0x60] sm:$0xff]
          %v4190 = vld [vmem:[#allocation5 + $0x68] sm:$0xff]
          %v4191 = vld [vmem:[#allocation5 + $0x70] sm:$0xff]
          %v4192 = vld [vmem:[#allocation5 + $0x78] sm:$0xff]
          %v4193 = vld [vmem:[#allocation5 + $0x80] sm:$0xff]
          %v4194 = vld [vmem:[#allocation5 + $0x88] sm:$0xff]
          %v4195 = vld [vmem:[#allocation5 + $0x90] sm:$0xff]
          %v4196 = vld [vmem:[#allocation5 + $0x98] sm:$0xff]
          %v4197 = vld [vmem:[#allocation5 + $0xa0] sm:$0xff]
          %v4198 = vld [vmem:[#allocation5 + $0xa8] sm:$0xff]
          %v4199 = vld [vmem:[#allocation5 + $0xb0] sm:$0xff]
          %v4200 = vld [vmem:[#allocation5 + $0xb8] sm:$0xff]
          %v4201 = vld [vmem:[#allocation5 + $0xc0] sm:$0xff]
          %v4202 = vld [vmem:[#allocation5 + $0xc8] sm:$0xff]
          %v4203 = vld [vmem:[#allocation5 + $0xd0] sm:$0xff]
          %v4204 = vld [vmem:[#allocation5 + $0xd8] sm:$0xff]
          %v4205 = vld [vmem:[#allocation5 + $0xe0] sm:$0xff]
          %v4206 = vld [vmem:[#allocation5 + $0xe8] sm:$0xff]
          %v4207 = vld [vmem:[#allocation5 + $0xf0] sm:$0xff]
          %v4208 = vld [vmem:[#allocation5 + $0xf8] sm:$0xff]
          %4210 = vset.pattern.permute.xlu0 0
          %4211 = vperm.xlu0 %4210, %v3537
          %v4212 = vpop.permute.xlu0 %4211
          %4215 = vset.pattern.permute.xlu0 0
          %4216 = vperm.xlu0 %4215, %v3539
          %v4217 = vpop.permute.xlu0 %4216
          %4220 = vset.pattern.permute.xlu0 0
          %4221 = vperm.xlu0 %4220, %v3541
          %v4222 = vpop.permute.xlu0 %4221
          %4225 = vset.pattern.permute.xlu0 0
          %4226 = vperm.xlu0 %4225, %v3543
          %v4227 = vpop.permute.xlu0 %4226
          %4230 = vset.pattern.permute.xlu0 0
          %4231 = vperm.xlu0 %4230, %v3545
          %v4232 = vpop.permute.xlu0 %4231
          %4235 = vset.pattern.permute.xlu0 0
          %4236 = vperm.xlu0 %4235, %v3547
          %v4237 = vpop.permute.xlu0 %4236
          %4240 = vset.pattern.permute.xlu0 0
          %4241 = vperm.xlu0 %4240, %v3549
          %v4242 = vpop.permute.xlu0 %4241
          %4245 = vset.pattern.permute.xlu0 0
          %4246 = vperm.xlu0 %4245, %v3551
          %v4247 = vpop.permute.xlu0 %4246
          %4250 = vset.pattern.permute.xlu0 0
          %4251 = vperm.xlu0 %4250, %v3553
          %v4252 = vpop.permute.xlu0 %4251
          %4255 = vset.pattern.permute.xlu0 0
          %4256 = vperm.xlu0 %4255, %v3555
          %v4257 = vpop.permute.xlu0 %4256
          %4260 = vset.pattern.permute.xlu0 0
          %4261 = vperm.xlu0 %4260, %v3557
          %v4262 = vpop.permute.xlu0 %4261
          %4265 = vset.pattern.permute.xlu0 0
          %4266 = vperm.xlu0 %4265, %v3559
          %v4267 = vpop.permute.xlu0 %4266
          %4270 = vset.pattern.permute.xlu0 0
          %4271 = vperm.xlu0 %4270, %v3561
          %v4272 = vpop.permute.xlu0 %4271
          %4275 = vset.pattern.permute.xlu0 0
          %4276 = vperm.xlu0 %4275, %v3563
          %v4277 = vpop.permute.xlu0 %4276
          %4280 = vset.pattern.permute.xlu0 0
          %4281 = vperm.xlu0 %4280, %v3565
          %v4282 = vpop.permute.xlu0 %4281
          %4285 = vset.pattern.permute.xlu0 0
          %4286 = vperm.xlu0 %4285, %v3567
          %v4287 = vpop.permute.xlu0 %4286
          %4290 = vset.pattern.permute.xlu0 0
          %4291 = vperm.xlu0 %4290, %v3569
          %v4292 = vpop.permute.xlu0 %4291
          %4295 = vset.pattern.permute.xlu0 0
          %4296 = vperm.xlu0 %4295, %v3571
          %v4297 = vpop.permute.xlu0 %4296
          %4300 = vset.pattern.permute.xlu0 0
          %4301 = vperm.xlu0 %4300, %v3573
          %v4302 = vpop.permute.xlu0 %4301
          %4305 = vset.pattern.permute.xlu0 0
          %4306 = vperm.xlu0 %4305, %v3575
          %v4307 = vpop.permute.xlu0 %4306
          %4310 = vset.pattern.permute.xlu0 0
          %4311 = vperm.xlu0 %4310, %v3577
          %v4312 = vpop.permute.xlu0 %4311
          %4315 = vset.pattern.permute.xlu0 0
          %4316 = vperm.xlu0 %4315, %v3579
          %v4317 = vpop.permute.xlu0 %4316
          %4320 = vset.pattern.permute.xlu0 0
          %4321 = vperm.xlu0 %4320, %v3581
          %v4322 = vpop.permute.xlu0 %4321
          %4325 = vset.pattern.permute.xlu0 0
          %4326 = vperm.xlu0 %4325, %v3583
          %v4327 = vpop.permute.xlu0 %4326
          %4330 = vset.pattern.permute.xlu0 0
          %4331 = vperm.xlu0 %4330, %v3585
          %v4332 = vpop.permute.xlu0 %4331
          %4335 = vset.pattern.permute.xlu0 0
          %4336 = vperm.xlu0 %4335, %v3587
          %v4337 = vpop.permute.xlu0 %4336
          %4340 = vset.pattern.permute.xlu0 0
          %4341 = vperm.xlu0 %4340, %v3589
          %v4342 = vpop.permute.xlu0 %4341
          %4345 = vset.pattern.permute.xlu0 0
          %4346 = vperm.xlu0 %4345, %v3591
          %v4347 = vpop.permute.xlu0 %4346
          %4350 = vset.pattern.permute.xlu0 0
          %4351 = vperm.xlu0 %4350, %v3593
          %v4352 = vpop.permute.xlu0 %4351
          %4355 = vset.pattern.permute.xlu0 0
          %4356 = vperm.xlu0 %4355, %v3595
          %v4357 = vpop.permute.xlu0 %4356
          %4360 = vset.pattern.permute.xlu0 0
          %4361 = vperm.xlu0 %4360, %v3597
          %v4362 = vpop.permute.xlu0 %4361
          %4365 = vset.pattern.permute.xlu0 0
          %4366 = vperm.xlu0 %4365, %v3599
          %v4367 = vpop.permute.xlu0 %4366
          %v4369 = vmul.f32 %v4212, %v4177
          %v4370 = vmul.f32 %v4217, %v4178
          %v4371 = vmul.f32 %v4222, %v4179
          %v4372 = vmul.f32 %v4227, %v4180
          %v4373 = vmul.f32 %v4232, %v4181
          %v4374 = vmul.f32 %v4237, %v4182
          %v4375 = vmul.f32 %v4242, %v4183
          %v4376 = vmul.f32 %v4247, %v4184
          %v4377 = vmul.f32 %v4252, %v4185
          %v4378 = vmul.f32 %v4257, %v4186
          %v4379 = vmul.f32 %v4262, %v4187
          %v4380 = vmul.f32 %v4267, %v4188
          %v4381 = vmul.f32 %v4272, %v4189
          %v4382 = vmul.f32 %v4277, %v4190
          %v4383 = vmul.f32 %v4282, %v4191
          %v4384 = vmul.f32 %v4287, %v4192
          %v4385 = vmul.f32 %v4292, %v4193
          %v4386 = vmul.f32 %v4297, %v4194
          %v4387 = vmul.f32 %v4302, %v4195
          %v4388 = vmul.f32 %v4307, %v4196
          %v4389 = vmul.f32 %v4312, %v4197
          %v4390 = vmul.f32 %v4317, %v4198
          %v4391 = vmul.f32 %v4322, %v4199
          %v4392 = vmul.f32 %v4327, %v4200
          %v4393 = vmul.f32 %v4332, %v4201
          %v4394 = vmul.f32 %v4337, %v4202
          %v4395 = vmul.f32 %v4342, %v4203
          %v4396 = vmul.f32 %v4347, %v4204
          %v4397 = vmul.f32 %v4352, %v4205
          %v4398 = vmul.f32 %v4357, %v4206
          %v4399 = vmul.f32 %v4362, %v4207
          %v4400 = vmul.f32 %v4367, %v4208
          %v4401 = vpack.c.bf16 %v3829, %v3825
          %v4402 = vpack.c.bf16 %v3831, %v3827
          %v4403 = vpack.c.bf16 %v3837, %v3833
          %v4404 = vpack.c.bf16 %v3839, %v3835
          %v4405 = vpack.c.bf16 %v3845, %v3841
          %v4406 = vpack.c.bf16 %v3847, %v3843
          %v4407 = vpack.c.bf16 %v3853, %v3849
          %v4408 = vpack.c.bf16 %v3855, %v3851
          %v4409 = vpack.c.bf16 %v3861, %v3857
          %v4410 = vpack.c.bf16 %v3863, %v3859
          %v4411 = vpack.c.bf16 %v3869, %v3865
          %v4412 = vpack.c.bf16 %v3871, %v3867
          %v4413 = vpack.c.bf16 %v3877, %v3873
          %v4414 = vpack.c.bf16 %v3879, %v3875
          %v4415 = vpack.c.bf16 %v3885, %v3881
          %v4416 = vpack.c.bf16 %v3887, %v3883
          %v4417 = vpack.c.bf16 %v3893, %v3889
          %v4418 = vpack.c.bf16 %v3895, %v3891
          %v4419 = vpack.c.bf16 %v3901, %v3897
          %v4420 = vpack.c.bf16 %v3903, %v3899
          %v4421 = vpack.c.bf16 %v3909, %v3905
          %v4422 = vpack.c.bf16 %v3911, %v3907
          %v4423 = vpack.c.bf16 %v3917, %v3913
          %v4424 = vpack.c.bf16 %v3919, %v3915
          %v4425 = vpack.c.bf16 %v3925, %v3921
          %v4426 = vpack.c.bf16 %v3927, %v3923
          %v4427 = vpack.c.bf16 %v3933, %v3929
          %v4428 = vpack.c.bf16 %v3935, %v3931
          %v4429 = vpack.c.bf16 %v3941, %v3937
          %v4430 = vpack.c.bf16 %v3943, %v3939
          %v4431 = vpack.c.bf16 %v3949, %v3945
          %v4432 = vpack.c.bf16 %v3951, %v3947
          %v4465 = vunpack.c.l.b16 %v2708
          %v4466 = vunpack.c.l.b16 %v2709
          %v4467 = vunpack.c.l.b16 %v2710
          %v4468 = vunpack.c.l.b16 %v2711
          %v4469 = vunpack.c.l.b16 %v2712
          %v4470 = vunpack.c.l.b16 %v2713
          %v4471 = vunpack.c.l.b16 %v2714
          %v4472 = vunpack.c.l.b16 %v2715
          %v4473 = vunpack.c.l.b16 %v2716
          %v4474 = vunpack.c.l.b16 %v2717
          %v4475 = vunpack.c.l.b16 %v2718
          %v4476 = vunpack.c.l.b16 %v2719
          %v4477 = vunpack.c.l.b16 %v2720
          %v4478 = vunpack.c.l.b16 %v2721
          %v4479 = vunpack.c.l.b16 %v2722
          %v4480 = vunpack.c.l.b16 %v2723
          %v4481 = vunpack.c.l.b16 %v2724
          %v4482 = vunpack.c.l.b16 %v2725
          %v4483 = vunpack.c.l.b16 %v2726
          %v4484 = vunpack.c.l.b16 %v2727
          %v4485 = vunpack.c.l.b16 %v2728
          %v4486 = vunpack.c.l.b16 %v2729
          %v4487 = vunpack.c.l.b16 %v2730
          %v4488 = vunpack.c.l.b16 %v2731
          %v4489 = vunpack.c.l.b16 %v2732
          %v4490 = vunpack.c.l.b16 %v2733
          %v4491 = vunpack.c.l.b16 %v2734
          %v4492 = vunpack.c.l.b16 %v2735
          %v4493 = vunpack.c.l.b16 %v2736
          %v4494 = vunpack.c.l.b16 %v2737
          %v4495 = vunpack.c.l.b16 %v2738
          %v4496 = vunpack.c.l.b16 %v2739
          %v4497 = vpack.c.b16 %v4466, %v4465
          %v4498 = vpack.c.b16 %v4468, %v4467
          %v4499 = vpack.c.b16 %v4470, %v4469
          %v4500 = vpack.c.b16 %v4472, %v4471
          %v4501 = vpack.c.b16 %v4474, %v4473
          %v4502 = vpack.c.b16 %v4476, %v4475
          %v4503 = vpack.c.b16 %v4478, %v4477
          %v4504 = vpack.c.b16 %v4480, %v4479
          %v4505 = vpack.c.b16 %v4482, %v4481
          %v4506 = vpack.c.b16 %v4484, %v4483
          %v4507 = vpack.c.b16 %v4486, %v4485
          %v4508 = vpack.c.b16 %v4488, %v4487
          %v4509 = vpack.c.b16 %v4490, %v4489
          %v4510 = vpack.c.b16 %v4492, %v4491
          %v4511 = vpack.c.b16 %v4494, %v4493
          %v4512 = vpack.c.b16 %v4496, %v4495
          %4529 = vmatpush.bf16.msra.mxu0 %v4504
          %4530 = vmatpush.bf16.msra.mxu0 %v4503
          %4531 = vmatpush.bf16.msra.mxu0 %v4502
          %4532 = vmatpush.bf16.msra.mxu0 %v4501
          %4533 = vmatpush.bf16.msra.mxu0 %v4500
          %4534 = vmatpush.bf16.msra.mxu0 %v4499
          %4535 = vmatpush.bf16.msra.mxu0 %v4498
          %4536 = vmatpush.bf16.msra.mxu0 %v4497
          %4537 = vmatmul.bf16.gmra.mxu0 %v4401
          %v4538 = vpop.f32.mrf.mxu0
          %v4539 = vadd.f32 0.0, %v4538
          %v4540 = vpop.f32.mrf.mxu0
          %v4541 = vadd.f32 0.0, %v4540
          %4542 = vmatmul.bf16.gmra.mxu0 %v4403
          %v4543 = vpop.f32.mrf.mxu0
          %v4544 = vadd.f32 0.0, %v4543
          %v4545 = vpop.f32.mrf.mxu0
          %v4546 = vadd.f32 0.0, %v4545
          %4547 = vmatmul.bf16.gmra.mxu0 %v4405
          %v4548 = vpop.f32.mrf.mxu0
          %v4549 = vadd.f32 0.0, %v4548
          %v4550 = vpop.f32.mrf.mxu0
          %v4551 = vadd.f32 0.0, %v4550
          %4552 = vmatmul.bf16.gmra.mxu0 %v4407
          %v4553 = vpop.f32.mrf.mxu0
          %v4554 = vadd.f32 0.0, %v4553
          %v4555 = vpop.f32.mrf.mxu0
          %v4556 = vadd.f32 0.0, %v4555
          %4557 = vmatmul.bf16.gmra.mxu0 %v4409
          %v4558 = vpop.f32.mrf.mxu0
          %v4559 = vadd.f32 0.0, %v4558
          %v4560 = vpop.f32.mrf.mxu0
          %v4561 = vadd.f32 0.0, %v4560
          %4562 = vmatmul.bf16.gmra.mxu0 %v4411
          %v4563 = vpop.f32.mrf.mxu0
          %v4564 = vadd.f32 0.0, %v4563
          %v4565 = vpop.f32.mrf.mxu0
          %v4566 = vadd.f32 0.0, %v4565
          %4567 = vmatmul.bf16.gmra.mxu0 %v4413
          %v4568 = vpop.f32.mrf.mxu0
          %v4569 = vadd.f32 0.0, %v4568
          %v4570 = vpop.f32.mrf.mxu0
          %v4571 = vadd.f32 0.0, %v4570
          %4572 = vmatmul.bf16.gmra.mxu0 %v4415
          %v4573 = vpop.f32.mrf.mxu0
          %v4574 = vadd.f32 0.0, %v4573
          %v4575 = vpop.f32.mrf.mxu0
          %v4576 = vadd.f32 0.0, %v4575
          %4577 = vmatmul.bf16.gmra.mxu0 %v4417
          %v4578 = vpop.f32.mrf.mxu0
          %v4579 = vadd.f32 0.0, %v4578
          %v4580 = vpop.f32.mrf.mxu0
          %v4581 = vadd.f32 0.0, %v4580
          %4582 = vmatmul.bf16.gmra.mxu0 %v4419
          %v4583 = vpop.f32.mrf.mxu0
          %v4584 = vadd.f32 0.0, %v4583
          %v4585 = vpop.f32.mrf.mxu0
          %v4586 = vadd.f32 0.0, %v4585
          %4587 = vmatmul.bf16.gmra.mxu0 %v4421
          %v4588 = vpop.f32.mrf.mxu0
          %v4589 = vadd.f32 0.0, %v4588
          %v4590 = vpop.f32.mrf.mxu0
          %v4591 = vadd.f32 0.0, %v4590
          %4592 = vmatmul.bf16.gmra.mxu0 %v4423
          %v4593 = vpop.f32.mrf.mxu0
          %v4594 = vadd.f32 0.0, %v4593
          %v4595 = vpop.f32.mrf.mxu0
          %v4596 = vadd.f32 0.0, %v4595
          %4597 = vmatmul.bf16.gmra.mxu0 %v4425
          %v4598 = vpop.f32.mrf.mxu0
          %v4599 = vadd.f32 0.0, %v4598
          %v4600 = vpop.f32.mrf.mxu0
          %v4601 = vadd.f32 0.0, %v4600
          %4602 = vmatmul.bf16.gmra.mxu0 %v4427
          %v4603 = vpop.f32.mrf.mxu0
          %v4604 = vadd.f32 0.0, %v4603
          %v4605 = vpop.f32.mrf.mxu0
          %v4606 = vadd.f32 0.0, %v4605
          %4607 = vmatmul.bf16.gmra.mxu0 %v4429
          %v4608 = vpop.f32.mrf.mxu0
          %v4609 = vadd.f32 0.0, %v4608
          %v4610 = vpop.f32.mrf.mxu0
          %v4611 = vadd.f32 0.0, %v4610
          %4612 = vmatmul.bf16.gmra.mxu0 %v4431
          %v4613 = vpop.f32.mrf.mxu0
          %v4614 = vadd.f32 0.0, %v4613
          %v4615 = vpop.f32.mrf.mxu0
          %v4616 = vadd.f32 0.0, %v4615
          %4617 = vdwg.mxu0
          %4618 = vmatpush.bf16.msra.mxu0 %v4512
          %4619 = vmatpush.bf16.msra.mxu0 %v4511
          %4620 = vmatpush.bf16.msra.mxu0 %v4510
          %4621 = vmatpush.bf16.msra.mxu0 %v4509
          %4622 = vmatpush.bf16.msra.mxu0 %v4508
          %4623 = vmatpush.bf16.msra.mxu0 %v4507
          %4624 = vmatpush.bf16.msra.mxu0 %v4506
          %4625 = vmatpush.bf16.msra.mxu0 %v4505
          %4626 = vmatmul.bf16.gmra.mxu0 %v4402
          %v4627 = vpop.f32.mrf.mxu0
          %v4628 = vadd.f32 %v4539, %v4627
          %v4629 = vpop.f32.mrf.mxu0
          %v4630 = vadd.f32 %v4541, %v4629
          %4631 = vmatmul.bf16.gmra.mxu0 %v4404
          %v4632 = vpop.f32.mrf.mxu0
          %v4633 = vadd.f32 %v4544, %v4632
          %v4634 = vpop.f32.mrf.mxu0
          %v4635 = vadd.f32 %v4546, %v4634
          %4636 = vmatmul.bf16.gmra.mxu0 %v4406
          %v4637 = vpop.f32.mrf.mxu0
          %v4638 = vadd.f32 %v4549, %v4637
          %v4639 = vpop.f32.mrf.mxu0
          %v4640 = vadd.f32 %v4551, %v4639
          %4641 = vmatmul.bf16.gmra.mxu0 %v4408
          %v4642 = vpop.f32.mrf.mxu0
          %v4643 = vadd.f32 %v4554, %v4642
          %v4644 = vpop.f32.mrf.mxu0
          %v4645 = vadd.f32 %v4556, %v4644
          %4646 = vmatmul.bf16.gmra.mxu0 %v4410
          %v4647 = vpop.f32.mrf.mxu0
          %v4648 = vadd.f32 %v4559, %v4647
          %v4649 = vpop.f32.mrf.mxu0
          %v4650 = vadd.f32 %v4561, %v4649
          %4651 = vmatmul.bf16.gmra.mxu0 %v4412
          %v4652 = vpop.f32.mrf.mxu0
          %v4653 = vadd.f32 %v4564, %v4652
          %v4654 = vpop.f32.mrf.mxu0
          %v4655 = vadd.f32 %v4566, %v4654
          %4656 = vmatmul.bf16.gmra.mxu0 %v4414
          %v4657 = vpop.f32.mrf.mxu0
          %v4658 = vadd.f32 %v4569, %v4657
          %v4659 = vpop.f32.mrf.mxu0
          %v4660 = vadd.f32 %v4571, %v4659
          %4661 = vmatmul.bf16.gmra.mxu0 %v4416
          %v4662 = vpop.f32.mrf.mxu0
          %v4663 = vadd.f32 %v4574, %v4662
          %v4664 = vpop.f32.mrf.mxu0
          %v4665 = vadd.f32 %v4576, %v4664
          %4666 = vmatmul.bf16.gmra.mxu0 %v4418
          %v4667 = vpop.f32.mrf.mxu0
          %v4668 = vadd.f32 %v4579, %v4667
          %v4669 = vpop.f32.mrf.mxu0
          %v4670 = vadd.f32 %v4581, %v4669
          %4671 = vmatmul.bf16.gmra.mxu0 %v4420
          %v4672 = vpop.f32.mrf.mxu0
          %v4673 = vadd.f32 %v4584, %v4672
          %v4674 = vpop.f32.mrf.mxu0
          %v4675 = vadd.f32 %v4586, %v4674
          %4676 = vmatmul.bf16.gmra.mxu0 %v4422
          %v4677 = vpop.f32.mrf.mxu0
          %v4678 = vadd.f32 %v4589, %v4677
          %v4679 = vpop.f32.mrf.mxu0
          %v4680 = vadd.f32 %v4591, %v4679
          %4681 = vmatmul.bf16.gmra.mxu0 %v4424
          %v4682 = vpop.f32.mrf.mxu0
          %v4683 = vadd.f32 %v4594, %v4682
          %v4684 = vpop.f32.mrf.mxu0
          %v4685 = vadd.f32 %v4596, %v4684
          %4686 = vmatmul.bf16.gmra.mxu0 %v4426
          %v4687 = vpop.f32.mrf.mxu0
          %v4688 = vadd.f32 %v4599, %v4687
          %v4689 = vpop.f32.mrf.mxu0
          %v4690 = vadd.f32 %v4601, %v4689
          %4691 = vmatmul.bf16.gmra.mxu0 %v4428
          %v4692 = vpop.f32.mrf.mxu0
          %v4693 = vadd.f32 %v4604, %v4692
          %v4694 = vpop.f32.mrf.mxu0
          %v4695 = vadd.f32 %v4606, %v4694
          %4696 = vmatmul.bf16.gmra.mxu0 %v4430
          %v4697 = vpop.f32.mrf.mxu0
          %v4698 = vadd.f32 %v4609, %v4697
          %v4699 = vpop.f32.mrf.mxu0
          %v4700 = vadd.f32 %v4611, %v4699
          %4701 = vmatmul.bf16.gmra.mxu0 %v4432
          %v4702 = vpop.f32.mrf.mxu0
          %v4703 = vadd.f32 %v4614, %v4702
          %v4704 = vpop.f32.mrf.mxu0
          %v4705 = vadd.f32 %v4616, %v4704
          %4706 = vdwg.mxu0
          %v4707 = vadd.f32 %v4369, %v4628
          %v4708 = vadd.f32 %v4370, %v4630
          %v4709 = vadd.f32 %v4371, %v4633
          %v4710 = vadd.f32 %v4372, %v4635
          %v4711 = vadd.f32 %v4373, %v4638
          %v4712 = vadd.f32 %v4374, %v4640
          %v4713 = vadd.f32 %v4375, %v4643
          %v4714 = vadd.f32 %v4376, %v4645
          %v4715 = vadd.f32 %v4377, %v4648
          %v4716 = vadd.f32 %v4378, %v4650
          %v4717 = vadd.f32 %v4379, %v4653
          %v4718 = vadd.f32 %v4380, %v4655
          %v4719 = vadd.f32 %v4381, %v4658
          %v4720 = vadd.f32 %v4382, %v4660
          %v4721 = vadd.f32 %v4383, %v4663
          %v4722 = vadd.f32 %v4384, %v4665
          %v4723 = vadd.f32 %v4385, %v4668
          %v4724 = vadd.f32 %v4386, %v4670
          %v4725 = vadd.f32 %v4387, %v4673
          %v4726 = vadd.f32 %v4388, %v4675
          %v4727 = vadd.f32 %v4389, %v4678
          %v4728 = vadd.f32 %v4390, %v4680
          %v4729 = vadd.f32 %v4391, %v4683
          %v4730 = vadd.f32 %v4392, %v4685
          %v4731 = vadd.f32 %v4393, %v4688
          %v4732 = vadd.f32 %v4394, %v4690
          %v4733 = vadd.f32 %v4395, %v4693
          %v4734 = vadd.f32 %v4396, %v4695
          %v4735 = vadd.f32 %v4397, %v4698
          %v4736 = vadd.f32 %v4398, %v4700
          %v4737 = vadd.f32 %v4399, %v4703
          %v4738 = vadd.f32 %v4400, %v4705
          %4739 = vst [vmem:[#allocation5] sm:$0xff] %v4707
          %4740 = vst [vmem:[#allocation5 + $0x8] sm:$0xff] %v4708
          %4741 = vst [vmem:[#allocation5 + $0x10] sm:$0xff] %v4709
          %4742 = vst [vmem:[#allocation5 + $0x18] sm:$0xff] %v4710
          %4743 = vst [vmem:[#allocation5 + $0x20] sm:$0xff] %v4711
          %4744 = vst [vmem:[#allocation5 + $0x28] sm:$0xff] %v4712
          %4745 = vst [vmem:[#allocation5 + $0x30] sm:$0xff] %v4713
          %4746 = vst [vmem:[#allocation5 + $0x38] sm:$0xff] %v4714
          %4747 = vst [vmem:[#allocation5 + $0x40] sm:$0xff] %v4715
          %4748 = vst [vmem:[#allocation5 + $0x48] sm:$0xff] %v4716
          %4749 = vst [vmem:[#allocation5 + $0x50] sm:$0xff] %v4717
          %4750 = vst [vmem:[#allocation5 + $0x58] sm:$0xff] %v4718
          %4751 = vst [vmem:[#allocation5 + $0x60] sm:$0xff] %v4719
          %4752 = vst [vmem:[#allocation5 + $0x68] sm:$0xff] %v4720
          %4753 = vst [vmem:[#allocation5 + $0x70] sm:$0xff] %v4721
          %4754 = vst [vmem:[#allocation5 + $0x78] sm:$0xff] %v4722
          %4755 = vst [vmem:[#allocation5 + $0x80] sm:$0xff] %v4723
          %4756 = vst [vmem:[#allocation5 + $0x88] sm:$0xff] %v4724
          %4757 = vst [vmem:[#allocation5 + $0x90] sm:$0xff] %v4725
          %4758 = vst [vmem:[#allocation5 + $0x98] sm:$0xff] %v4726
          %4759 = vst [vmem:[#allocation5 + $0xa0] sm:$0xff] %v4727
          %4760 = vst [vmem:[#allocation5 + $0xa8] sm:$0xff] %v4728
          %4761 = vst [vmem:[#allocation5 + $0xb0] sm:$0xff] %v4729
          %4762 = vst [vmem:[#allocation5 + $0xb8] sm:$0xff] %v4730
          %4763 = vst [vmem:[#allocation5 + $0xc0] sm:$0xff] %v4731
          %4764 = vst [vmem:[#allocation5 + $0xc8] sm:$0xff] %v4732
          %4765 = vst [vmem:[#allocation5 + $0xd0] sm:$0xff] %v4733
          %4766 = vst [vmem:[#allocation5 + $0xd8] sm:$0xff] %v4734
          %4767 = vst [vmem:[#allocation5 + $0xe0] sm:$0xff] %v4735
          %4768 = vst [vmem:[#allocation5 + $0xe8] sm:$0xff] %v4736
          %4769 = vst [vmem:[#allocation5 + $0xf0] sm:$0xff] %v4737
          %4770 = vst [vmem:[#allocation5 + $0xf8] sm:$0xff] %v4738
          %4771 = vst.msk [vmem:[#allocation3] sm:$0xff] %vm4144, %v3472
          %4772 = vst.msk [vmem:[#allocation3 + $0x8] sm:$0xff] %vm4144, %v3473
          %4773 = vst.msk [vmem:[#allocation3 + $0x10] sm:$0xff] %vm4144, %v3474
          %4774 = vst.msk [vmem:[#allocation3 + $0x18] sm:$0xff] %vm4144, %v3475
          %4775 = vst.msk [vmem:[#allocation3 + $0x20] sm:$0xff] %vm4144, %v3476
          %4776 = vst.msk [vmem:[#allocation3 + $0x28] sm:$0xff] %vm4144, %v3477
          %4777 = vst.msk [vmem:[#allocation3 + $0x30] sm:$0xff] %vm4144, %v3478
          %4778 = vst.msk [vmem:[#allocation3 + $0x38] sm:$0xff] %vm4144, %v3479
          %4779 = vst.msk [vmem:[#allocation3 + $0x40] sm:$0xff] %vm4144, %v3480
          %4780 = vst.msk [vmem:[#allocation3 + $0x48] sm:$0xff] %vm4144, %v3481
          %4781 = vst.msk [vmem:[#allocation3 + $0x50] sm:$0xff] %vm4144, %v3482
          %4782 = vst.msk [vmem:[#allocation3 + $0x58] sm:$0xff] %vm4144, %v3483
          %4783 = vst.msk [vmem:[#allocation3 + $0x60] sm:$0xff] %vm4144, %v3484
          %4784 = vst.msk [vmem:[#allocation3 + $0x68] sm:$0xff] %vm4144, %v3485
          %4785 = vst.msk [vmem:[#allocation3 + $0x70] sm:$0xff] %vm4144, %v3486
          %4786 = vst.msk [vmem:[#allocation3 + $0x78] sm:$0xff] %vm4144, %v3487
          %4787 = vst.msk [vmem:[#allocation3 + $0x80] sm:$0xff] %vm4144, %v3488
          %4788 = vst.msk [vmem:[#allocation3 + $0x88] sm:$0xff] %vm4144, %v3489
          %4789 = vst.msk [vmem:[#allocation3 + $0x90] sm:$0xff] %vm4144, %v3490
          %4790 = vst.msk [vmem:[#allocation3 + $0x98] sm:$0xff] %vm4144, %v3491
          %4791 = vst.msk [vmem:[#allocation3 + $0xa0] sm:$0xff] %vm4144, %v3492
          %4792 = vst.msk [vmem:[#allocation3 + $0xa8] sm:$0xff] %vm4144, %v3493
          %4793 = vst.msk [vmem:[#allocation3 + $0xb0] sm:$0xff] %vm4144, %v3494
          %4794 = vst.msk [vmem:[#allocation3 + $0xb8] sm:$0xff] %vm4144, %v3495
          %4795 = vst.msk [vmem:[#allocation3 + $0xc0] sm:$0xff] %vm4144, %v3496
          %4796 = vst.msk [vmem:[#allocation3 + $0xc8] sm:$0xff] %vm4144, %v3497
          %4797 = vst.msk [vmem:[#allocation3 + $0xd0] sm:$0xff] %vm4144, %v3498
          %4798 = vst.msk [vmem:[#allocation3 + $0xd8] sm:$0xff] %vm4144, %v3499
          %4799 = vst.msk [vmem:[#allocation3 + $0xe0] sm:$0xff] %vm4144, %v3500
          %4800 = vst.msk [vmem:[#allocation3 + $0xe8] sm:$0xff] %vm4144, %v3501
          %4801 = vst.msk [vmem:[#allocation3 + $0xf0] sm:$0xff] %vm4144, %v3502
          %4802 = vst.msk [vmem:[#allocation3 + $0xf8] sm:$0xff] %vm4144, %v3503
        $region52: #{attention_module_forward.3} parent=35 // pred_fallthru
          _
        %p4803 = scmp.eq.s32.totalorder %s28, 1
        // Predicated region
        $region53: #{attention_module_forward.3} parent=35 // pred_check
          %p4804 = pneg %p4803
        $region54: #{attention_module_forward.3} parent=35 // pred_check_branch
          %4806 = sbr.rel (%p4804) target = $region56
        $region55: #{attention_module_forward.3} parent=35 // pred_region
          %v4807 = vld [vmem:[#allocation4] sm:$0xff]
          %v4808 = vld [vmem:[#allocation4 + $0x8] sm:$0xff]
          %v4809 = vld [vmem:[#allocation4 + $0x10] sm:$0xff]
          %v4810 = vld [vmem:[#allocation4 + $0x18] sm:$0xff]
          %v4811 = vld [vmem:[#allocation4 + $0x20] sm:$0xff]
          %v4812 = vld [vmem:[#allocation4 + $0x28] sm:$0xff]
          %v4813 = vld [vmem:[#allocation4 + $0x30] sm:$0xff]
          %v4814 = vld [vmem:[#allocation4 + $0x38] sm:$0xff]
          %v4815 = vld [vmem:[#allocation4 + $0x40] sm:$0xff]
          %v4816 = vld [vmem:[#allocation4 + $0x48] sm:$0xff]
          %v4817 = vld [vmem:[#allocation4 + $0x50] sm:$0xff]
          %v4818 = vld [vmem:[#allocation4 + $0x58] sm:$0xff]
          %v4819 = vld [vmem:[#allocation4 + $0x60] sm:$0xff]
          %v4820 = vld [vmem:[#allocation4 + $0x68] sm:$0xff]
          %v4821 = vld [vmem:[#allocation4 + $0x70] sm:$0xff]
          %v4822 = vld [vmem:[#allocation4 + $0x78] sm:$0xff]
          %v4823 = vld [vmem:[#allocation4 + $0x80] sm:$0xff]
          %v4824 = vld [vmem:[#allocation4 + $0x88] sm:$0xff]
          %v4825 = vld [vmem:[#allocation4 + $0x90] sm:$0xff]
          %v4826 = vld [vmem:[#allocation4 + $0x98] sm:$0xff]
          %v4827 = vld [vmem:[#allocation4 + $0xa0] sm:$0xff]
          %v4828 = vld [vmem:[#allocation4 + $0xa8] sm:$0xff]
          %v4829 = vld [vmem:[#allocation4 + $0xb0] sm:$0xff]
          %v4830 = vld [vmem:[#allocation4 + $0xb8] sm:$0xff]
          %v4831 = vld [vmem:[#allocation4 + $0xc0] sm:$0xff]
          %v4832 = vld [vmem:[#allocation4 + $0xc8] sm:$0xff]
          %v4833 = vld [vmem:[#allocation4 + $0xd0] sm:$0xff]
          %v4834 = vld [vmem:[#allocation4 + $0xd8] sm:$0xff]
          %v4835 = vld [vmem:[#allocation4 + $0xe0] sm:$0xff]
          %v4836 = vld [vmem:[#allocation4 + $0xe8] sm:$0xff]
          %v4837 = vld [vmem:[#allocation4 + $0xf0] sm:$0xff]
          %v4838 = vld [vmem:[#allocation4 + $0xf8] sm:$0xff]
          %v4839 = vrcp.pop %v4807
          %v4840 = vrcp.pop %v4808
          %v4841 = vrcp.pop %v4809
          %v4842 = vrcp.pop %v4810
          %v4843 = vrcp.pop %v4811
          %v4844 = vrcp.pop %v4812
          %v4845 = vrcp.pop %v4813
          %v4846 = vrcp.pop %v4814
          %v4847 = vrcp.pop %v4815
          %v4848 = vrcp.pop %v4816
          %v4849 = vrcp.pop %v4817
          %v4850 = vrcp.pop %v4818
          %v4851 = vrcp.pop %v4819
          %v4852 = vrcp.pop %v4820
          %v4853 = vrcp.pop %v4821
          %v4854 = vrcp.pop %v4822
          %v4855 = vrcp.pop %v4823
          %v4856 = vrcp.pop %v4824
          %v4857 = vrcp.pop %v4825
          %v4858 = vrcp.pop %v4826
          %v4859 = vrcp.pop %v4827
          %v4860 = vrcp.pop %v4828
          %v4861 = vrcp.pop %v4829
          %v4862 = vrcp.pop %v4830
          %v4863 = vrcp.pop %v4831
          %v4864 = vrcp.pop %v4832
          %v4865 = vrcp.pop %v4833
          %v4866 = vrcp.pop %v4834
          %v4867 = vrcp.pop %v4835
          %v4868 = vrcp.pop %v4836
          %v4869 = vrcp.pop %v4837
          %v4870 = vrcp.pop %v4838
          %v4871 = vld [vmem:[#allocation5] sm:$0xff]
          %v4872 = vld [vmem:[#allocation5 + $0x8] sm:$0xff]
          %v4873 = vld [vmem:[#allocation5 + $0x10] sm:$0xff]
          %v4874 = vld [vmem:[#allocation5 + $0x18] sm:$0xff]
          %v4875 = vld [vmem:[#allocation5 + $0x20] sm:$0xff]
          %v4876 = vld [vmem:[#allocation5 + $0x28] sm:$0xff]
          %v4877 = vld [vmem:[#allocation5 + $0x30] sm:$0xff]
          %v4878 = vld [vmem:[#allocation5 + $0x38] sm:$0xff]
          %v4879 = vld [vmem:[#allocation5 + $0x40] sm:$0xff]
          %v4880 = vld [vmem:[#allocation5 + $0x48] sm:$0xff]
          %v4881 = vld [vmem:[#allocation5 + $0x50] sm:$0xff]
          %v4882 = vld [vmem:[#allocation5 + $0x58] sm:$0xff]
          %v4883 = vld [vmem:[#allocation5 + $0x60] sm:$0xff]
          %v4884 = vld [vmem:[#allocation5 + $0x68] sm:$0xff]
          %v4885 = vld [vmem:[#allocation5 + $0x70] sm:$0xff]
          %v4886 = vld [vmem:[#allocation5 + $0x78] sm:$0xff]
          %v4887 = vld [vmem:[#allocation5 + $0x80] sm:$0xff]
          %v4888 = vld [vmem:[#allocation5 + $0x88] sm:$0xff]
          %v4889 = vld [vmem:[#allocation5 + $0x90] sm:$0xff]
          %v4890 = vld [vmem:[#allocation5 + $0x98] sm:$0xff]
          %v4891 = vld [vmem:[#allocation5 + $0xa0] sm:$0xff]
          %v4892 = vld [vmem:[#allocation5 + $0xa8] sm:$0xff]
          %v4893 = vld [vmem:[#allocation5 + $0xb0] sm:$0xff]
          %v4894 = vld [vmem:[#allocation5 + $0xb8] sm:$0xff]
          %v4895 = vld [vmem:[#allocation5 + $0xc0] sm:$0xff]
          %v4896 = vld [vmem:[#allocation5 + $0xc8] sm:$0xff]
          %v4897 = vld [vmem:[#allocation5 + $0xd0] sm:$0xff]
          %v4898 = vld [vmem:[#allocation5 + $0xd8] sm:$0xff]
          %v4899 = vld [vmem:[#allocation5 + $0xe0] sm:$0xff]
          %v4900 = vld [vmem:[#allocation5 + $0xe8] sm:$0xff]
          %v4901 = vld [vmem:[#allocation5 + $0xf0] sm:$0xff]
          %v4902 = vld [vmem:[#allocation5 + $0xf8] sm:$0xff]
          %4904 = vset.pattern.permute.xlu0 0
          %4905 = vperm.xlu0 %4904, %v4839
          %v4906 = vpop.permute.xlu0 %4905
          %4909 = vset.pattern.permute.xlu0 0
          %4910 = vperm.xlu0 %4909, %v4840
          %v4911 = vpop.permute.xlu0 %4910
          %4914 = vset.pattern.permute.xlu0 0
          %4915 = vperm.xlu0 %4914, %v4841
          %v4916 = vpop.permute.xlu0 %4915
          %4919 = vset.pattern.permute.xlu0 0
          %4920 = vperm.xlu0 %4919, %v4842
          %v4921 = vpop.permute.xlu0 %4920
          %4924 = vset.pattern.permute.xlu0 0
          %4925 = vperm.xlu0 %4924, %v4843
          %v4926 = vpop.permute.xlu0 %4925
          %4929 = vset.pattern.permute.xlu0 0
          %4930 = vperm.xlu0 %4929, %v4844
          %v4931 = vpop.permute.xlu0 %4930
          %4934 = vset.pattern.permute.xlu0 0
          %4935 = vperm.xlu0 %4934, %v4845
          %v4936 = vpop.permute.xlu0 %4935
          %4939 = vset.pattern.permute.xlu0 0
          %4940 = vperm.xlu0 %4939, %v4846
          %v4941 = vpop.permute.xlu0 %4940
          %4944 = vset.pattern.permute.xlu0 0
          %4945 = vperm.xlu0 %4944, %v4847
          %v4946 = vpop.permute.xlu0 %4945
          %4949 = vset.pattern.permute.xlu0 0
          %4950 = vperm.xlu0 %4949, %v4848
          %v4951 = vpop.permute.xlu0 %4950
          %4954 = vset.pattern.permute.xlu0 0
          %4955 = vperm.xlu0 %4954, %v4849
          %v4956 = vpop.permute.xlu0 %4955
          %4959 = vset.pattern.permute.xlu0 0
          %4960 = vperm.xlu0 %4959, %v4850
          %v4961 = vpop.permute.xlu0 %4960
          %4964 = vset.pattern.permute.xlu0 0
          %4965 = vperm.xlu0 %4964, %v4851
          %v4966 = vpop.permute.xlu0 %4965
          %4969 = vset.pattern.permute.xlu0 0
          %4970 = vperm.xlu0 %4969, %v4852
          %v4971 = vpop.permute.xlu0 %4970
          %4974 = vset.pattern.permute.xlu0 0
          %4975 = vperm.xlu0 %4974, %v4853
          %v4976 = vpop.permute.xlu0 %4975
          %4979 = vset.pattern.permute.xlu0 0
          %4980 = vperm.xlu0 %4979, %v4854
          %v4981 = vpop.permute.xlu0 %4980
          %4984 = vset.pattern.permute.xlu0 0
          %4985 = vperm.xlu0 %4984, %v4855
          %v4986 = vpop.permute.xlu0 %4985
          %4989 = vset.pattern.permute.xlu0 0
          %4990 = vperm.xlu0 %4989, %v4856
          %v4991 = vpop.permute.xlu0 %4990
          %4994 = vset.pattern.permute.xlu0 0
          %4995 = vperm.xlu0 %4994, %v4857
          %v4996 = vpop.permute.xlu0 %4995
          %4999 = vset.pattern.permute.xlu0 0
          %5000 = vperm.xlu0 %4999, %v4858
          %v5001 = vpop.permute.xlu0 %5000
          %5004 = vset.pattern.permute.xlu0 0
          %5005 = vperm.xlu0 %5004, %v4859
          %v5006 = vpop.permute.xlu0 %5005
          %5009 = vset.pattern.permute.xlu0 0
          %5010 = vperm.xlu0 %5009, %v4860
          %v5011 = vpop.permute.xlu0 %5010
          %5014 = vset.pattern.permute.xlu0 0
          %5015 = vperm.xlu0 %5014, %v4861
          %v5016 = vpop.permute.xlu0 %5015
          %5019 = vset.pattern.permute.xlu0 0
          %5020 = vperm.xlu0 %5019, %v4862
          %v5021 = vpop.permute.xlu0 %5020
          %5024 = vset.pattern.permute.xlu0 0
          %5025 = vperm.xlu0 %5024, %v4863
          %v5026 = vpop.permute.xlu0 %5025
          %5029 = vset.pattern.permute.xlu0 0
          %5030 = vperm.xlu0 %5029, %v4864
          %v5031 = vpop.permute.xlu0 %5030
          %5034 = vset.pattern.permute.xlu0 0
          %5035 = vperm.xlu0 %5034, %v4865
          %v5036 = vpop.permute.xlu0 %5035
          %5039 = vset.pattern.permute.xlu0 0
          %5040 = vperm.xlu0 %5039, %v4866
          %v5041 = vpop.permute.xlu0 %5040
          %5044 = vset.pattern.permute.xlu0 0
          %5045 = vperm.xlu0 %5044, %v4867
          %v5046 = vpop.permute.xlu0 %5045
          %5049 = vset.pattern.permute.xlu0 0
          %5050 = vperm.xlu0 %5049, %v4868
          %v5051 = vpop.permute.xlu0 %5050
          %5054 = vset.pattern.permute.xlu0 0
          %5055 = vperm.xlu0 %5054, %v4869
          %v5056 = vpop.permute.xlu0 %5055
          %5059 = vset.pattern.permute.xlu0 0
          %5060 = vperm.xlu0 %5059, %v4870
          %v5061 = vpop.permute.xlu0 %5060
          %v5063 = vmul.f32 %v4871, %v4906
          %v5064 = vmul.f32 %v4872, %v4911
          %v5065 = vmul.f32 %v4873, %v4916
          %v5066 = vmul.f32 %v4874, %v4921
          %v5067 = vmul.f32 %v4875, %v4926
          %v5068 = vmul.f32 %v4876, %v4931
          %v5069 = vmul.f32 %v4877, %v4936
          %v5070 = vmul.f32 %v4878, %v4941
          %v5071 = vmul.f32 %v4879, %v4946
          %v5072 = vmul.f32 %v4880, %v4951
          %v5073 = vmul.f32 %v4881, %v4956
          %v5074 = vmul.f32 %v4882, %v4961
          %v5075 = vmul.f32 %v4883, %v4966
          %v5076 = vmul.f32 %v4884, %v4971
          %v5077 = vmul.f32 %v4885, %v4976
          %v5078 = vmul.f32 %v4886, %v4981
          %v5079 = vmul.f32 %v4887, %v4986
          %v5080 = vmul.f32 %v4888, %v4991
          %v5081 = vmul.f32 %v4889, %v4996
          %v5082 = vmul.f32 %v4890, %v5001
          %v5083 = vmul.f32 %v4891, %v5006
          %v5084 = vmul.f32 %v4892, %v5011
          %v5085 = vmul.f32 %v4893, %v5016
          %v5086 = vmul.f32 %v4894, %v5021
          %v5087 = vmul.f32 %v4895, %v5026
          %v5088 = vmul.f32 %v4896, %v5031
          %v5089 = vmul.f32 %v4897, %v5036
          %v5090 = vmul.f32 %v4898, %v5041
          %v5091 = vmul.f32 %v4899, %v5046
          %v5092 = vmul.f32 %v4900, %v5051
          %v5093 = vmul.f32 %v4901, %v5056
          %v5094 = vmul.f32 %v4902, %v5061
          %5095 = vst [vmem:[%s314] sm:$0xff] %v5063
          %5096 = vst [vmem:[%s314 + $0x8] sm:$0xff] %v5064
          %5097 = vst [vmem:[%s314 + $0x10] sm:$0xff] %v5065
          %5098 = vst [vmem:[%s314 + $0x18] sm:$0xff] %v5066
          %5099 = vst [vmem:[%s314 + $0x20] sm:$0xff] %v5067
          %5100 = vst [vmem:[%s314 + $0x28] sm:$0xff] %v5068
          %5101 = vst [vmem:[%s314 + $0x30] sm:$0xff] %v5069
          %5102 = vst [vmem:[%s314 + $0x38] sm:$0xff] %v5070
          %5103 = vst [vmem:[%s314 + $0x40] sm:$0xff] %v5071
          %5104 = vst [vmem:[%s314 + $0x48] sm:$0xff] %v5072
          %5105 = vst [vmem:[%s314 + $0x50] sm:$0xff] %v5073
          %5106 = vst [vmem:[%s314 + $0x58] sm:$0xff] %v5074
          %5107 = vst [vmem:[%s314 + $0x60] sm:$0xff] %v5075
          %5108 = vst [vmem:[%s314 + $0x68] sm:$0xff] %v5076
          %5109 = vst [vmem:[%s314 + $0x70] sm:$0xff] %v5077
          %5110 = vst [vmem:[%s314 + $0x78] sm:$0xff] %v5078
          %5111 = vst [vmem:[%s314 + $0x80] sm:$0xff] %v5079
          %5112 = vst [vmem:[%s314 + $0x88] sm:$0xff] %v5080
          %5113 = vst [vmem:[%s314 + $0x90] sm:$0xff] %v5081
          %5114 = vst [vmem:[%s314 + $0x98] sm:$0xff] %v5082
          %5115 = vst [vmem:[%s314 + $0xa0] sm:$0xff] %v5083
          %5116 = vst [vmem:[%s314 + $0xa8] sm:$0xff] %v5084
          %5117 = vst [vmem:[%s314 + $0xb0] sm:$0xff] %v5085
          %5118 = vst [vmem:[%s314 + $0xb8] sm:$0xff] %v5086
          %5119 = vst [vmem:[%s314 + $0xc0] sm:$0xff] %v5087
          %5120 = vst [vmem:[%s314 + $0xc8] sm:$0xff] %v5088
          %5121 = vst [vmem:[%s314 + $0xd0] sm:$0xff] %v5089
          %5122 = vst [vmem:[%s314 + $0xd8] sm:$0xff] %v5090
          %5123 = vst [vmem:[%s314 + $0xe0] sm:$0xff] %v5091
          %5124 = vst [vmem:[%s314 + $0xe8] sm:$0xff] %v5092
          %5125 = vst [vmem:[%s314 + $0xf0] sm:$0xff] %v5093
          %5126 = vst [vmem:[%s314 + $0xf8] sm:$0xff] %v5094
        $region56: #{attention_module_forward.3} parent=35 // pred_fallthru
          _
        %s5127 = sand.u32 %s163, 1
        %s5128 = scalar_lea.sflag [#allocation8], %s5127
        %s5129 = sand.u32 %s163, 1
        %s5130 = smul.addr %s5129, 256
        %s5131 = scalar_lea.vmem [#allocation9], %s5130
        // Predicated region
        $region57: #{attention_module_forward.3} parent=35 // pred_check
          %p5132 = pneg %p173
        $region58: #{attention_module_forward.3} parent=35 // pred_check_branch
          %5134 = sbr.rel (%p5132) target = $region60
        $region59: #{attention_module_forward.3} parent=35 // pred_region
          %s5135 = smul.u32 32, %s27
          %5137 = vsyncadd %s5128, 0
          %s5138 = smul.addr %s26, 64
          %s5139 = sadd.s32 %s5135, %s5138
          %s5140 = smul.addr %s5139, 8
          %s5141 = scalar_lea.hbm %s4, %s5140
          %s5142 = sshll.u32 %s5131, 4
          %s5143 = int_to_ptr.vmem [resolvable:$true] %s5142
          %s5144 = sshll.u32 %s5141, 4
          %s5145 = int_to_ptr.hbm [resolvable:$true] %s5144
          %5150 = dma.vmem_to_hbm [thread:$0]  %s5143, 4096, %s5145, %s5128, 128, 128, 8
        $region60: #{attention_module_forward.3} parent=35 // pred_fallthru
          _
      $region36: #{attention_module_forward.3} parent=5 // pred_fallthru
        _
      %p5151 = scmp.le.s32.totalorder 2, %s16
      // Predicated region
      $region61: #{attention_module_forward.3} parent=5 // pred_check
        %p5152 = pneg %p5151
      $region62: #{attention_module_forward.3} parent=5 // pred_check_branch
        %5154 = sbr.rel (%p5152) target = $region64
      $region63: #{attention_module_forward.3} parent=5 // pred_region
        %s5155 = ssub.s32 %s16, 2
        // Predicated region
        $region65: #{attention_module_forward.3} parent=63 // pred_check
          %p5156 = pneg %p179
        $region66: #{attention_module_forward.3} parent=63 // pred_check_branch
          %5158 = sbr.rel (%p5156) target = $region68
        $region67: #{attention_module_forward.3} parent=63 // pred_region
          %s5159 = sand.u32 %s164, 1
          %s5160 = scalar_lea.sflag [#allocation8], %s5159
          %s5161 = sand.u32 %s164, 1
          %s5162 = smul.addr %s5161, 256
          %s5163 = scalar_lea.vmem [#allocation9], %s5162
          %5165 = dma.done %s5160, 4096
        $region68: #{attention_module_forward.3} parent=63 // pred_fallthru
          _
      $region64: #{attention_module_forward.3} parent=5 // pred_fallthru
        _
    $region6: #{attention_module_forward.3} parent=1 // loop_footer
      %s20 = sadd.s32 1, %s16
    $region7: #{attention_module_forward.3} parent=1 // loop_footer_branch
      %15 = sbr.rel target = $region3
    $region8: #{attention_module_forward.3} parent=1 // loop_exit
      _
    %5166 = vsyncpa [#allocation7], 1
    %s5167 = scalar_lea.sflag [#allocation7], 1
    %5168 = vsyncpa %s5167, 1
    %5169 = vsyncpa [#allocation8], 1
    %s5170 = scalar_lea.sflag [#allocation8], 1
    %5171 = vsyncpa %s5170, 1

</llo_original>
